<compile_context>
chip_gen: v6e
topology: v6e:2x2x1
jax: 0.10.0
libtpu: 0.0.40
codegen_flags: <defaults>
</compile_context>

<pallas_src>
import functools

import jax
import jax.numpy as jnp
from jax.experimental import pallas as pl
from jax.experimental.pallas import tpu as pltpu

C_MID = 128   # left_conv1 / left_conv2 output channels
C_OUT = 256   # left_conv3 / right_conv output channels
EPS = 1e-5    # BatchNorm eps


def resblock_kernel(x_ref, w1c_ref, b1c_ref, w2c_ref, b2_ref, w3_ref, b3_ref,
                    o_ref, pad_ref, *, H, W):
    xm = x_ref[0]                                            # (H*W, Cin)

    # ---- fused left_conv1 + right_conv (1x1 convs, BN scale pre-folded) ----
    y = jnp.dot(xm, w1c_ref[...], preferred_element_type=jnp.float32)
    y = jnp.maximum(y + b1c_ref[...], 0.0)                   # (H*W, 384)
    o_ref[0] = y[:, C_MID:]                                  # right branch: store now
    l1 = y[:, :C_MID].reshape(H, W, C_MID)                   # (H, W, 128)

    # ---- build the 3 dx-shifted copies of l1, concatenated along channels --
    # plane 0: l1[y, x-1]   plane 1: l1[y, x]   plane 2: l1[y, x+1]
    wi = jax.lax.broadcasted_iota(jnp.int32, (H, W, C_MID), 1)
    left = jnp.where(wi == 0, 0.0, pltpu.roll(l1, 1, axis=1))
    right = jnp.where(wi == W - 1, 0.0, pltpu.roll(l1, W - 1, axis=1))

    # halo rows stay zero; re-zero each step (cheap, ~2x6 vregs) so this is
    # correct regardless of how the parallel grid is sharded across cores.
    pad_ref[0] = jnp.zeros((W, 3 * C_MID), jnp.float32)
    pad_ref[H + 1] = jnp.zeros((W, 3 * C_MID), jnp.float32)
    pad_ref[pl.ds(1, H), :, pl.ds(0, C_MID)] = left
    pad_ref[pl.ds(1, H), :, pl.ds(C_MID, C_MID)] = l1
    pad_ref[pl.ds(1, H), :, pl.ds(2 * C_MID, C_MID)] = right

    # ---- left_conv2: 3x3 conv as 3 contiguous K=384 matmuls over dy taps ---
    acc = jnp.zeros((H * W, C_MID), jnp.float32)
    for ky in range(3):
        tap = pad_ref[pl.ds(ky, H), :, :].reshape(H * W, 3 * C_MID)
        acc = acc + jnp.dot(tap, w2c_ref[ky],
                            preferred_element_type=jnp.float32)
    l2 = jnp.maximum(acc + b2_ref[...], 0.0)                 # (H*W, 128)

    # ---- left_conv3 (1x1) + residual add -----------------------------------
    l3 = jnp.dot(l2, w3_ref[...], preferred_element_type=jnp.float32)
    l3 = jnp.maximum(l3 + b3_ref[...], 0.0)                  # (H*W, 256)
    o_ref[0] = o_ref[0] + l3


def _prep_params(params):
    """Fold BN scales into conv weights; fuse conv1/right_conv; pack 3x3 taps."""
    (w1, s1, b1, w2, s2, b2, w3, s3, b3, wr, sr, br) = params
    w1c = jnp.concatenate([w1 * s1, wr * sr], axis=1)        # (Cin, 384)
    b1c = jnp.concatenate([b1, br], axis=1)                  # (1, 384)
    # HWIO (3,3,128,128) scaled on output channel, then (ky, kx*128+i, o).
    w2c = (w2 * s2).reshape(3, 3 * C_MID, C_MID)             # (3, 384, 128)
    w3s = w3 * s3                                            # (128, 256)
    return w1c, b1c, w2c, b2, w3s, b3


def resblock_forward(x_nchw, params):
    N, Cin, H, W = x_nchw.shape
    x = jnp.transpose(x_nchw, (0, 2, 3, 1)).reshape(N, H * W, Cin)
    w1c, b1c, w2c, b2, w3s, b3 = _prep_params(params)

    def full(shape):
        return pl.BlockSpec(shape, lambda n, _s=shape: (0,) * len(_s))

    kernel = functools.partial(resblock_kernel, H=H, W=W)
    out = pl.pallas_call(
        kernel,
        out_shape=jax.ShapeDtypeStruct((N, H * W, C_OUT), jnp.float32),
        grid=(N,),
        in_specs=[
            pl.BlockSpec((1, H * W, Cin), lambda n: (n, 0, 0)),
            full((Cin, C_MID + C_OUT)), full((1, C_MID + C_OUT)),
            full((3, 3 * C_MID, C_MID)), full((1, C_MID)),
            full((C_MID, C_OUT)), full((1, C_OUT)),
        ],
        out_specs=pl.BlockSpec((1, H * W, C_OUT), lambda n: (n, 0, 0)),
        scratch_shapes=[pltpu.VMEM((H + 2, W, 3 * C_MID), jnp.float32)],
        compiler_params=pltpu.CompilerParams(
            dimension_semantics=("parallel",)),
    )(x, w1c, b1c, w2c, b2, w3s, b3)
    return out.reshape(N, H, W, C_OUT).transpose(0, 3, 1, 2)  # back to NCHW


# ---------------- deterministic parameter init (BN folded) -----------------
def _fold_bn(key, c):
    kg, kb, km, kv = jax.random.split(key, 4)
    gamma = 1.0 + 0.1 * jax.random.normal(kg, (c,), jnp.float32)
    beta = 0.1 * jax.random.normal(kb, (c,), jnp.float32)
    mean = 0.1 * jax.random.normal(km, (c,), jnp.float32)
    var = jax.random.uniform(kv, (c,), jnp.float32, 0.5, 1.5)
    scale = gamma * jax.lax.rsqrt(var + EPS)
    bias = beta - mean * scale
    return scale.reshape(1, c), bias.reshape(1, c)


def init_params(key, cin):
    k = jax.random.split(key, 8)
    w1 = 0.1 * jax.random.normal(k[0], (cin, C_MID), jnp.float32)
    s1, b1 = _fold_bn(k[1], C_MID)
    w2 = 0.05 * jax.random.normal(k[2], (3, 3, C_MID, C_MID), jnp.float32)
    s2, b2 = _fold_bn(k[3], C_MID)
    w3 = 0.05 * jax.random.normal(k[4], (C_MID, C_OUT), jnp.float32)
    s3, b3 = _fold_bn(k[5], C_OUT)
    wr = 0.1 * jax.random.normal(k[6], (cin, C_OUT), jnp.float32)
    sr, br = _fold_bn(k[7], C_OUT)
    return (w1, s1, b1, w2, s2, b2, w3, s3, b3, wr, sr, br)


# ---------------- pure-JAX reference (for correctness check) ---------------
def _conv_bn_relu_ref(x, w_hwio, scale, bias, padding):
    y = jax.lax.conv_general_dilated(
        x, w_hwio, window_strides=(1, 1), padding=padding,
        dimension_numbers=("NCHW", "HWIO", "NCHW"))
    y = y * scale.reshape(1, -1, 1, 1) + bias.reshape(1, -1, 1, 1)
    return jnp.maximum(y, 0.0)


def resblock_ref(x_nchw, params):
    (w1, s1, b1, w2, s2, b2, w3, s3, b3, wr, sr, br) = params
    cin = x_nchw.shape[1]
    left = _conv_bn_relu_ref(x_nchw, w1.reshape(1, 1, cin, C_MID), s1, b1, "VALID")
    left = _conv_bn_relu_ref(left, w2, s2, b2, "SAME")
    left = _conv_bn_relu_ref(left, w3.reshape(1, 1, C_MID, C_OUT), s3, b3, "VALID")
    right = _conv_bn_relu_ref(x_nchw, wr.reshape(1, 1, cin, C_OUT), sr, br, "VALID")
    return left + right


if __name__ == "__main__":
    key = jax.random.PRNGKey(0)
    kx, kp = jax.random.split(key)
    N, Cin, H, W = 2, 4, 16, 16
    x = jax.random.normal(kx, (N, Cin, H, W), jnp.float32)
    params = init_params(kp, Cin)

    out = jax.jit(resblock_forward)(x, params)
    out = jax.block_until_ready(out)

    ref = resblock_ref(x, params)
    err = float(jnp.max(jnp.abs(out - ref)))
    assert out.shape == (N, C_OUT, H, W), out.shape
    assert err < 1e-1, f"max abs err {err}"
    print("KERNEL_OK")
</pallas_src>

<mosaic_0001>
module attributes {stable_mosaic.version = 11 : i64} {
  func.func @resblock_kernel(%arg0: i32, %arg1: memref<1x256x4xf32, #tpu.memory_space<vmem>>, %arg2: memref<4x384xf32, #tpu.memory_space<vmem>>, %arg3: memref<1x384xf32, #tpu.memory_space<vmem>>, %arg4: memref<3x384x128xf32, #tpu.memory_space<vmem>>, %arg5: memref<1x128xf32, #tpu.memory_space<vmem>>, %arg6: memref<128x256xf32, #tpu.memory_space<vmem>>, %arg7: memref<1x256xf32, #tpu.memory_space<vmem>>, %arg8: memref<1x256x256xf32, #tpu.memory_space<vmem>>, %arg9: memref<18x16x384xf32, #tpu.memory_space<vmem>>) attributes {dimension_semantics = [#tpu.dimension_semantics<parallel>], iteration_bounds = array<i64: 2>, scalar_prefetch = 0 : i64, scratch_operands = 1 : i64, tpu.core_type = #tpu.core_type<tc>, window_params = [{transform_indices = @transform_0, window_bounds = array<i64: 1, 256, 4>}, {pipeline_mode = #tpu.pipeline_mode<synchronous>, transform_indices = @transform_1, window_bounds = array<i64: 4, 384>}, {pipeline_mode = #tpu.pipeline_mode<synchronous>, transform_indices = @transform_2, window_bounds = array<i64: 1, 384>}, {pipeline_mode = #tpu.pipeline_mode<synchronous>, transform_indices = @transform_3, window_bounds = array<i64: 3, 384, 128>}, {pipeline_mode = #tpu.pipeline_mode<synchronous>, transform_indices = @transform_4, window_bounds = array<i64: 1, 128>}, {pipeline_mode = #tpu.pipeline_mode<synchronous>, transform_indices = @transform_5, window_bounds = array<i64: 128, 256>}, {pipeline_mode = #tpu.pipeline_mode<synchronous>, transform_indices = @transform_6, window_bounds = array<i64: 1, 256>}, {transform_indices = @transform_7, window_bounds = array<i64: 1, 256, 256>}]} {
    %c0 = arith.constant 0 : index
    %c0_0 = arith.constant 0 : index
    %c0_1 = arith.constant 0 : index
    %0 = vector.load %arg1[%c0, %c0_0, %c0_1] : memref<1x256x4xf32, #tpu.memory_space<vmem>>, vector<1x256x4xf32>
    %1 = vector.shape_cast %0 : vector<1x256x4xf32> to vector<256x4xf32>
    %c0_2 = arith.constant 0 : index
    %c0_3 = arith.constant 0 : index
    %2 = vector.load %arg2[%c0_2, %c0_3] : memref<4x384xf32, #tpu.memory_space<vmem>>, vector<4x384xf32>
    %cst = arith.constant dense<0.000000e+00> : vector<256x384xf32>
    %3 = tpu.matmul %1, %2, %cst {dimension_numbers = #tpu.dot_dimension_numbers<[1], [0], [0], [1], [0, 0, 1, 1], [], []>} : vector<256x4xf32>, vector<4x384xf32>, vector<256x384xf32> -> vector<256x384xf32>
    %c0_4 = arith.constant 0 : index
    %c0_5 = arith.constant 0 : index
    %4 = vector.load %arg3[%c0_4, %c0_5] : memref<1x384xf32, #tpu.memory_space<vmem>>, vector<1x384xf32>
    %5 = vector.broadcast %4 : vector<1x384xf32> to vector<256x384xf32>
    %6 = arith.addf %3, %5 : vector<256x384xf32>
    %cst_6 = arith.constant 0.000000e+00 : f32
    %7 = vector.broadcast %cst_6 : f32 to vector<256x384xf32>
    %8 = arith.maximumf %6, %7 : vector<256x384xf32>
    %9 = vector.extract_strided_slice %8 {offsets = [0, 128], sizes = [256, 256], strides = [1, 1]} : vector<256x384xf32> to vector<256x256xf32>
    %c0_7 = arith.constant 0 : index
    %c0_8 = arith.constant 0 : index
    %c0_9 = arith.constant 0 : index
    %10 = vector.load %arg8[%c0_7, %c0_8, %c0_9] : memref<1x256x256xf32, #tpu.memory_space<vmem>>, vector<1x256x256xf32>
    %11 = vector.shape_cast %10 : vector<1x256x256xf32> to vector<256x256xf32>
    %12 = vector.shape_cast %9 : vector<256x256xf32> to vector<1x256x256xf32>
    tpu.vector_store %arg8[%c0_7, %c0_8, %c0_9], %12 {strides = array<i32>} : memref<1x256x256xf32, #tpu.memory_space<vmem>>, vector<1x256x256xf32>,
    %13 = vector.extract_strided_slice %8 {offsets = [0, 0], sizes = [256, 128], strides = [1, 1]} : vector<256x384xf32> to vector<256x128xf32>
    %14 = vector.shape_cast %13 : vector<256x128xf32> to vector<16x16x128xf32>
    %15 = tpu.iota {dimensions = array<i32: 1>} : vector<16x16x128xi32>
    %c0_i32 = arith.constant 0 : i32
    %16 = vector.broadcast %c0_i32 : i32 to vector<16x16x128xi32>
    %17 = arith.cmpi eq, %15, %16 : vector<16x16x128xi32>
    %c1_i32 = arith.constant 1 : i32
    %18 = tpu.dynamic_rotate %14 by %c1_i32 dim 1 : vector<16x16x128xf32>, i32 -> vector<16x16x128xf32>
    %cst_10 = arith.constant 0.000000e+00 : f32
    %19 = vector.broadcast %cst_10 : f32 to vector<16x16x128xf32>
    %20 = arith.select %17, %19, %18 : vector<16x16x128xi1>, vector<16x16x128xf32>
    %c15_i32 = arith.constant 15 : i32
    %21 = vector.broadcast %c15_i32 : i32 to vector<16x16x128xi32>
    %22 = arith.cmpi eq, %15, %21 : vector<16x16x128xi32>
    %c15_i32_11 = arith.constant 15 : i32
    %23 = tpu.dynamic_rotate %14 by %c15_i32_11 dim 1 : vector<16x16x128xf32>, i32 -> vector<16x16x128xf32>
    %cst_12 = arith.constant 0.000000e+00 : f32
    %24 = vector.broadcast %cst_12 : f32 to vector<16x16x128xf32>
    %25 = arith.select %22, %24, %23 : vector<16x16x128xi1>, vector<16x16x128xf32>
    %cst_13 = arith.constant 0.000000e+00 : f32
    %26 = vector.broadcast %cst_13 : f32 to vector<16x384xf32>
    %c0_14 = arith.constant 0 : index
    %c0_15 = arith.constant 0 : index
    %c0_16 = arith.constant 0 : index
    %27 = vector.load %arg9[%c0_14, %c0_15, %c0_16] : memref<18x16x384xf32, #tpu.memory_space<vmem>>, vector<1x16x384xf32>
    %28 = vector.shape_cast %27 : vector<1x16x384xf32> to vector<16x384xf32>
    %29 = vector.shape_cast %26 : vector<16x384xf32> to vector<1x16x384xf32>
    tpu.vector_store %arg9[%c0_14, %c0_15, %c0_16], %29 {strides = array<i32>} : memref<18x16x384xf32, #tpu.memory_space<vmem>>, vector<1x16x384xf32>,
    %cst_17 = arith.constant 0.000000e+00 : f32
    %30 = vector.broadcast %cst_17 : f32 to vector<16x384xf32>
    %c17 = arith.constant 17 : index
    %c0_18 = arith.constant 0 : index
    %c0_19 = arith.constant 0 : index
    %31 = vector.load %arg9[%c17, %c0_18, %c0_19] : memref<18x16x384xf32, #tpu.memory_space<vmem>>, vector<1x16x384xf32>
    %32 = vector.shape_cast %31 : vector<1x16x384xf32> to vector<16x384xf32>
    %33 = vector.shape_cast %30 : vector<16x384xf32> to vector<1x16x384xf32>
    tpu.vector_store %arg9[%c17, %c0_18, %c0_19], %33 {strides = array<i32>} : memref<18x16x384xf32, #tpu.memory_space<vmem>>, vector<1x16x384xf32>,
    %c1 = arith.constant 1 : index
    %c0_20 = arith.constant 0 : index
    %c0_21 = arith.constant 0 : index
    %34 = vector.load %arg9[%c1, %c0_20, %c0_21] : memref<18x16x384xf32, #tpu.memory_space<vmem>>, vector<16x16x128xf32>
    tpu.vector_store %arg9[%c1, %c0_20, %c0_21], %20 {strides = array<i32>} : memref<18x16x384xf32, #tpu.memory_space<vmem>>, vector<16x16x128xf32>,
    %c1_22 = arith.constant 1 : index
    %c0_23 = arith.constant 0 : index
    %c128 = arith.constant 128 : index
    %35 = vector.load %arg9[%c1_22, %c0_23, %c128] : memref<18x16x384xf32, #tpu.memory_space<vmem>>, vector<16x16x128xf32>
    tpu.vector_store %arg9[%c1_22, %c0_23, %c128], %14 {strides = array<i32>} : memref<18x16x384xf32, #tpu.memory_space<vmem>>, vector<16x16x128xf32>,
    %c1_24 = arith.constant 1 : index
    %c0_25 = arith.constant 0 : index
    %c256 = arith.constant 256 : index
    %36 = vector.load %arg9[%c1_24, %c0_25, %c256] : memref<18x16x384xf32, #tpu.memory_space<vmem>>, vector<16x16x128xf32>
    tpu.vector_store %arg9[%c1_24, %c0_25, %c256], %25 {strides = array<i32>} : memref<18x16x384xf32, #tpu.memory_space<vmem>>, vector<16x16x128xf32>,
    %cst_26 = arith.constant 0.000000e+00 : f32
    %37 = vector.broadcast %cst_26 : f32 to vector<256x128xf32>
    %c0_27 = arith.constant 0 : index
    %c0_28 = arith.constant 0 : index
    %c0_29 = arith.constant 0 : index
    %38 = vector.load %arg9[%c0_27, %c0_28, %c0_29] : memref<18x16x384xf32, #tpu.memory_space<vmem>>, vector<16x16x384xf32>
    %39 = vector.shape_cast %38 : vector<16x16x384xf32> to vector<256x384xf32>
    %c0_30 = arith.constant 0 : index
    %c0_31 = arith.constant 0 : index
    %c0_32 = arith.constant 0 : index
    %40 = vector.load %arg4[%c0_30, %c0_31, %c0_32] : memref<3x384x128xf32, #tpu.memory_space<vmem>>, vector<1x384x128xf32>
    %41 = vector.shape_cast %40 : vector<1x384x128xf32> to vector<384x128xf32>
    %cst_33 = arith.constant dense<0.000000e+00> : vector<256x128xf32>
    %42 = tpu.matmul %39, %41, %cst_33 {dimension_numbers = #tpu.dot_dimension_numbers<[1], [0], [0], [1], [0, 0, 1, 1], [], []>} : vector<256x384xf32>, vector<384x128xf32>, vector<256x128xf32> -> vector<256x128xf32>
    %43 = arith.addf %37, %42 : vector<256x128xf32>
    %c1_34 = arith.constant 1 : index
    %c0_35 = arith.constant 0 : index
    %c0_36 = arith.constant 0 : index
    %44 = vector.load %arg9[%c1_34, %c0_35, %c0_36] : memref<18x16x384xf32, #tpu.memory_space<vmem>>, vector<16x16x384xf32>
    %45 = vector.shape_cast %44 : vector<16x16x384xf32> to vector<256x384xf32>
    %c1_37 = arith.constant 1 : index
    %c0_38 = arith.constant 0 : index
    %c0_39 = arith.constant 0 : index
    %46 = vector.load %arg4[%c1_37, %c0_38, %c0_39] : memref<3x384x128xf32, #tpu.memory_space<vmem>>, vector<1x384x128xf32>
    %47 = vector.shape_cast %46 : vector<1x384x128xf32> to vector<384x128xf32>
    %cst_40 = arith.constant dense<0.000000e+00> : vector<256x128xf32>
    %48 = tpu.matmul %45, %47, %cst_40 {dimension_numbers = #tpu.dot_dimension_numbers<[1], [0], [0], [1], [0, 0, 1, 1], [], []>} : vector<256x384xf32>, vector<384x128xf32>, vector<256x128xf32> -> vector<256x128xf32>
    %49 = arith.addf %43, %48 : vector<256x128xf32>
    %c2 = arith.constant 2 : index
    %c0_41 = arith.constant 0 : index
    %c0_42 = arith.constant 0 : index
    %50 = vector.load %arg9[%c2, %c0_41, %c0_42] : memref<18x16x384xf32, #tpu.memory_space<vmem>>, vector<16x16x384xf32>
    %51 = vector.shape_cast %50 : vector<16x16x384xf32> to vector<256x384xf32>
    %c2_43 = arith.constant 2 : index
    %c0_44 = arith.constant 0 : index
    %c0_45 = arith.constant 0 : index
    %52 = vector.load %arg4[%c2_43, %c0_44, %c0_45] : memref<3x384x128xf32, #tpu.memory_space<vmem>>, vector<1x384x128xf32>
    %53 = vector.shape_cast %52 : vector<1x384x128xf32> to vector<384x128xf32>
    %cst_46 = arith.constant dense<0.000000e+00> : vector<256x128xf32>
    %54 = tpu.matmul %51, %53, %cst_46 {dimension_numbers = #tpu.dot_dimension_numbers<[1], [0], [0], [1], [0, 0, 1, 1], [], []>} : vector<256x384xf32>, vector<384x128xf32>, vector<256x128xf32> -> vector<256x128xf32>
    %55 = arith.addf %49, %54 : vector<256x128xf32>
    %c0_47 = arith.constant 0 : index
    %c0_48 = arith.constant 0 : index
    %56 = vector.load %arg5[%c0_47, %c0_48] : memref<1x128xf32, #tpu.memory_space<vmem>>, vector<1x128xf32>
    %57 = vector.broadcast %56 : vector<1x128xf32> to vector<256x128xf32>
    %58 = arith.addf %55, %57 : vector<256x128xf32>
    %cst_49 = arith.constant 0.000000e+00 : f32
    %59 = vector.broadcast %cst_49 : f32 to vector<256x128xf32>
    %60 = arith.maximumf %58, %59 : vector<256x128xf32>
    %c0_50 = arith.constant 0 : index
    %c0_51 = arith.constant 0 : index
    %61 = vector.load %arg6[%c0_50, %c0_51] : memref<128x256xf32, #tpu.memory_space<vmem>>, vector<128x256xf32>
    %cst_52 = arith.constant dense<0.000000e+00> : vector<256x256xf32>
    %62 = tpu.matmul %60, %61, %cst_52 {dimension_numbers = #tpu.dot_dimension_numbers<[1], [0], [0], [1], [0, 0, 1, 1], [], []>} : vector<256x128xf32>, vector<128x256xf32>, vector<256x256xf32> -> vector<256x256xf32>
    %c0_53 = arith.constant 0 : index
    %c0_54 = arith.constant 0 : index
    %63 = vector.load %arg7[%c0_53, %c0_54] : memref<1x256xf32, #tpu.memory_space<vmem>>, vector<1x256xf32>
    %64 = vector.broadcast %63 : vector<1x256xf32> to vector<256x256xf32>
    %65 = arith.addf %62, %64 : vector<256x256xf32>
    %cst_55 = arith.constant 0.000000e+00 : f32
    %66 = vector.broadcast %cst_55 : f32 to vector<256x256xf32>
    %67 = arith.maximumf %65, %66 : vector<256x256xf32>
    %c0_56 = arith.constant 0 : index
    %c0_57 = arith.constant 0 : index
    %c0_58 = arith.constant 0 : index
    %68 = vector.load %arg8[%c0_56, %c0_57, %c0_58] : memref<1x256x256xf32, #tpu.memory_space<vmem>>, vector<1x256x256xf32>
    %69 = vector.shape_cast %68 : vector<1x256x256xf32> to vector<256x256xf32>
    %70 = arith.addf %69, %67 : vector<256x256xf32>
    %c0_59 = arith.constant 0 : index
    %c0_60 = arith.constant 0 : index
    %c0_61 = arith.constant 0 : index
    %71 = vector.load %arg8[%c0_59, %c0_60, %c0_61] : memref<1x256x256xf32, #tpu.memory_space<vmem>>, vector<1x256x256xf32>
    %72 = vector.shape_cast %71 : vector<1x256x256xf32> to vector<256x256xf32>
    %73 = vector.shape_cast %70 : vector<256x256xf32> to vector<1x256x256xf32>
    tpu.vector_store %arg8[%c0_59, %c0_60, %c0_61], %73 {strides = array<i32>} : memref<1x256x256xf32, #tpu.memory_space<vmem>>, vector<1x256x256xf32>,
    return
  }
  func.func @transform_0(%arg0: i32) -> (i32, i32, i32) {
    %c0_i32 = arith.constant 0 : i32
    %c0_i32_0 = arith.constant 0 : i32
    %c0_i32_1 = arith.constant 0 : i32
    return %arg0, %c0_i32, %c0_i32_0 : i32, i32, i32
  }
  func.func @transform_1(%arg0: i32) -> (i32, i32) {
    %c0_i32 = arith.constant 0 : i32
    %c0_i32_0 = arith.constant 0 : i32
    %c0_i32_1 = arith.constant 0 : i32
    return %c0_i32, %c0_i32_0 : i32, i32
  }
  func.func @transform_2(%arg0: i32) -> (i32, i32) {
    %c0_i32 = arith.constant 0 : i32
    %c0_i32_0 = arith.constant 0 : i32
    %c0_i32_1 = arith.constant 0 : i32
    return %c0_i32, %c0_i32_0 : i32, i32
  }
  func.func @transform_3(%arg0: i32) -> (i32, i32, i32) {
    %c0_i32 = arith.constant 0 : i32
    %c0_i32_0 = arith.constant 0 : i32
    %c0_i32_1 = arith.constant 0 : i32
    %c0_i32_2 = arith.constant 0 : i32
    return %c0_i32, %c0_i32_0, %c0_i32_1 : i32, i32, i32
  }
  func.func @transform_4(%arg0: i32) -> (i32, i32) {
    %c0_i32 = arith.constant 0 : i32
    %c0_i32_0 = arith.constant 0 : i32
    %c0_i32_1 = arith.constant 0 : i32
    return %c0_i32, %c0_i32_0 : i32, i32
  }
  func.func @transform_5(%arg0: i32) -> (i32, i32) {
    %c0_i32 = arith.constant 0 : i32
    %c0_i32_0 = arith.constant 0 : i32
    %c0_i32_1 = arith.constant 0 : i32
    return %c0_i32, %c0_i32_0 : i32, i32
  }
  func.func @transform_6(%arg0: i32) -> (i32, i32) {
    %c0_i32 = arith.constant 0 : i32
    %c0_i32_0 = arith.constant 0 : i32
    %c0_i32_1 = arith.constant 0 : i32
    return %c0_i32, %c0_i32_0 : i32, i32
  }
  func.func @transform_7(%arg0: i32) -> (i32, i32, i32) {
    %c0_i32 = arith.constant 0 : i32
    %c0_i32_0 = arith.constant 0 : i32
    %c0_i32_1 = arith.constant 0 : i32
    return %arg0, %c0_i32, %c0_i32_0 : i32, i32, i32
  }
}

</mosaic_0001>

<llo_original>
// kernel: resblock_forward.1
$region0: #{resblock_forward.1}
  #allocation0 [shape = 'u32[]', space=smem, size = 0x4, offset = 0x4, fixed_abs, tag = 'smem constant byte address 0x4 - core index']
  #allocation1 [shape = 'u32[144,128]{1,0:T(1,128)}', space=vmem, size = 0x12000, scoped, tag = 'internal scratch']
  #allocation2 [shape = 'f32[18,16,384]{2,1,0:T(8,128)}', space=vmem, size = 0x6c000, scoped, tag = 'scratch operand']
  %s0 = inlined_call_operand.vmem [shape: f32[2,256,4], index: 0, kind: input, shape index: {}]
  %s1 = inlined_call_operand.vmem [shape: f32[4,384], index: 1, kind: input, shape index: {}]
  %s2 = inlined_call_operand.vmem [shape: f32[1,384], index: 2, kind: input, shape index: {}]
  %s3 = inlined_call_operand.vmem [shape: f32[3,384,128], index: 3, kind: input, shape index: {}]
  %s4 = inlined_call_operand.vmem [shape: f32[1,128], index: 4, kind: input, shape index: {}]
  %s5 = inlined_call_operand.vmem [shape: f32[128,256], index: 5, kind: input, shape index: {}]
  %s6 = inlined_call_operand.vmem [shape: f32[1,256], index: 6, kind: input, shape index: {}]
  %s7 = inlined_call_operand.hbm [shape: f32[2,256,256], index: 7, kind: output, shape index: {}]
  %s8 = sld [smem:[#allocation0]]
  $region61: #{resblock_forward.1} parent=0
    _
  %s10 = ssub.s32 1, %s8
  %s11 = scalar_select 0, %s10, %s8
  $region1: #{resblock_forward.1} parent=0
    #allocation3 [shape = 'u8[524288]{0}', space=vmem, size = 0x80000, scoped, tag = 'output window, operand 0']
    #allocation4 [shape = 's32[2]{0}', space=sflag, size = 0x8, scoped, tag = 'scoped memory for resblock_forward.1']
    %12 = vsyncpa [#allocation4], 0
    %s13 = scalar_lea.sflag [#allocation4], 1
    %14 = vsyncpa %s13, 0
    loop: start=0, step=1, limit=4
    $region2: #{resblock_forward.1} parent=1 // loop_pre_header
      _
    $region3: #{resblock_forward.1} parent=1 // loop_header
      %s16 = sphi 0, %s20
      %p17 = scmp.ge.s32.totalorder %s16, 4
      %s26 = sphi 0, %s28
      %s29 = sphi 0, %s26
      %s30 = sphi 0, %s29
      %s46 = sphi 0, %s30
      %s50 = sphi 0, %s50
      %s52 = sphi 0, %s50
      %s53 = sphi 0, %s52
      %s67 = sphi 0, %s53
      %s71 = sphi 0, %s71
      %s73 = sphi 0, %s71
      %s74 = sphi 0, %s73
      %s88 = sphi 0, %s74
      %s92 = sphi 0, %s92
      %s94 = sphi 0, %s92
      %s95 = sphi 0, %s94
      %s109 = sphi 0, %s95
      %s113 = sphi 0, %s113
      %s115 = sphi 0, %s113
      %s116 = sphi 0, %s115
      %s130 = sphi 0, %s116
      %s134 = sphi 0, %s134
      %s136 = sphi 0, %s134
      %s137 = sphi 0, %s136
      %s151 = sphi 0, %s137
      %s155 = sphi 0, %s155
      %s157 = sphi 0, %s155
      %s158 = sphi 0, %s157
      %s172 = sphi 0, %s158
      %s178 = sphi 0, %s180
      %s181 = sphi 0, %s178
      %s182 = sphi 0, %s181
      %s198 = sphi 0, %s182
    $region4: #{resblock_forward.1} parent=1 // loop_header_branch
      %19 = sbr.rel (%p17) target = $region8
    $region5: #{resblock_forward.1} parent=1 // loop_body
      %s21 = ssub.s32 %s16, 1
      %s22 = ssub.s32 %s16, 2
      %s23 = sadd.s32 %s16, 1
      %s24 = ssub.s32 %s16, %s23
      %p25 = scmp.eq.s32.totalorder %s24, 0
      %s27 = sadd.s32 %s26, 1
      %s28 = scalar_select %p25, %s26, %s27
      %p31 = pneg %p25
      %p32 = scmp.eq.s32.totalorder %s16, 1
      %p33 = por %p31, %p32
      %p34 = scmp.ne.s32.totalorder %s26, %s29
      %p35 = scmp.eq.s32.totalorder %s16, 0
      %p36 = por %p34, %p35
      %p37 = scmp.ne.s32.totalorder %s26, %s29
      %p38 = scmp.eq.s32.totalorder %s21, 1
      %p39 = por %p37, %p38
      %p40 = scmp.ne.s32.totalorder %s29, %s30
      %p41 = scmp.eq.s32.totalorder %s21, 0
      %p42 = por %p40, %p41
      %p43 = scmp.ne.s32.totalorder %s29, %s30
      %p44 = scmp.eq.s32.totalorder %s22, 1
      %p45 = por %p43, %p44
      %p47 = scmp.ne.s32.totalorder %s30, %s46
      %p48 = scmp.eq.s32.totalorder %s22, 0
      %p49 = por %p47, %p48
      %s51 = sadd.s32 %s50, 1
      %p54 = scmp.eq.s32.totalorder %s16, 1
      %p55 = scmp.ne.s32.totalorder %s50, %s52
      %p56 = scmp.eq.s32.totalorder %s16, 0
      %p57 = por %p55, %p56
      %p58 = scmp.ne.s32.totalorder %s50, %s52
      %p59 = scmp.eq.s32.totalorder %s21, 1
      %p60 = por %p58, %p59
      %p61 = scmp.ne.s32.totalorder %s52, %s53
      %p62 = scmp.eq.s32.totalorder %s21, 0
      %p63 = por %p61, %p62
      %p64 = scmp.ne.s32.totalorder %s52, %s53
      %p65 = scmp.eq.s32.totalorder %s22, 1
      %p66 = por %p64, %p65
      %p68 = scmp.ne.s32.totalorder %s53, %s67
      %p69 = scmp.eq.s32.totalorder %s22, 0
      %p70 = por %p68, %p69
      %s72 = sadd.s32 %s71, 1
      %p75 = scmp.eq.s32.totalorder %s16, 1
      %p76 = scmp.ne.s32.totalorder %s71, %s73
      %p77 = scmp.eq.s32.totalorder %s16, 0
      %p78 = por %p76, %p77
      %p79 = scmp.ne.s32.totalorder %s71, %s73
      %p80 = scmp.eq.s32.totalorder %s21, 1
      %p81 = por %p79, %p80
      %p82 = scmp.ne.s32.totalorder %s73, %s74
      %p83 = scmp.eq.s32.totalorder %s21, 0
      %p84 = por %p82, %p83
      %p85 = scmp.ne.s32.totalorder %s73, %s74
      %p86 = scmp.eq.s32.totalorder %s22, 1
      %p87 = por %p85, %p86
      %p89 = scmp.ne.s32.totalorder %s74, %s88
      %p90 = scmp.eq.s32.totalorder %s22, 0
      %p91 = por %p89, %p90
      %s93 = sadd.s32 %s92, 1
      %p96 = scmp.eq.s32.totalorder %s16, 1
      %p97 = scmp.ne.s32.totalorder %s92, %s94
      %p98 = scmp.eq.s32.totalorder %s16, 0
      %p99 = por %p97, %p98
      %p100 = scmp.ne.s32.totalorder %s92, %s94
      %p101 = scmp.eq.s32.totalorder %s21, 1
      %p102 = por %p100, %p101
      %p103 = scmp.ne.s32.totalorder %s94, %s95
      %p104 = scmp.eq.s32.totalorder %s21, 0
      %p105 = por %p103, %p104
      %p106 = scmp.ne.s32.totalorder %s94, %s95
      %p107 = scmp.eq.s32.totalorder %s22, 1
      %p108 = por %p106, %p107
      %p110 = scmp.ne.s32.totalorder %s95, %s109
      %p111 = scmp.eq.s32.totalorder %s22, 0
      %p112 = por %p110, %p111
      %s114 = sadd.s32 %s113, 1
      %p117 = scmp.eq.s32.totalorder %s16, 1
      %p118 = scmp.ne.s32.totalorder %s113, %s115
      %p119 = scmp.eq.s32.totalorder %s16, 0
      %p120 = por %p118, %p119
      %p121 = scmp.ne.s32.totalorder %s113, %s115
      %p122 = scmp.eq.s32.totalorder %s21, 1
      %p123 = por %p121, %p122
      %p124 = scmp.ne.s32.totalorder %s115, %s116
      %p125 = scmp.eq.s32.totalorder %s21, 0
      %p126 = por %p124, %p125
      %p127 = scmp.ne.s32.totalorder %s115, %s116
      %p128 = scmp.eq.s32.totalorder %s22, 1
      %p129 = por %p127, %p128
      %p131 = scmp.ne.s32.totalorder %s116, %s130
      %p132 = scmp.eq.s32.totalorder %s22, 0
      %p133 = por %p131, %p132
      %s135 = sadd.s32 %s134, 1
      %p138 = scmp.eq.s32.totalorder %s16, 1
      %p139 = scmp.ne.s32.totalorder %s134, %s136
      %p140 = scmp.eq.s32.totalorder %s16, 0
      %p141 = por %p139, %p140
      %p142 = scmp.ne.s32.totalorder %s134, %s136
      %p143 = scmp.eq.s32.totalorder %s21, 1
      %p144 = por %p142, %p143
      %p145 = scmp.ne.s32.totalorder %s136, %s137
      %p146 = scmp.eq.s32.totalorder %s21, 0
      %p147 = por %p145, %p146
      %p148 = scmp.ne.s32.totalorder %s136, %s137
      %p149 = scmp.eq.s32.totalorder %s22, 1
      %p150 = por %p148, %p149
      %p152 = scmp.ne.s32.totalorder %s137, %s151
      %p153 = scmp.eq.s32.totalorder %s22, 0
      %p154 = por %p152, %p153
      %s156 = sadd.s32 %s155, 1
      %p159 = scmp.eq.s32.totalorder %s16, 1
      %p160 = scmp.ne.s32.totalorder %s155, %s157
      %p161 = scmp.eq.s32.totalorder %s16, 0
      %p162 = por %p160, %p161
      %p163 = scmp.ne.s32.totalorder %s155, %s157
      %p164 = scmp.eq.s32.totalorder %s21, 1
      %p165 = por %p163, %p164
      %p166 = scmp.ne.s32.totalorder %s157, %s158
      %p167 = scmp.eq.s32.totalorder %s21, 0
      %p168 = por %p166, %p167
      %p169 = scmp.ne.s32.totalorder %s157, %s158
      %p170 = scmp.eq.s32.totalorder %s22, 1
      %p171 = por %p169, %p170
      %p173 = scmp.ne.s32.totalorder %s158, %s172
      %p174 = scmp.eq.s32.totalorder %s22, 0
      %p175 = por %p173, %p174
      %s176 = ssub.s32 %s16, %s23
      %p177 = scmp.eq.s32.totalorder %s176, 0
      %s179 = sadd.s32 %s178, 1
      %s180 = scalar_select %p177, %s178, %s179
      %p183 = pneg %p177
      %p184 = scmp.eq.s32.totalorder %s16, 1
      %p185 = por %p183, %p184
      %p186 = scmp.ne.s32.totalorder %s178, %s181
      %p187 = scmp.eq.s32.totalorder %s16, 0
      %p188 = por %p186, %p187
      %p189 = scmp.ne.s32.totalorder %s178, %s181
      %p190 = scmp.eq.s32.totalorder %s21, 1
      %p191 = por %p189, %p190
      %p192 = scmp.ne.s32.totalorder %s181, %s182
      %p193 = scmp.eq.s32.totalorder %s21, 0
      %p194 = por %p192, %p193
      %p195 = scmp.ne.s32.totalorder %s181, %s182
      %p196 = scmp.eq.s32.totalorder %s22, 1
      %p197 = por %p195, %p196
      %p199 = scmp.ne.s32.totalorder %s182, %s198
      %p200 = scmp.eq.s32.totalorder %s22, 0
      %p201 = por %p199, %p200
      %p202 = scmp.le.s32.totalorder 1, %s16
      %p203 = scmp.lt.s32.totalorder %s16, 3
      %p204 = pnand %p202, %p203
      %p205 = pneg %p204
      // Predicated region
      $region9: #{resblock_forward.1} parent=5 // pred_check
        _
      $region10: #{resblock_forward.1} parent=5 // pred_check_branch
        %207 = sbr.rel (%p204) target = $region12
      $region11: #{resblock_forward.1} parent=5 // pred_region
        %s208 = ssub.s32 %s16, 1
        // Predicated region
        $region13: #{resblock_forward.1} parent=11 // pred_check
          %p209 = pneg %p63
        $region14: #{resblock_forward.1} parent=11 // pred_check_branch
          %211 = sbr.rel (%p209) target = $region16
        $region15: #{resblock_forward.1} parent=11 // pred_region
          _
        $region16: #{resblock_forward.1} parent=11 // pred_fallthru
          _
        // Predicated region
        $region17: #{resblock_forward.1} parent=11 // pred_check
          %p212 = pneg %p84
        $region18: #{resblock_forward.1} parent=11 // pred_check_branch
          %214 = sbr.rel (%p212) target = $region20
        $region19: #{resblock_forward.1} parent=11 // pred_region
          _
        $region20: #{resblock_forward.1} parent=11 // pred_fallthru
          _
        // Predicated region
        $region21: #{resblock_forward.1} parent=11 // pred_check
          %p215 = pneg %p105
        $region22: #{resblock_forward.1} parent=11 // pred_check_branch
          %217 = sbr.rel (%p215) target = $region24
        $region23: #{resblock_forward.1} parent=11 // pred_region
          _
        $region24: #{resblock_forward.1} parent=11 // pred_fallthru
          _
        // Predicated region
        $region25: #{resblock_forward.1} parent=11 // pred_check
          %p218 = pneg %p126
        $region26: #{resblock_forward.1} parent=11 // pred_check_branch
          %220 = sbr.rel (%p218) target = $region28
        $region27: #{resblock_forward.1} parent=11 // pred_region
          _
        $region28: #{resblock_forward.1} parent=11 // pred_fallthru
          _
        // Predicated region
        $region29: #{resblock_forward.1} parent=11 // pred_check
          %p221 = pneg %p147
        $region30: #{resblock_forward.1} parent=11 // pred_check_branch
          %223 = sbr.rel (%p221) target = $region32
        $region31: #{resblock_forward.1} parent=11 // pred_region
          _
        $region32: #{resblock_forward.1} parent=11 // pred_fallthru
          _
        // Predicated region
        $region33: #{resblock_forward.1} parent=11 // pred_check
          %p224 = pneg %p168
        $region34: #{resblock_forward.1} parent=11 // pred_check_branch
          %226 = sbr.rel (%p224) target = $region36
        $region35: #{resblock_forward.1} parent=11 // pred_region
          _
        $region36: #{resblock_forward.1} parent=11 // pred_fallthru
          _
      $region12: #{resblock_forward.1} parent=5 // pred_fallthru
        _
      %p227 = scmp.lt.s32.totalorder %s16, 2
      // Predicated region
      $region37: #{resblock_forward.1} parent=5 // pred_check
        %p228 = pneg %p227
      $region38: #{resblock_forward.1} parent=5 // pred_check_branch
        %230 = sbr.rel (%p228) target = $region40
      $region39: #{resblock_forward.1} parent=5 // pred_region
        // Predicated region
        $region41: #{resblock_forward.1} parent=39 // pred_check
          %p231 = pneg %p36
        $region42: #{resblock_forward.1} parent=39 // pred_check_branch
          %233 = sbr.rel (%p231) target = $region44
        $region43: #{resblock_forward.1} parent=39 // pred_region
          %p234 = scmp.lt.s32.totalorder %s16, 1
          %s235 = scalar_select %p234, %s16, 1
          %s236 = smul.addr %s235, 32
          %s237 = smul.addr %s236, 8
          %s238 = scalar_lea.vmem %s0, %s237
        $region44: #{resblock_forward.1} parent=39 // pred_fallthru
          _
      $region40: #{resblock_forward.1} parent=5 // pred_fallthru
        _
      %p239 = scmp.le.s32.totalorder 1, %s16
      %p240 = scmp.lt.s32.totalorder %s16, 3
      %p241 = pnand %p239, %p240
      %p242 = pneg %p241
      // Predicated region
      $region45: #{resblock_forward.1} parent=5 // pred_check
        _
      $region46: #{resblock_forward.1} parent=5 // pred_check_branch
        %244 = sbr.rel (%p241) target = $region48
      $region47: #{resblock_forward.1} parent=5 // pred_region
        %s245 = ssub.s32 %s16, 1
        %p246 = scmp.lt.s32.totalorder %s21, 1
        %s247 = scalar_select %p246, %s21, 1
        %s248 = smul.addr %s247, 32
        %s249 = smul.addr %s248, 8
        %s250 = scalar_lea.vmem %s0, %s249
        %p251 = pneg %p42
        %p252 = pneg %p39
        %p253 = pneg %p63
        %p254 = pneg %p60
        %p255 = pneg %p84
        %p256 = pneg %p81
        %p257 = pneg %p105
        %p258 = pneg %p102
        %p259 = pneg %p126
        %p260 = pneg %p123
        %p261 = pneg %p147
        %p262 = pneg %p144
        %p263 = pneg %p168
        %p264 = pneg %p165
        %p265 = pneg %p194
        %p266 = pneg %p191
        %s267 = sand.u32 %s181, 1
        %s268 = scalar_lea.sflag [#allocation4], %s267
        %s269 = sand.u32 %s181, 1
        %s270 = smul.addr %s269, 512
        %s271 = scalar_lea.vmem [#allocation3], %s270
        %p272 = scmp.lt.s32.totalorder %s21, 1
        %s273 = scalar_select %p272, %s21, 1
        %s274 = smul.addr %s273, 32
        %s275 = smul.addr %s274, 8
        %s276 = scalar_lea.vmem %s0, %s275
        %v277 = vld [vmem:[%s276] sm:$0xff]
        %v278 = vld [vmem:[%s276 + $0x8] sm:$0xff]
        %v279 = vld [vmem:[%s276 + $0x10] sm:$0xff]
        %v280 = vld [vmem:[%s276 + $0x18] sm:$0xff]
        %v281 = vld [vmem:[%s276 + $0x20] sm:$0xff]
        %v282 = vld [vmem:[%s276 + $0x28] sm:$0xff]
        %v283 = vld [vmem:[%s276 + $0x30] sm:$0xff]
        %v284 = vld [vmem:[%s276 + $0x38] sm:$0xff]
        %v285 = vld [vmem:[%s276 + $0x40] sm:$0xff]
        %v286 = vld [vmem:[%s276 + $0x48] sm:$0xff]
        %v287 = vld [vmem:[%s276 + $0x50] sm:$0xff]
        %v288 = vld [vmem:[%s276 + $0x58] sm:$0xff]
        %v289 = vld [vmem:[%s276 + $0x60] sm:$0xff]
        %v290 = vld [vmem:[%s276 + $0x68] sm:$0xff]
        %v291 = vld [vmem:[%s276 + $0x70] sm:$0xff]
        %v292 = vld [vmem:[%s276 + $0x78] sm:$0xff]
        %v293 = vld [vmem:[%s276 + $0x80] sm:$0xff]
        %v294 = vld [vmem:[%s276 + $0x88] sm:$0xff]
        %v295 = vld [vmem:[%s276 + $0x90] sm:$0xff]
        %v296 = vld [vmem:[%s276 + $0x98] sm:$0xff]
        %v297 = vld [vmem:[%s276 + $0xa0] sm:$0xff]
        %v298 = vld [vmem:[%s276 + $0xa8] sm:$0xff]
        %v299 = vld [vmem:[%s276 + $0xb0] sm:$0xff]
        %v300 = vld [vmem:[%s276 + $0xb8] sm:$0xff]
        %v301 = vld [vmem:[%s276 + $0xc0] sm:$0xff]
        %v302 = vld [vmem:[%s276 + $0xc8] sm:$0xff]
        %v303 = vld [vmem:[%s276 + $0xd0] sm:$0xff]
        %v304 = vld [vmem:[%s276 + $0xd8] sm:$0xff]
        %v305 = vld [vmem:[%s276 + $0xe0] sm:$0xff]
        %v306 = vld [vmem:[%s276 + $0xe8] sm:$0xff]
        %v307 = vld [vmem:[%s276 + $0xf0] sm:$0xff]
        %v308 = vld [vmem:[%s276 + $0xf8] sm:$0xff]
        %v309 = vld [vmem:[%s1] sm:$0xff]
        %v310 = vld [vmem:[%s1 + $0x8] sm:$0xf]
        %v311 = vld [vmem:[%s2] sm:$0x7]
        %v313 = vlaneseq
        %v314 = vshrl.u32 %v313, 7
        %v315 = vsub.s32 0, %v314
        %v316 = vrot.slane %v311, %v315
        %v317 = vlaneseq
        %v318 = vshrl.u32 %v317, 7
        %v319 = vsub.s32 1, %v318
        %v320 = vrot.slane %v311, %v319
        %v321 = vlaneseq
        %v322 = vshrl.u32 %v321, 7
        %v323 = vsub.s32 2, %v322
        %v324 = vrot.slane %v311, %v323
        %v330 = vcombine.high %v309, %v309
        %vm331 = vcmask 31744
        %v333 = vsel %vm331, %v277, 0
        %v336 = vsel %vm331, %v278, 0
        %v339 = vsel %vm331, %v279, 0
        %v342 = vsel %vm331, %v280, 0
        %v345 = vsel %vm331, %v281, 0
        %v348 = vsel %vm331, %v282, 0
        %v351 = vsel %vm331, %v283, 0
        %v354 = vsel %vm331, %v284, 0
        %v357 = vsel %vm331, %v285, 0
        %v360 = vsel %vm331, %v286, 0
        %v363 = vsel %vm331, %v287, 0
        %v366 = vsel %vm331, %v288, 0
        %v369 = vsel %vm331, %v289, 0
        %v372 = vsel %vm331, %v290, 0
        %v375 = vsel %vm331, %v291, 0
        %v378 = vsel %vm331, %v292, 0
        %v381 = vsel %vm331, %v293, 0
        %v384 = vsel %vm331, %v294, 0
        %v387 = vsel %vm331, %v295, 0
        %v390 = vsel %vm331, %v296, 0
        %v393 = vsel %vm331, %v297, 0
        %v396 = vsel %vm331, %v298, 0
        %v399 = vsel %vm331, %v299, 0
        %v402 = vsel %vm331, %v300, 0
        %v405 = vsel %vm331, %v301, 0
        %v408 = vsel %vm331, %v302, 0
        %v411 = vsel %vm331, %v303, 0
        %v414 = vsel %vm331, %v304, 0
        %v417 = vsel %vm331, %v305, 0
        %v420 = vsel %vm331, %v306, 0
        %v423 = vsel %vm331, %v307, 0
        %v426 = vsel %vm331, %v308, 0
        %vm428 = vcmask 1043456
        %v429 = vsel %vm428, %v309, 0
        %v431 = vsel %vm428, %v330, 0
        %v433 = vsel %vm428, %v310, 0
        %435 = vmatprep.subr.mxu0 0.0
        %436 = vmatpush1.msra.mxu0 0.0
        %437 = vmatprep.subr.mxu0 0.0
        %438 = vmatpush1.msra.mxu0 0.0
        %439 = vmatprep.subr.mxu0 0.0
        %440 = vmatpush1.msra.mxu0 0.0
        %441 = vmatprep.subr.mxu0 0.0
        %442 = vmatpush1.msra.mxu0 0.0
        %443 = vmatprep.subr.mxu0 0.0
        %444 = vmatpush1.msra.mxu0 0.0
        %445 = vmatprep.subr.mxu0 0.0
        %446 = vmatpush1.msra.mxu0 0.0
        %447 = vmatprep.subr.mxu0 0.0
        %448 = vmatpush1.msra.mxu0 0.0
        %449 = vmatprep.subr.mxu0 0.0
        %450 = vmatpush1.msra.mxu0 0.0
        %451 = vmatprep.subr.mxu0 0.0
        %452 = vmatpush1.msra.mxu0 0.0
        %453 = vmatprep.subr.mxu0 0.0
        %454 = vmatpush1.msra.mxu0 0.0
        %455 = vmatprep.subr.mxu0 0.0
        %456 = vmatpush1.msra.mxu0 0.0
        %457 = vmatprep.subr.mxu0 0.0
        %458 = vmatpush1.msra.mxu0 0.0
        %459 = vmatprep.subr.mxu0 0.0
        %460 = vmatpush1.msra.mxu0 0.0
        %461 = vmatprep.subr.mxu0 0.0
        %462 = vmatpush1.msra.mxu0 0.0
        %463 = vmatprep.subr.mxu0 0.0
        %464 = vmatpush1.msra.mxu0 0.0
        %465 = vmatprep.subr.mxu0 %v431
        %466 = vmatpush1.msra.mxu0 %v429
        %467 = vmatprep.subr.mxu0 0.0
        %468 = vmatpush2.msra.mxu0 0.0
        %469 = vmatprep.subr.mxu0 0.0
        %470 = vmatpush2.msra.mxu0 0.0
        %471 = vmatprep.subr.mxu0 0.0
        %472 = vmatpush2.msra.mxu0 0.0
        %473 = vmatprep.subr.mxu0 0.0
        %474 = vmatpush2.msra.mxu0 0.0
        %475 = vmatprep.subr.mxu0 0.0
        %476 = vmatpush2.msra.mxu0 0.0
        %477 = vmatprep.subr.mxu0 0.0
        %478 = vmatpush2.msra.mxu0 0.0
        %479 = vmatprep.subr.mxu0 0.0
        %480 = vmatpush2.msra.mxu0 0.0
        %481 = vmatprep.subr.mxu0 0.0
        %482 = vmatpush2.msra.mxu0 0.0
        %483 = vmatprep.subr.mxu0 0.0
        %484 = vmatpush2.msra.mxu0 0.0
        %485 = vmatprep.subr.mxu0 0.0
        %486 = vmatpush2.msra.mxu0 0.0
        %487 = vmatprep.subr.mxu0 0.0
        %488 = vmatpush2.msra.mxu0 0.0
        %489 = vmatprep.subr.mxu0 0.0
        %490 = vmatpush2.msra.mxu0 0.0
        %491 = vmatprep.subr.mxu0 0.0
        %492 = vmatpush2.msra.mxu0 0.0
        %493 = vmatprep.subr.mxu0 0.0
        %494 = vmatpush2.msra.mxu0 0.0
        %495 = vmatprep.subr.mxu0 0.0
        %496 = vmatpush2.msra.mxu0 0.0
        %497 = vmatprep.subr.mxu0 0.0
        %498 = vmatpush2.msra.mxu0 0.0
        %499 = vmatprep.mubr.f32.mxu0 0.0
        %500 = vmatmul.mubr.f32.gmra.mxu0 %v333
        %v501 = vpop.f32.mrf.mxu0
        %v502 = vadd.f32 %v316, %v501
        %v503 = vpop.f32.mrf.mxu0
        %v504 = vadd.f32 %v320, %v503
        %505 = vmatprep.mubr.f32.mxu0 0.0
        %506 = vmatmul.mubr.f32.gmra.mxu0 %v336
        %v507 = vpop.f32.mrf.mxu0
        %v508 = vadd.f32 %v316, %v507
        %v509 = vpop.f32.mrf.mxu0
        %v510 = vadd.f32 %v320, %v509
        %511 = vmatprep.mubr.f32.mxu0 0.0
        %512 = vmatmul.mubr.f32.gmra.mxu0 %v339
        %v513 = vpop.f32.mrf.mxu0
        %v514 = vadd.f32 %v316, %v513
        %v515 = vpop.f32.mrf.mxu0
        %v516 = vadd.f32 %v320, %v515
        %517 = vmatprep.mubr.f32.mxu0 0.0
        %518 = vmatmul.mubr.f32.gmra.mxu0 %v342
        %v519 = vpop.f32.mrf.mxu0
        %v520 = vadd.f32 %v316, %v519
        %v521 = vpop.f32.mrf.mxu0
        %v522 = vadd.f32 %v320, %v521
        %523 = vmatprep.mubr.f32.mxu0 0.0
        %524 = vmatmul.mubr.f32.gmra.mxu0 %v345
        %v525 = vpop.f32.mrf.mxu0
        %v526 = vadd.f32 %v316, %v525
        %v527 = vpop.f32.mrf.mxu0
        %v528 = vadd.f32 %v320, %v527
        %529 = vmatprep.mubr.f32.mxu0 0.0
        %530 = vmatmul.mubr.f32.gmra.mxu0 %v348
        %v531 = vpop.f32.mrf.mxu0
        %v532 = vadd.f32 %v316, %v531
        %v533 = vpop.f32.mrf.mxu0
        %v534 = vadd.f32 %v320, %v533
        %535 = vmatprep.mubr.f32.mxu0 0.0
        %536 = vmatmul.mubr.f32.gmra.mxu0 %v351
        %v537 = vpop.f32.mrf.mxu0
        %v538 = vadd.f32 %v316, %v537
        %v539 = vpop.f32.mrf.mxu0
        %v540 = vadd.f32 %v320, %v539
        %541 = vmatprep.mubr.f32.mxu0 0.0
        %542 = vmatmul.mubr.f32.gmra.mxu0 %v354
        %v543 = vpop.f32.mrf.mxu0
        %v544 = vadd.f32 %v316, %v543
        %v545 = vpop.f32.mrf.mxu0
        %v546 = vadd.f32 %v320, %v545
        %547 = vmatprep.mubr.f32.mxu0 0.0
        %548 = vmatmul.mubr.f32.gmra.mxu0 %v357
        %v549 = vpop.f32.mrf.mxu0
        %v550 = vadd.f32 %v316, %v549
        %v551 = vpop.f32.mrf.mxu0
        %v552 = vadd.f32 %v320, %v551
        %553 = vmatprep.mubr.f32.mxu0 0.0
        %554 = vmatmul.mubr.f32.gmra.mxu0 %v360
        %v555 = vpop.f32.mrf.mxu0
        %v556 = vadd.f32 %v316, %v555
        %v557 = vpop.f32.mrf.mxu0
        %v558 = vadd.f32 %v320, %v557
        %559 = vmatprep.mubr.f32.mxu0 0.0
        %560 = vmatmul.mubr.f32.gmra.mxu0 %v363
        %v561 = vpop.f32.mrf.mxu0
        %v562 = vadd.f32 %v316, %v561
        %v563 = vpop.f32.mrf.mxu0
        %v564 = vadd.f32 %v320, %v563
        %565 = vmatprep.mubr.f32.mxu0 0.0
        %566 = vmatmul.mubr.f32.gmra.mxu0 %v366
        %v567 = vpop.f32.mrf.mxu0
        %v568 = vadd.f32 %v316, %v567
        %v569 = vpop.f32.mrf.mxu0
        %v570 = vadd.f32 %v320, %v569
        %571 = vmatprep.mubr.f32.mxu0 0.0
        %572 = vmatmul.mubr.f32.gmra.mxu0 %v369
        %v573 = vpop.f32.mrf.mxu0
        %v574 = vadd.f32 %v316, %v573
        %v575 = vpop.f32.mrf.mxu0
        %v576 = vadd.f32 %v320, %v575
        %577 = vmatprep.mubr.f32.mxu0 0.0
        %578 = vmatmul.mubr.f32.gmra.mxu0 %v372
        %v579 = vpop.f32.mrf.mxu0
        %v580 = vadd.f32 %v316, %v579
        %v581 = vpop.f32.mrf.mxu0
        %v582 = vadd.f32 %v320, %v581
        %583 = vmatprep.mubr.f32.mxu0 0.0
        %584 = vmatmul.mubr.f32.gmra.mxu0 %v375
        %v585 = vpop.f32.mrf.mxu0
        %v586 = vadd.f32 %v316, %v585
        %v587 = vpop.f32.mrf.mxu0
        %v588 = vadd.f32 %v320, %v587
        %589 = vmatprep.mubr.f32.mxu0 0.0
        %590 = vmatmul.mubr.f32.gmra.mxu0 %v378
        %v591 = vpop.f32.mrf.mxu0
        %v592 = vadd.f32 %v316, %v591
        %v593 = vpop.f32.mrf.mxu0
        %v594 = vadd.f32 %v320, %v593
        %595 = vmatprep.mubr.f32.mxu0 0.0
        %596 = vmatmul.mubr.f32.gmra.mxu0 %v381
        %v597 = vpop.f32.mrf.mxu0
        %v598 = vadd.f32 %v316, %v597
        %v599 = vpop.f32.mrf.mxu0
        %v600 = vadd.f32 %v320, %v599
        %601 = vmatprep.mubr.f32.mxu0 0.0
        %602 = vmatmul.mubr.f32.gmra.mxu0 %v384
        %v603 = vpop.f32.mrf.mxu0
        %v604 = vadd.f32 %v316, %v603
        %v605 = vpop.f32.mrf.mxu0
        %v606 = vadd.f32 %v320, %v605
        %607 = vmatprep.mubr.f32.mxu0 0.0
        %608 = vmatmul.mubr.f32.gmra.mxu0 %v387
        %v609 = vpop.f32.mrf.mxu0
        %v610 = vadd.f32 %v316, %v609
        %v611 = vpop.f32.mrf.mxu0
        %v612 = vadd.f32 %v320, %v611
        %613 = vmatprep.mubr.f32.mxu0 0.0
        %614 = vmatmul.mubr.f32.gmra.mxu0 %v390
        %v615 = vpop.f32.mrf.mxu0
        %v616 = vadd.f32 %v316, %v615
        %v617 = vpop.f32.mrf.mxu0
        %v618 = vadd.f32 %v320, %v617
        %619 = vmatprep.mubr.f32.mxu0 0.0
        %620 = vmatmul.mubr.f32.gmra.mxu0 %v393
        %v621 = vpop.f32.mrf.mxu0
        %v622 = vadd.f32 %v316, %v621
        %v623 = vpop.f32.mrf.mxu0
        %v624 = vadd.f32 %v320, %v623
        %625 = vmatprep.mubr.f32.mxu0 0.0
        %626 = vmatmul.mubr.f32.gmra.mxu0 %v396
        %v627 = vpop.f32.mrf.mxu0
        %v628 = vadd.f32 %v316, %v627
        %v629 = vpop.f32.mrf.mxu0
        %v630 = vadd.f32 %v320, %v629
        %631 = vmatprep.mubr.f32.mxu0 0.0
        %632 = vmatmul.mubr.f32.gmra.mxu0 %v399
        %v633 = vpop.f32.mrf.mxu0
        %v634 = vadd.f32 %v316, %v633
        %v635 = vpop.f32.mrf.mxu0
        %v636 = vadd.f32 %v320, %v635
        %637 = vmatprep.mubr.f32.mxu0 0.0
        %638 = vmatmul.mubr.f32.gmra.mxu0 %v402
        %v639 = vpop.f32.mrf.mxu0
        %v640 = vadd.f32 %v316, %v639
        %v641 = vpop.f32.mrf.mxu0
        %v642 = vadd.f32 %v320, %v641
        %643 = vmatprep.mubr.f32.mxu0 0.0
        %644 = vmatmul.mubr.f32.gmra.mxu0 %v405
        %v645 = vpop.f32.mrf.mxu0
        %v646 = vadd.f32 %v316, %v645
        %v647 = vpop.f32.mrf.mxu0
        %v648 = vadd.f32 %v320, %v647
        %649 = vmatprep.mubr.f32.mxu0 0.0
        %650 = vmatmul.mubr.f32.gmra.mxu0 %v408
        %v651 = vpop.f32.mrf.mxu0
        %v652 = vadd.f32 %v316, %v651
        %v653 = vpop.f32.mrf.mxu0
        %v654 = vadd.f32 %v320, %v653
        %655 = vmatprep.mubr.f32.mxu0 0.0
        %656 = vmatmul.mubr.f32.gmra.mxu0 %v411
        %v657 = vpop.f32.mrf.mxu0
        %v658 = vadd.f32 %v316, %v657
        %v659 = vpop.f32.mrf.mxu0
        %v660 = vadd.f32 %v320, %v659
        %661 = vmatprep.mubr.f32.mxu0 0.0
        %662 = vmatmul.mubr.f32.gmra.mxu0 %v414
        %v663 = vpop.f32.mrf.mxu0
        %v664 = vadd.f32 %v316, %v663
        %v665 = vpop.f32.mrf.mxu0
        %v666 = vadd.f32 %v320, %v665
        %667 = vmatprep.mubr.f32.mxu0 0.0
        %668 = vmatmul.mubr.f32.gmra.mxu0 %v417
        %v669 = vpop.f32.mrf.mxu0
        %v670 = vadd.f32 %v316, %v669
        %v671 = vpop.f32.mrf.mxu0
        %v672 = vadd.f32 %v320, %v671
        %673 = vmatprep.mubr.f32.mxu0 0.0
        %674 = vmatmul.mubr.f32.gmra.mxu0 %v420
        %v675 = vpop.f32.mrf.mxu0
        %v676 = vadd.f32 %v316, %v675
        %v677 = vpop.f32.mrf.mxu0
        %v678 = vadd.f32 %v320, %v677
        %679 = vmatprep.mubr.f32.mxu0 0.0
        %680 = vmatmul.mubr.f32.gmra.mxu0 %v423
        %v681 = vpop.f32.mrf.mxu0
        %v682 = vadd.f32 %v316, %v681
        %v683 = vpop.f32.mrf.mxu0
        %v684 = vadd.f32 %v320, %v683
        %685 = vmatprep.mubr.f32.mxu0 0.0
        %686 = vmatmul.mubr.f32.gmra.mxu0 %v426
        %v687 = vpop.f32.mrf.mxu0
        %v688 = vadd.f32 %v316, %v687
        %v689 = vpop.f32.mrf.mxu0
        %v690 = vadd.f32 %v320, %v689
        %691 = vdwg.mxu0
        %692 = vmatprep.subr.mxu0 0.0
        %693 = vmatpush1.msra.mxu0 0.0
        %694 = vmatprep.subr.mxu0 0.0
        %695 = vmatpush1.msra.mxu0 0.0
        %696 = vmatprep.subr.mxu0 0.0
        %697 = vmatpush1.msra.mxu0 0.0
        %698 = vmatprep.subr.mxu0 0.0
        %699 = vmatpush1.msra.mxu0 0.0
        %700 = vmatprep.subr.mxu0 0.0
        %701 = vmatpush1.msra.mxu0 0.0
        %702 = vmatprep.subr.mxu0 0.0
        %703 = vmatpush1.msra.mxu0 0.0
        %704 = vmatprep.subr.mxu0 0.0
        %705 = vmatpush1.msra.mxu0 0.0
        %706 = vmatprep.subr.mxu0 0.0
        %707 = vmatpush1.msra.mxu0 0.0
        %708 = vmatprep.subr.mxu0 0.0
        %709 = vmatpush1.msra.mxu0 0.0
        %710 = vmatprep.subr.mxu0 0.0
        %711 = vmatpush1.msra.mxu0 0.0
        %712 = vmatprep.subr.mxu0 0.0
        %713 = vmatpush1.msra.mxu0 0.0
        %714 = vmatprep.subr.mxu0 0.0
        %715 = vmatpush1.msra.mxu0 0.0
        %716 = vmatprep.subr.mxu0 0.0
        %717 = vmatpush1.msra.mxu0 0.0
        %718 = vmatprep.subr.mxu0 0.0
        %719 = vmatpush1.msra.mxu0 0.0
        %720 = vmatprep.subr.mxu0 0.0
        %721 = vmatpush1.msra.mxu0 0.0
        %722 = vmatprep.subr.mxu0 0.0
        %723 = vmatpush1.msra.mxu0 %v433
        %724 = vmatprep.subr.mxu0 0.0
        %725 = vmatpush2.msra.mxu0 0.0
        %726 = vmatprep.subr.mxu0 0.0
        %727 = vmatpush2.msra.mxu0 0.0
        %728 = vmatprep.subr.mxu0 0.0
        %729 = vmatpush2.msra.mxu0 0.0
        %730 = vmatprep.subr.mxu0 0.0
        %731 = vmatpush2.msra.mxu0 0.0
        %732 = vmatprep.subr.mxu0 0.0
        %733 = vmatpush2.msra.mxu0 0.0
        %734 = vmatprep.subr.mxu0 0.0
        %735 = vmatpush2.msra.mxu0 0.0
        %736 = vmatprep.subr.mxu0 0.0
        %737 = vmatpush2.msra.mxu0 0.0
        %738 = vmatprep.subr.mxu0 0.0
        %739 = vmatpush2.msra.mxu0 0.0
        %740 = vmatprep.subr.mxu0 0.0
        %741 = vmatpush2.msra.mxu0 0.0
        %742 = vmatprep.subr.mxu0 0.0
        %743 = vmatpush2.msra.mxu0 0.0
        %744 = vmatprep.subr.mxu0 0.0
        %745 = vmatpush2.msra.mxu0 0.0
        %746 = vmatprep.subr.mxu0 0.0
        %747 = vmatpush2.msra.mxu0 0.0
        %748 = vmatprep.subr.mxu0 0.0
        %749 = vmatpush2.msra.mxu0 0.0
        %750 = vmatprep.subr.mxu0 0.0
        %751 = vmatpush2.msra.mxu0 0.0
        %752 = vmatprep.subr.mxu0 0.0
        %753 = vmatpush2.msra.mxu0 0.0
        %754 = vmatprep.subr.mxu0 0.0
        %755 = vmatpush2.msra.mxu0 0.0
        %756 = vmatprep.mubr.f32.mxu0 0.0
        %757 = vmatmul.mubr.f32.gmra.mxu0 %v333
        %v758 = vpop.f32.mrf.mxu0
        %v759 = vadd.f32 %v324, %v758
        %v760 = vpop.f32.mrf.mxu0
        %761 = vmatprep.mubr.f32.mxu0 0.0
        %762 = vmatmul.mubr.f32.gmra.mxu0 %v336
        %v763 = vpop.f32.mrf.mxu0
        %v764 = vadd.f32 %v324, %v763
        %v765 = vpop.f32.mrf.mxu0
        %766 = vmatprep.mubr.f32.mxu0 0.0
        %767 = vmatmul.mubr.f32.gmra.mxu0 %v339
        %v768 = vpop.f32.mrf.mxu0
        %v769 = vadd.f32 %v324, %v768
        %v770 = vpop.f32.mrf.mxu0
        %771 = vmatprep.mubr.f32.mxu0 0.0
        %772 = vmatmul.mubr.f32.gmra.mxu0 %v342
        %v773 = vpop.f32.mrf.mxu0
        %v774 = vadd.f32 %v324, %v773
        %v775 = vpop.f32.mrf.mxu0
        %776 = vmatprep.mubr.f32.mxu0 0.0
        %777 = vmatmul.mubr.f32.gmra.mxu0 %v345
        %v778 = vpop.f32.mrf.mxu0
        %v779 = vadd.f32 %v324, %v778
        %v780 = vpop.f32.mrf.mxu0
        %781 = vmatprep.mubr.f32.mxu0 0.0
        %782 = vmatmul.mubr.f32.gmra.mxu0 %v348
        %v783 = vpop.f32.mrf.mxu0
        %v784 = vadd.f32 %v324, %v783
        %v785 = vpop.f32.mrf.mxu0
        %786 = vmatprep.mubr.f32.mxu0 0.0
        %787 = vmatmul.mubr.f32.gmra.mxu0 %v351
        %v788 = vpop.f32.mrf.mxu0
        %v789 = vadd.f32 %v324, %v788
        %v790 = vpop.f32.mrf.mxu0
        %791 = vmatprep.mubr.f32.mxu0 0.0
        %792 = vmatmul.mubr.f32.gmra.mxu0 %v354
        %v793 = vpop.f32.mrf.mxu0
        %v794 = vadd.f32 %v324, %v793
        %v795 = vpop.f32.mrf.mxu0
        %796 = vmatprep.mubr.f32.mxu0 0.0
        %797 = vmatmul.mubr.f32.gmra.mxu0 %v357
        %v798 = vpop.f32.mrf.mxu0
        %v799 = vadd.f32 %v324, %v798
        %v800 = vpop.f32.mrf.mxu0
        %801 = vmatprep.mubr.f32.mxu0 0.0
        %802 = vmatmul.mubr.f32.gmra.mxu0 %v360
        %v803 = vpop.f32.mrf.mxu0
        %v804 = vadd.f32 %v324, %v803
        %v805 = vpop.f32.mrf.mxu0
        %806 = vmatprep.mubr.f32.mxu0 0.0
        %807 = vmatmul.mubr.f32.gmra.mxu0 %v363
        %v808 = vpop.f32.mrf.mxu0
        %v809 = vadd.f32 %v324, %v808
        %v810 = vpop.f32.mrf.mxu0
        %811 = vmatprep.mubr.f32.mxu0 0.0
        %812 = vmatmul.mubr.f32.gmra.mxu0 %v366
        %v813 = vpop.f32.mrf.mxu0
        %v814 = vadd.f32 %v324, %v813
        %v815 = vpop.f32.mrf.mxu0
        %816 = vmatprep.mubr.f32.mxu0 0.0
        %817 = vmatmul.mubr.f32.gmra.mxu0 %v369
        %v818 = vpop.f32.mrf.mxu0
        %v819 = vadd.f32 %v324, %v818
        %v820 = vpop.f32.mrf.mxu0
        %821 = vmatprep.mubr.f32.mxu0 0.0
        %822 = vmatmul.mubr.f32.gmra.mxu0 %v372
        %v823 = vpop.f32.mrf.mxu0
        %v824 = vadd.f32 %v324, %v823
        %v825 = vpop.f32.mrf.mxu0
        %826 = vmatprep.mubr.f32.mxu0 0.0
        %827 = vmatmul.mubr.f32.gmra.mxu0 %v375
        %v828 = vpop.f32.mrf.mxu0
        %v829 = vadd.f32 %v324, %v828
        %v830 = vpop.f32.mrf.mxu0
        %831 = vmatprep.mubr.f32.mxu0 0.0
        %832 = vmatmul.mubr.f32.gmra.mxu0 %v378
        %v833 = vpop.f32.mrf.mxu0
        %v834 = vadd.f32 %v324, %v833
        %v835 = vpop.f32.mrf.mxu0
        %836 = vmatprep.mubr.f32.mxu0 0.0
        %837 = vmatmul.mubr.f32.gmra.mxu0 %v381
        %v838 = vpop.f32.mrf.mxu0
        %v839 = vadd.f32 %v324, %v838
        %v840 = vpop.f32.mrf.mxu0
        %841 = vmatprep.mubr.f32.mxu0 0.0
        %842 = vmatmul.mubr.f32.gmra.mxu0 %v384
        %v843 = vpop.f32.mrf.mxu0
        %v844 = vadd.f32 %v324, %v843
        %v845 = vpop.f32.mrf.mxu0
        %846 = vmatprep.mubr.f32.mxu0 0.0
        %847 = vmatmul.mubr.f32.gmra.mxu0 %v387
        %v848 = vpop.f32.mrf.mxu0
        %v849 = vadd.f32 %v324, %v848
        %v850 = vpop.f32.mrf.mxu0
        %851 = vmatprep.mubr.f32.mxu0 0.0
        %852 = vmatmul.mubr.f32.gmra.mxu0 %v390
        %v853 = vpop.f32.mrf.mxu0
        %v854 = vadd.f32 %v324, %v853
        %v855 = vpop.f32.mrf.mxu0
        %856 = vmatprep.mubr.f32.mxu0 0.0
        %857 = vmatmul.mubr.f32.gmra.mxu0 %v393
        %v858 = vpop.f32.mrf.mxu0
        %v859 = vadd.f32 %v324, %v858
        %v860 = vpop.f32.mrf.mxu0
        %861 = vmatprep.mubr.f32.mxu0 0.0
        %862 = vmatmul.mubr.f32.gmra.mxu0 %v396
        %v863 = vpop.f32.mrf.mxu0
        %v864 = vadd.f32 %v324, %v863
        %v865 = vpop.f32.mrf.mxu0
        %866 = vmatprep.mubr.f32.mxu0 0.0
        %867 = vmatmul.mubr.f32.gmra.mxu0 %v399
        %v868 = vpop.f32.mrf.mxu0
        %v869 = vadd.f32 %v324, %v868
        %v870 = vpop.f32.mrf.mxu0
        %871 = vmatprep.mubr.f32.mxu0 0.0
        %872 = vmatmul.mubr.f32.gmra.mxu0 %v402
        %v873 = vpop.f32.mrf.mxu0
        %v874 = vadd.f32 %v324, %v873
        %v875 = vpop.f32.mrf.mxu0
        %876 = vmatprep.mubr.f32.mxu0 0.0
        %877 = vmatmul.mubr.f32.gmra.mxu0 %v405
        %v878 = vpop.f32.mrf.mxu0
        %v879 = vadd.f32 %v324, %v878
        %v880 = vpop.f32.mrf.mxu0
        %881 = vmatprep.mubr.f32.mxu0 0.0
        %882 = vmatmul.mubr.f32.gmra.mxu0 %v408
        %v883 = vpop.f32.mrf.mxu0
        %v884 = vadd.f32 %v324, %v883
        %v885 = vpop.f32.mrf.mxu0
        %886 = vmatprep.mubr.f32.mxu0 0.0
        %887 = vmatmul.mubr.f32.gmra.mxu0 %v411
        %v888 = vpop.f32.mrf.mxu0
        %v889 = vadd.f32 %v324, %v888
        %v890 = vpop.f32.mrf.mxu0
        %891 = vmatprep.mubr.f32.mxu0 0.0
        %892 = vmatmul.mubr.f32.gmra.mxu0 %v414
        %v893 = vpop.f32.mrf.mxu0
        %v894 = vadd.f32 %v324, %v893
        %v895 = vpop.f32.mrf.mxu0
        %896 = vmatprep.mubr.f32.mxu0 0.0
        %897 = vmatmul.mubr.f32.gmra.mxu0 %v417
        %v898 = vpop.f32.mrf.mxu0
        %v899 = vadd.f32 %v324, %v898
        %v900 = vpop.f32.mrf.mxu0
        %901 = vmatprep.mubr.f32.mxu0 0.0
        %902 = vmatmul.mubr.f32.gmra.mxu0 %v420
        %v903 = vpop.f32.mrf.mxu0
        %v904 = vadd.f32 %v324, %v903
        %v905 = vpop.f32.mrf.mxu0
        %906 = vmatprep.mubr.f32.mxu0 0.0
        %907 = vmatmul.mubr.f32.gmra.mxu0 %v423
        %v908 = vpop.f32.mrf.mxu0
        %v909 = vadd.f32 %v324, %v908
        %v910 = vpop.f32.mrf.mxu0
        %911 = vmatprep.mubr.f32.mxu0 0.0
        %912 = vmatmul.mubr.f32.gmra.mxu0 %v426
        %v913 = vpop.f32.mrf.mxu0
        %v914 = vadd.f32 %v324, %v913
        %v915 = vpop.f32.mrf.mxu0
        %916 = vdwg.mxu0
        %v917 = vmax.f32 %v502, 0.0
        %v918 = vmax.f32 %v504, 0.0
        %v919 = vmax.f32 %v759, 0.0
        %v920 = vmax.f32 %v508, 0.0
        %v921 = vmax.f32 %v510, 0.0
        %v922 = vmax.f32 %v764, 0.0
        %v923 = vmax.f32 %v514, 0.0
        %v924 = vmax.f32 %v516, 0.0
        %v925 = vmax.f32 %v769, 0.0
        %v926 = vmax.f32 %v520, 0.0
        %v927 = vmax.f32 %v522, 0.0
        %v928 = vmax.f32 %v774, 0.0
        %v929 = vmax.f32 %v526, 0.0
        %v930 = vmax.f32 %v528, 0.0
        %v931 = vmax.f32 %v779, 0.0
        %v932 = vmax.f32 %v532, 0.0
        %v933 = vmax.f32 %v534, 0.0
        %v934 = vmax.f32 %v784, 0.0
        %v935 = vmax.f32 %v538, 0.0
        %v936 = vmax.f32 %v540, 0.0
        %v937 = vmax.f32 %v789, 0.0
        %v938 = vmax.f32 %v544, 0.0
        %v939 = vmax.f32 %v546, 0.0
        %v940 = vmax.f32 %v794, 0.0
        %v941 = vmax.f32 %v550, 0.0
        %v942 = vmax.f32 %v552, 0.0
        %v943 = vmax.f32 %v799, 0.0
        %v944 = vmax.f32 %v556, 0.0
        %v945 = vmax.f32 %v558, 0.0
        %v946 = vmax.f32 %v804, 0.0
        %v947 = vmax.f32 %v562, 0.0
        %v948 = vmax.f32 %v564, 0.0
        %v949 = vmax.f32 %v809, 0.0
        %v950 = vmax.f32 %v568, 0.0
        %v951 = vmax.f32 %v570, 0.0
        %v952 = vmax.f32 %v814, 0.0
        %v953 = vmax.f32 %v574, 0.0
        %v954 = vmax.f32 %v576, 0.0
        %v955 = vmax.f32 %v819, 0.0
        %v956 = vmax.f32 %v580, 0.0
        %v957 = vmax.f32 %v582, 0.0
        %v958 = vmax.f32 %v824, 0.0
        %v959 = vmax.f32 %v586, 0.0
        %v960 = vmax.f32 %v588, 0.0
        %v961 = vmax.f32 %v829, 0.0
        %v962 = vmax.f32 %v592, 0.0
        %v963 = vmax.f32 %v594, 0.0
        %v964 = vmax.f32 %v834, 0.0
        %v965 = vmax.f32 %v598, 0.0
        %v966 = vmax.f32 %v600, 0.0
        %v967 = vmax.f32 %v839, 0.0
        %v968 = vmax.f32 %v604, 0.0
        %v969 = vmax.f32 %v606, 0.0
        %v970 = vmax.f32 %v844, 0.0
        %v971 = vmax.f32 %v610, 0.0
        %v972 = vmax.f32 %v612, 0.0
        %v973 = vmax.f32 %v849, 0.0
        %v974 = vmax.f32 %v616, 0.0
        %v975 = vmax.f32 %v618, 0.0
        %v976 = vmax.f32 %v854, 0.0
        %v977 = vmax.f32 %v622, 0.0
        %v978 = vmax.f32 %v624, 0.0
        %v979 = vmax.f32 %v859, 0.0
        %v980 = vmax.f32 %v628, 0.0
        %v981 = vmax.f32 %v630, 0.0
        %v982 = vmax.f32 %v864, 0.0
        %v983 = vmax.f32 %v634, 0.0
        %v984 = vmax.f32 %v636, 0.0
        %v985 = vmax.f32 %v869, 0.0
        %v986 = vmax.f32 %v640, 0.0
        %v987 = vmax.f32 %v642, 0.0
        %v988 = vmax.f32 %v874, 0.0
        %v989 = vmax.f32 %v646, 0.0
        %v990 = vmax.f32 %v648, 0.0
        %v991 = vmax.f32 %v879, 0.0
        %v992 = vmax.f32 %v652, 0.0
        %v993 = vmax.f32 %v654, 0.0
        %v994 = vmax.f32 %v884, 0.0
        %v995 = vmax.f32 %v658, 0.0
        %v996 = vmax.f32 %v660, 0.0
        %v997 = vmax.f32 %v889, 0.0
        %v998 = vmax.f32 %v664, 0.0
        %v999 = vmax.f32 %v666, 0.0
        %v1000 = vmax.f32 %v894, 0.0
        %v1001 = vmax.f32 %v670, 0.0
        %v1002 = vmax.f32 %v672, 0.0
        %v1003 = vmax.f32 %v899, 0.0
        %v1004 = vmax.f32 %v676, 0.0
        %v1005 = vmax.f32 %v678, 0.0
        %v1006 = vmax.f32 %v904, 0.0
        %v1007 = vmax.f32 %v682, 0.0
        %v1008 = vmax.f32 %v684, 0.0
        %v1009 = vmax.f32 %v909, 0.0
        %v1010 = vmax.f32 %v688, 0.0
        %v1011 = vmax.f32 %v690, 0.0
        %v1012 = vmax.f32 %v914, 0.0
        %1013 = vst [vmem:[%s271] sm:$0xff] %v918
        %1014 = vst [vmem:[%s271 + $0x8] sm:$0xff] %v919
        %1015 = vst [vmem:[%s271 + $0x10] sm:$0xff] %v921
        %1016 = vst [vmem:[%s271 + $0x18] sm:$0xff] %v922
        %1017 = vst [vmem:[%s271 + $0x20] sm:$0xff] %v924
        %1018 = vst [vmem:[%s271 + $0x28] sm:$0xff] %v925
        %1019 = vst [vmem:[%s271 + $0x30] sm:$0xff] %v927
        %1020 = vst [vmem:[%s271 + $0x38] sm:$0xff] %v928
        %1021 = vst [vmem:[%s271 + $0x40] sm:$0xff] %v930
        %1022 = vst [vmem:[%s271 + $0x48] sm:$0xff] %v931
        %1023 = vst [vmem:[%s271 + $0x50] sm:$0xff] %v933
        %1024 = vst [vmem:[%s271 + $0x58] sm:$0xff] %v934
        %1025 = vst [vmem:[%s271 + $0x60] sm:$0xff] %v936
        %1026 = vst [vmem:[%s271 + $0x68] sm:$0xff] %v937
        %1027 = vst [vmem:[%s271 + $0x70] sm:$0xff] %v939
        %1028 = vst [vmem:[%s271 + $0x78] sm:$0xff] %v940
        %1029 = vst [vmem:[%s271 + $0x80] sm:$0xff] %v942
        %1030 = vst [vmem:[%s271 + $0x88] sm:$0xff] %v943
        %1031 = vst [vmem:[%s271 + $0x90] sm:$0xff] %v945
        %1032 = vst [vmem:[%s271 + $0x98] sm:$0xff] %v946
        %1033 = vst [vmem:[%s271 + $0xa0] sm:$0xff] %v948
        %1034 = vst [vmem:[%s271 + $0xa8] sm:$0xff] %v949
        %1035 = vst [vmem:[%s271 + $0xb0] sm:$0xff] %v951
        %1036 = vst [vmem:[%s271 + $0xb8] sm:$0xff] %v952
        %1037 = vst [vmem:[%s271 + $0xc0] sm:$0xff] %v954
        %1038 = vst [vmem:[%s271 + $0xc8] sm:$0xff] %v955
        %1039 = vst [vmem:[%s271 + $0xd0] sm:$0xff] %v957
        %1040 = vst [vmem:[%s271 + $0xd8] sm:$0xff] %v958
        %1041 = vst [vmem:[%s271 + $0xe0] sm:$0xff] %v960
        %1042 = vst [vmem:[%s271 + $0xe8] sm:$0xff] %v961
        %1043 = vst [vmem:[%s271 + $0xf0] sm:$0xff] %v963
        %1044 = vst [vmem:[%s271 + $0xf8] sm:$0xff] %v964
        %1045 = vst [vmem:[%s271 + $0x100] sm:$0xff] %v966
        %1046 = vst [vmem:[%s271 + $0x108] sm:$0xff] %v967
        %1047 = vst [vmem:[%s271 + $0x110] sm:$0xff] %v969
        %1048 = vst [vmem:[%s271 + $0x118] sm:$0xff] %v970
        %1049 = vst [vmem:[%s271 + $0x120] sm:$0xff] %v972
        %1050 = vst [vmem:[%s271 + $0x128] sm:$0xff] %v973
        %1051 = vst [vmem:[%s271 + $0x130] sm:$0xff] %v975
        %1052 = vst [vmem:[%s271 + $0x138] sm:$0xff] %v976
        %1053 = vst [vmem:[%s271 + $0x140] sm:$0xff] %v978
        %1054 = vst [vmem:[%s271 + $0x148] sm:$0xff] %v979
        %1055 = vst [vmem:[%s271 + $0x150] sm:$0xff] %v981
        %1056 = vst [vmem:[%s271 + $0x158] sm:$0xff] %v982
        %1057 = vst [vmem:[%s271 + $0x160] sm:$0xff] %v984
        %1058 = vst [vmem:[%s271 + $0x168] sm:$0xff] %v985
        %1059 = vst [vmem:[%s271 + $0x170] sm:$0xff] %v987
        %1060 = vst [vmem:[%s271 + $0x178] sm:$0xff] %v988
        %1061 = vst [vmem:[%s271 + $0x180] sm:$0xff] %v990
        %1062 = vst [vmem:[%s271 + $0x188] sm:$0xff] %v991
        %1063 = vst [vmem:[%s271 + $0x190] sm:$0xff] %v993
        %1064 = vst [vmem:[%s271 + $0x198] sm:$0xff] %v994
        %1065 = vst [vmem:[%s271 + $0x1a0] sm:$0xff] %v996
        %1066 = vst [vmem:[%s271 + $0x1a8] sm:$0xff] %v997
        %1067 = vst [vmem:[%s271 + $0x1b0] sm:$0xff] %v999
        %1068 = vst [vmem:[%s271 + $0x1b8] sm:$0xff] %v1000
        %1069 = vst [vmem:[%s271 + $0x1c0] sm:$0xff] %v1002
        %1070 = vst [vmem:[%s271 + $0x1c8] sm:$0xff] %v1003
        %1071 = vst [vmem:[%s271 + $0x1d0] sm:$0xff] %v1005
        %1072 = vst [vmem:[%s271 + $0x1d8] sm:$0xff] %v1006
        %1073 = vst [vmem:[%s271 + $0x1e0] sm:$0xff] %v1008
        %1074 = vst [vmem:[%s271 + $0x1e8] sm:$0xff] %v1009
        %1075 = vst [vmem:[%s271 + $0x1f0] sm:$0xff] %v1011
        %1076 = vst [vmem:[%s271 + $0x1f8] sm:$0xff] %v1012
        %v1077 = vlaneseq
        %v1078 = vshrl.u32 %v1077, 7
        %v1079 = vadd.s32 %v1078, 8
        %vm1080 = vcmp.eq.s32.totalorder %v1078, 0
        %vm1081 = vcmp.eq.s32.totalorder %v1079, 0
        %v1082 = vrot.slane %v917, 7
        %v1083 = vrot.slane %v923, 7
        %v1084 = vrot.slane %v929, 7
        %v1085 = vrot.slane %v935, 7
        %v1086 = vrot.slane %v941, 7
        %v1087 = vrot.slane %v947, 7
        %v1088 = vrot.slane %v953, 7
        %v1089 = vrot.slane %v959, 7
        %v1090 = vrot.slane %v965, 7
        %v1091 = vrot.slane %v971, 7
        %v1092 = vrot.slane %v977, 7
        %v1093 = vrot.slane %v983, 7
        %v1094 = vrot.slane %v989, 7
        %v1095 = vrot.slane %v995, 7
        %v1096 = vrot.slane %v1001, 7
        %v1097 = vrot.slane %v1007, 7
        %v1098 = vrot.slane %v920, 7
        %v1099 = vrot.slane %v926, 7
        %v1100 = vrot.slane %v932, 7
        %v1101 = vrot.slane %v938, 7
        %v1102 = vrot.slane %v944, 7
        %v1103 = vrot.slane %v950, 7
        %v1104 = vrot.slane %v956, 7
        %v1105 = vrot.slane %v962, 7
        %v1106 = vrot.slane %v968, 7
        %v1107 = vrot.slane %v974, 7
        %v1108 = vrot.slane %v980, 7
        %v1109 = vrot.slane %v986, 7
        %v1110 = vrot.slane %v992, 7
        %v1111 = vrot.slane %v998, 7
        %v1112 = vrot.slane %v1004, 7
        %v1113 = vrot.slane %v1010, 7
        %vm1114 = vcmp.lt.s32.totalorder %v1078, 1
        %v1115 = vsel %vm1114, %v1082, %v1098
        %v1116 = vsel %vm1114, %v1083, %v1099
        %v1117 = vsel %vm1114, %v1084, %v1100
        %v1118 = vsel %vm1114, %v1085, %v1101
        %v1119 = vsel %vm1114, %v1086, %v1102
        %v1120 = vsel %vm1114, %v1087, %v1103
        %v1121 = vsel %vm1114, %v1088, %v1104
        %v1122 = vsel %vm1114, %v1089, %v1105
        %v1123 = vsel %vm1114, %v1090, %v1106
        %v1124 = vsel %vm1114, %v1091, %v1107
        %v1125 = vsel %vm1114, %v1092, %v1108
        %v1126 = vsel %vm1114, %v1093, %v1109
        %v1127 = vsel %vm1114, %v1094, %v1110
        %v1128 = vsel %vm1114, %v1095, %v1111
        %v1129 = vsel %vm1114, %v1096, %v1112
        %v1130 = vsel %vm1114, %v1097, %v1113
        %v1131 = vsel %vm1114, %v1098, %v1082
        %v1132 = vsel %vm1114, %v1099, %v1083
        %v1133 = vsel %vm1114, %v1100, %v1084
        %v1134 = vsel %vm1114, %v1101, %v1085
        %v1135 = vsel %vm1114, %v1102, %v1086
        %v1136 = vsel %vm1114, %v1103, %v1087
        %v1137 = vsel %vm1114, %v1104, %v1088
        %v1138 = vsel %vm1114, %v1105, %v1089
        %v1139 = vsel %vm1114, %v1106, %v1090
        %v1140 = vsel %vm1114, %v1107, %v1091
        %v1141 = vsel %vm1114, %v1108, %v1092
        %v1142 = vsel %vm1114, %v1109, %v1093
        %v1143 = vsel %vm1114, %v1110, %v1094
        %v1144 = vsel %vm1114, %v1111, %v1095
        %v1145 = vsel %vm1114, %v1112, %v1096
        %v1146 = vsel %vm1114, %v1113, %v1097
        %v1147 = vsel %vm1080, 0.0, %v1131
        %v1148 = vsel %vm1081, 0.0, %v1115
        %v1149 = vsel %vm1080, 0.0, %v1132
        %v1150 = vsel %vm1081, 0.0, %v1116
        %v1151 = vsel %vm1080, 0.0, %v1133
        %v1152 = vsel %vm1081, 0.0, %v1117
        %v1153 = vsel %vm1080, 0.0, %v1134
        %v1154 = vsel %vm1081, 0.0, %v1118
        %v1155 = vsel %vm1080, 0.0, %v1135
        %v1156 = vsel %vm1081, 0.0, %v1119
        %v1157 = vsel %vm1080, 0.0, %v1136
        %v1158 = vsel %vm1081, 0.0, %v1120
        %v1159 = vsel %vm1080, 0.0, %v1137
        %v1160 = vsel %vm1081, 0.0, %v1121
        %v1161 = vsel %vm1080, 0.0, %v1138
        %v1162 = vsel %vm1081, 0.0, %v1122
        %v1163 = vsel %vm1080, 0.0, %v1139
        %v1164 = vsel %vm1081, 0.0, %v1123
        %v1165 = vsel %vm1080, 0.0, %v1140
        %v1166 = vsel %vm1081, 0.0, %v1124
        %v1167 = vsel %vm1080, 0.0, %v1141
        %v1168 = vsel %vm1081, 0.0, %v1125
        %v1169 = vsel %vm1080, 0.0, %v1142
        %v1170 = vsel %vm1081, 0.0, %v1126
        %v1171 = vsel %vm1080, 0.0, %v1143
        %v1172 = vsel %vm1081, 0.0, %v1127
        %v1173 = vsel %vm1080, 0.0, %v1144
        %v1174 = vsel %vm1081, 0.0, %v1128
        %v1175 = vsel %vm1080, 0.0, %v1145
        %v1176 = vsel %vm1081, 0.0, %v1129
        %v1177 = vsel %vm1080, 0.0, %v1146
        %v1178 = vsel %vm1081, 0.0, %v1130
        %vm1179 = vcmp.eq.s32.totalorder %v1078, 15
        %vm1180 = vcmp.eq.s32.totalorder %v1079, 15
        %v1181 = vrot.slane %v917, 1
        %v1182 = vrot.slane %v923, 1
        %v1183 = vrot.slane %v929, 1
        %v1184 = vrot.slane %v935, 1
        %v1185 = vrot.slane %v941, 1
        %v1186 = vrot.slane %v947, 1
        %v1187 = vrot.slane %v953, 1
        %v1188 = vrot.slane %v959, 1
        %v1189 = vrot.slane %v965, 1
        %v1190 = vrot.slane %v971, 1
        %v1191 = vrot.slane %v977, 1
        %v1192 = vrot.slane %v983, 1
        %v1193 = vrot.slane %v989, 1
        %v1194 = vrot.slane %v995, 1
        %v1195 = vrot.slane %v1001, 1
        %v1196 = vrot.slane %v1007, 1
        %v1197 = vrot.slane %v920, 1
        %v1198 = vrot.slane %v926, 1
        %v1199 = vrot.slane %v932, 1
        %v1200 = vrot.slane %v938, 1
        %v1201 = vrot.slane %v944, 1
        %v1202 = vrot.slane %v950, 1
        %v1203 = vrot.slane %v956, 1
        %v1204 = vrot.slane %v962, 1
        %v1205 = vrot.slane %v968, 1
        %v1206 = vrot.slane %v974, 1
        %v1207 = vrot.slane %v980, 1
        %v1208 = vrot.slane %v986, 1
        %v1209 = vrot.slane %v992, 1
        %v1210 = vrot.slane %v998, 1
        %v1211 = vrot.slane %v1004, 1
        %v1212 = vrot.slane %v1010, 1
        %vm1213 = vcmp.lt.s32.totalorder %v1078, 7
        %v1214 = vsel %vm1213, %v1181, %v1197
        %v1215 = vsel %vm1213, %v1182, %v1198
        %v1216 = vsel %vm1213, %v1183, %v1199
        %v1217 = vsel %vm1213, %v1184, %v1200
        %v1218 = vsel %vm1213, %v1185, %v1201
        %v1219 = vsel %vm1213, %v1186, %v1202
        %v1220 = vsel %vm1213, %v1187, %v1203
        %v1221 = vsel %vm1213, %v1188, %v1204
        %v1222 = vsel %vm1213, %v1189, %v1205
        %v1223 = vsel %vm1213, %v1190, %v1206
        %v1224 = vsel %vm1213, %v1191, %v1207
        %v1225 = vsel %vm1213, %v1192, %v1208
        %v1226 = vsel %vm1213, %v1193, %v1209
        %v1227 = vsel %vm1213, %v1194, %v1210
        %v1228 = vsel %vm1213, %v1195, %v1211
        %v1229 = vsel %vm1213, %v1196, %v1212
        %v1230 = vsel %vm1213, %v1197, %v1181
        %v1231 = vsel %vm1213, %v1198, %v1182
        %v1232 = vsel %vm1213, %v1199, %v1183
        %v1233 = vsel %vm1213, %v1200, %v1184
        %v1234 = vsel %vm1213, %v1201, %v1185
        %v1235 = vsel %vm1213, %v1202, %v1186
        %v1236 = vsel %vm1213, %v1203, %v1187
        %v1237 = vsel %vm1213, %v1204, %v1188
        %v1238 = vsel %vm1213, %v1205, %v1189
        %v1239 = vsel %vm1213, %v1206, %v1190
        %v1240 = vsel %vm1213, %v1207, %v1191
        %v1241 = vsel %vm1213, %v1208, %v1192
        %v1242 = vsel %vm1213, %v1209, %v1193
        %v1243 = vsel %vm1213, %v1210, %v1194
        %v1244 = vsel %vm1213, %v1211, %v1195
        %v1245 = vsel %vm1213, %v1212, %v1196
        %v1246 = vsel %vm1179, 0.0, %v1214
        %v1247 = vsel %vm1180, 0.0, %v1230
        %v1248 = vsel %vm1179, 0.0, %v1215
        %v1249 = vsel %vm1180, 0.0, %v1231
        %v1250 = vsel %vm1179, 0.0, %v1216
        %v1251 = vsel %vm1180, 0.0, %v1232
        %v1252 = vsel %vm1179, 0.0, %v1217
        %v1253 = vsel %vm1180, 0.0, %v1233
        %v1254 = vsel %vm1179, 0.0, %v1218
        %v1255 = vsel %vm1180, 0.0, %v1234
        %v1256 = vsel %vm1179, 0.0, %v1219
        %v1257 = vsel %vm1180, 0.0, %v1235
        %v1258 = vsel %vm1179, 0.0, %v1220
        %v1259 = vsel %vm1180, 0.0, %v1236
        %v1260 = vsel %vm1179, 0.0, %v1221
        %v1261 = vsel %vm1180, 0.0, %v1237
        %v1262 = vsel %vm1179, 0.0, %v1222
        %v1263 = vsel %vm1180, 0.0, %v1238
        %v1264 = vsel %vm1179, 0.0, %v1223
        %v1265 = vsel %vm1180, 0.0, %v1239
        %v1266 = vsel %vm1179, 0.0, %v1224
        %v1267 = vsel %vm1180, 0.0, %v1240
        %v1268 = vsel %vm1179, 0.0, %v1225
        %v1269 = vsel %vm1180, 0.0, %v1241
        %v1270 = vsel %vm1179, 0.0, %v1226
        %v1271 = vsel %vm1180, 0.0, %v1242
        %v1272 = vsel %vm1179, 0.0, %v1227
        %v1273 = vsel %vm1180, 0.0, %v1243
        %v1274 = vsel %vm1179, 0.0, %v1228
        %v1275 = vsel %vm1180, 0.0, %v1244
        %v1276 = vsel %vm1179, 0.0, %v1229
        %v1277 = vsel %vm1180, 0.0, %v1245
        %1278 = vst [vmem:[#allocation2] sm:$0xff] 0.0
        %1279 = vst [vmem:[#allocation2 + $0x8] sm:$0xff] 0.0
        %1280 = vst [vmem:[#allocation2 + $0x10] sm:$0xff] 0.0
        %1281 = vst [vmem:[#allocation2 + $0x18] sm:$0xff] 0.0
        %1282 = vst [vmem:[#allocation2 + $0x20] sm:$0xff] 0.0
        %1283 = vst [vmem:[#allocation2 + $0x28] sm:$0xff] 0.0
        %s1284 = scalar_lea.vmem [#allocation2], 816
        %1285 = vst [vmem:[%s1284] sm:$0xff] 0.0
        %1286 = vst [vmem:[%s1284 + $0x8] sm:$0xff] 0.0
        %1287 = vst [vmem:[%s1284 + $0x10] sm:$0xff] 0.0
        %1288 = vst [vmem:[%s1284 + $0x18] sm:$0xff] 0.0
        %1289 = vst [vmem:[%s1284 + $0x20] sm:$0xff] 0.0
        %1290 = vst [vmem:[%s1284 + $0x28] sm:$0xff] 0.0
        %s1291 = scalar_lea.vmem [#allocation2], 48
        %1292 = vst [vmem:[%s1291] sm:$0xff] %v1147
        %1293 = vst [vmem:[%s1291 + $0x18] sm:$0xff] %v1148
        %1294 = vst [vmem:[%s1291 + $0x30] sm:$0xff] %v1149
        %1295 = vst [vmem:[%s1291 + $0x48] sm:$0xff] %v1150
        %1296 = vst [vmem:[%s1291 + $0x60] sm:$0xff] %v1151
        %1297 = vst [vmem:[%s1291 + $0x78] sm:$0xff] %v1152
        %1298 = vst [vmem:[%s1291 + $0x90] sm:$0xff] %v1153
        %1299 = vst [vmem:[%s1291 + $0xa8] sm:$0xff] %v1154
        %1300 = vst [vmem:[%s1291 + $0xc0] sm:$0xff] %v1155
        %1301 = vst [vmem:[%s1291 + $0xd8] sm:$0xff] %v1156
        %1302 = vst [vmem:[%s1291 + $0xf0] sm:$0xff] %v1157
        %1303 = vst [vmem:[%s1291 + $0x108] sm:$0xff] %v1158
        %1304 = vst [vmem:[%s1291 + $0x120] sm:$0xff] %v1159
        %1305 = vst [vmem:[%s1291 + $0x138] sm:$0xff] %v1160
        %1306 = vst [vmem:[%s1291 + $0x150] sm:$0xff] %v1161
        %1307 = vst [vmem:[%s1291 + $0x168] sm:$0xff] %v1162
        %1308 = vst [vmem:[%s1291 + $0x180] sm:$0xff] %v1163
        %1309 = vst [vmem:[%s1291 + $0x198] sm:$0xff] %v1164
        %1310 = vst [vmem:[%s1291 + $0x1b0] sm:$0xff] %v1165
        %1311 = vst [vmem:[%s1291 + $0x1c8] sm:$0xff] %v1166
        %1312 = vst [vmem:[%s1291 + $0x1e0] sm:$0xff] %v1167
        %1313 = vst [vmem:[%s1291 + $0x1f8] sm:$0xff] %v1168
        %1314 = vst [vmem:[%s1291 + $0x210] sm:$0xff] %v1169
        %1315 = vst [vmem:[%s1291 + $0x228] sm:$0xff] %v1170
        %1316 = vst [vmem:[%s1291 + $0x240] sm:$0xff] %v1171
        %1317 = vst [vmem:[%s1291 + $0x258] sm:$0xff] %v1172
        %1318 = vst [vmem:[%s1291 + $0x270] sm:$0xff] %v1173
        %1319 = vst [vmem:[%s1291 + $0x288] sm:$0xff] %v1174
        %1320 = vst [vmem:[%s1291 + $0x2a0] sm:$0xff] %v1175
        %1321 = vst [vmem:[%s1291 + $0x2b8] sm:$0xff] %v1176
        %1322 = vst [vmem:[%s1291 + $0x2d0] sm:$0xff] %v1177
        %1323 = vst [vmem:[%s1291 + $0x2e8] sm:$0xff] %v1178
        %1324 = vst [vmem:[%s1291 + $0x8] sm:$0xff] %v917
        %1325 = vst [vmem:[%s1291 + $0x20] sm:$0xff] %v920
        %1326 = vst [vmem:[%s1291 + $0x38] sm:$0xff] %v923
        %1327 = vst [vmem:[%s1291 + $0x50] sm:$0xff] %v926
        %1328 = vst [vmem:[%s1291 + $0x68] sm:$0xff] %v929
        %1329 = vst [vmem:[%s1291 + $0x80] sm:$0xff] %v932
        %1330 = vst [vmem:[%s1291 + $0x98] sm:$0xff] %v935
        %1331 = vst [vmem:[%s1291 + $0xb0] sm:$0xff] %v938
        %1332 = vst [vmem:[%s1291 + $0xc8] sm:$0xff] %v941
        %1333 = vst [vmem:[%s1291 + $0xe0] sm:$0xff] %v944
        %1334 = vst [vmem:[%s1291 + $0xf8] sm:$0xff] %v947
        %1335 = vst [vmem:[%s1291 + $0x110] sm:$0xff] %v950
        %1336 = vst [vmem:[%s1291 + $0x128] sm:$0xff] %v953
        %1337 = vst [vmem:[%s1291 + $0x140] sm:$0xff] %v956
        %1338 = vst [vmem:[%s1291 + $0x158] sm:$0xff] %v959
        %1339 = vst [vmem:[%s1291 + $0x170] sm:$0xff] %v962
        %1340 = vst [vmem:[%s1291 + $0x188] sm:$0xff] %v965
        %1341 = vst [vmem:[%s1291 + $0x1a0] sm:$0xff] %v968
        %1342 = vst [vmem:[%s1291 + $0x1b8] sm:$0xff] %v971
        %1343 = vst [vmem:[%s1291 + $0x1d0] sm:$0xff] %v974
        %1344 = vst [vmem:[%s1291 + $0x1e8] sm:$0xff] %v977
        %1345 = vst [vmem:[%s1291 + $0x200] sm:$0xff] %v980
        %1346 = vst [vmem:[%s1291 + $0x218] sm:$0xff] %v983
        %1347 = vst [vmem:[%s1291 + $0x230] sm:$0xff] %v986
        %1348 = vst [vmem:[%s1291 + $0x248] sm:$0xff] %v989
        %1349 = vst [vmem:[%s1291 + $0x260] sm:$0xff] %v992
        %1350 = vst [vmem:[%s1291 + $0x278] sm:$0xff] %v995
        %1351 = vst [vmem:[%s1291 + $0x290] sm:$0xff] %v998
        %1352 = vst [vmem:[%s1291 + $0x2a8] sm:$0xff] %v1001
        %1353 = vst [vmem:[%s1291 + $0x2c0] sm:$0xff] %v1004
        %1354 = vst [vmem:[%s1291 + $0x2d8] sm:$0xff] %v1007
        %1355 = vst [vmem:[%s1291 + $0x2f0] sm:$0xff] %v1010
        %1356 = vst [vmem:[%s1291 + $0x10] sm:$0xff] %v1246
        %1357 = vst [vmem:[%s1291 + $0x28] sm:$0xff] %v1247
        %1358 = vst [vmem:[%s1291 + $0x40] sm:$0xff] %v1248
        %1359 = vst [vmem:[%s1291 + $0x58] sm:$0xff] %v1249
        %1360 = vst [vmem:[%s1291 + $0x70] sm:$0xff] %v1250
        %1361 = vst [vmem:[%s1291 + $0x88] sm:$0xff] %v1251
        %1362 = vst [vmem:[%s1291 + $0xa0] sm:$0xff] %v1252
        %1363 = vst [vmem:[%s1291 + $0xb8] sm:$0xff] %v1253
        %1364 = vst [vmem:[%s1291 + $0xd0] sm:$0xff] %v1254
        %1365 = vst [vmem:[%s1291 + $0xe8] sm:$0xff] %v1255
        %1366 = vst [vmem:[%s1291 + $0x100] sm:$0xff] %v1256
        %1367 = vst [vmem:[%s1291 + $0x118] sm:$0xff] %v1257
        %1368 = vst [vmem:[%s1291 + $0x130] sm:$0xff] %v1258
        %1369 = vst [vmem:[%s1291 + $0x148] sm:$0xff] %v1259
        %1370 = vst [vmem:[%s1291 + $0x160] sm:$0xff] %v1260
        %1371 = vst [vmem:[%s1291 + $0x178] sm:$0xff] %v1261
        %1372 = vst [vmem:[%s1291 + $0x190] sm:$0xff] %v1262
        %1373 = vst [vmem:[%s1291 + $0x1a8] sm:$0xff] %v1263
        %1374 = vst [vmem:[%s1291 + $0x1c0] sm:$0xff] %v1264
        %1375 = vst [vmem:[%s1291 + $0x1d8] sm:$0xff] %v1265
        %1376 = vst [vmem:[%s1291 + $0x1f0] sm:$0xff] %v1266
        %1377 = vst [vmem:[%s1291 + $0x208] sm:$0xff] %v1267
        %1378 = vst [vmem:[%s1291 + $0x220] sm:$0xff] %v1268
        %1379 = vst [vmem:[%s1291 + $0x238] sm:$0xff] %v1269
        %1380 = vst [vmem:[%s1291 + $0x250] sm:$0xff] %v1270
        %1381 = vst [vmem:[%s1291 + $0x268] sm:$0xff] %v1271
        %1382 = vst [vmem:[%s1291 + $0x280] sm:$0xff] %v1272
        %1383 = vst [vmem:[%s1291 + $0x298] sm:$0xff] %v1273
        %1384 = vst [vmem:[%s1291 + $0x2b0] sm:$0xff] %v1274
        %1385 = vst [vmem:[%s1291 + $0x2c8] sm:$0xff] %v1275
        %1386 = vst [vmem:[%s1291 + $0x2e0] sm:$0xff] %v1276
        %1387 = vst [vmem:[%s1291 + $0x2f8] sm:$0xff] %v1277
        %v1388 = vld [vmem:[#allocation2] sm:$0xff]
        %v1389 = vld [vmem:[#allocation2 + $0x8] sm:$0xff]
        %v1390 = vld [vmem:[#allocation2 + $0x10] sm:$0xff]
        %v1391 = vld [vmem:[#allocation2 + $0x18] sm:$0xff]
        %v1392 = vld [vmem:[#allocation2 + $0x20] sm:$0xff]
        %v1393 = vld [vmem:[#allocation2 + $0x28] sm:$0xff]
        %v1394 = vld [vmem:[#allocation2 + $0x30] sm:$0xff]
        %v1395 = vld [vmem:[#allocation2 + $0x38] sm:$0xff]
        %v1396 = vld [vmem:[#allocation2 + $0x40] sm:$0xff]
        %v1397 = vld [vmem:[#allocation2 + $0x48] sm:$0xff]
        %v1398 = vld [vmem:[#allocation2 + $0x50] sm:$0xff]
        %v1399 = vld [vmem:[#allocation2 + $0x58] sm:$0xff]
        %v1400 = vld [vmem:[#allocation2 + $0x60] sm:$0xff]
        %v1401 = vld [vmem:[#allocation2 + $0x68] sm:$0xff]
        %v1402 = vld [vmem:[#allocation2 + $0x70] sm:$0xff]
        %v1403 = vld [vmem:[#allocation2 + $0x78] sm:$0xff]
        %v1404 = vld [vmem:[#allocation2 + $0x80] sm:$0xff]
        %v1405 = vld [vmem:[#allocation2 + $0x88] sm:$0xff]
        %v1406 = vld [vmem:[#allocation2 + $0x90] sm:$0xff]
        %v1407 = vld [vmem:[#allocation2 + $0x98] sm:$0xff]
        %v1408 = vld [vmem:[#allocation2 + $0xa0] sm:$0xff]
        %v1409 = vld [vmem:[#allocation2 + $0xa8] sm:$0xff]
        %v1410 = vld [vmem:[#allocation2 + $0xb0] sm:$0xff]
        %v1411 = vld [vmem:[#allocation2 + $0xb8] sm:$0xff]
        %v1412 = vld [vmem:[#allocation2 + $0xc0] sm:$0xff]
        %v1413 = vld [vmem:[#allocation2 + $0xc8] sm:$0xff]
        %v1414 = vld [vmem:[#allocation2 + $0xd0] sm:$0xff]
        %v1415 = vld [vmem:[#allocation2 + $0xd8] sm:$0xff]
        %v1416 = vld [vmem:[#allocation2 + $0xe0] sm:$0xff]
        %v1417 = vld [vmem:[#allocation2 + $0xe8] sm:$0xff]
        %v1418 = vld [vmem:[#allocation2 + $0xf0] sm:$0xff]
        %v1419 = vld [vmem:[#allocation2 + $0xf8] sm:$0xff]
        %v1420 = vld [vmem:[#allocation2 + $0x100] sm:$0xff]
        %v1421 = vld [vmem:[#allocation2 + $0x108] sm:$0xff]
        %v1422 = vld [vmem:[#allocation2 + $0x110] sm:$0xff]
        %v1423 = vld [vmem:[#allocation2 + $0x118] sm:$0xff]
        %v1424 = vld [vmem:[#allocation2 + $0x120] sm:$0xff]
        %v1425 = vld [vmem:[#allocation2 + $0x128] sm:$0xff]
        %v1426 = vld [vmem:[#allocation2 + $0x130] sm:$0xff]
        %v1427 = vld [vmem:[#allocation2 + $0x138] sm:$0xff]
        %v1428 = vld [vmem:[#allocation2 + $0x140] sm:$0xff]
        %v1429 = vld [vmem:[#allocation2 + $0x148] sm:$0xff]
        %v1430 = vld [vmem:[#allocation2 + $0x150] sm:$0xff]
        %v1431 = vld [vmem:[#allocation2 + $0x158] sm:$0xff]
        %v1432 = vld [vmem:[#allocation2 + $0x160] sm:$0xff]
        %v1433 = vld [vmem:[#allocation2 + $0x168] sm:$0xff]
        %v1434 = vld [vmem:[#allocation2 + $0x170] sm:$0xff]
        %v1435 = vld [vmem:[#allocation2 + $0x178] sm:$0xff]
        %v1436 = vld [vmem:[#allocation2 + $0x180] sm:$0xff]
        %v1437 = vld [vmem:[#allocation2 + $0x188] sm:$0xff]
        %v1438 = vld [vmem:[#allocation2 + $0x190] sm:$0xff]
        %v1439 = vld [vmem:[#allocation2 + $0x198] sm:$0xff]
        %v1440 = vld [vmem:[#allocation2 + $0x1a0] sm:$0xff]
        %v1441 = vld [vmem:[#allocation2 + $0x1a8] sm:$0xff]
        %v1442 = vld [vmem:[#allocation2 + $0x1b0] sm:$0xff]
        %v1443 = vld [vmem:[#allocation2 + $0x1b8] sm:$0xff]
        %v1444 = vld [vmem:[#allocation2 + $0x1c0] sm:$0xff]
        %v1445 = vld [vmem:[#allocation2 + $0x1c8] sm:$0xff]
        %v1446 = vld [vmem:[#allocation2 + $0x1d0] sm:$0xff]
        %v1447 = vld [vmem:[#allocation2 + $0x1d8] sm:$0xff]
        %v1448 = vld [vmem:[#allocation2 + $0x1e0] sm:$0xff]
        %v1449 = vld [vmem:[#allocation2 + $0x1e8] sm:$0xff]
        %v1450 = vld [vmem:[#allocation2 + $0x1f0] sm:$0xff]
        %v1451 = vld [vmem:[#allocation2 + $0x1f8] sm:$0xff]
        %v1452 = vld [vmem:[#allocation2 + $0x200] sm:$0xff]
        %v1453 = vld [vmem:[#allocation2 + $0x208] sm:$0xff]
        %v1454 = vld [vmem:[#allocation2 + $0x210] sm:$0xff]
        %v1455 = vld [vmem:[#allocation2 + $0x218] sm:$0xff]
        %v1456 = vld [vmem:[#allocation2 + $0x220] sm:$0xff]
        %v1457 = vld [vmem:[#allocation2 + $0x228] sm:$0xff]
        %v1458 = vld [vmem:[#allocation2 + $0x230] sm:$0xff]
        %v1459 = vld [vmem:[#allocation2 + $0x238] sm:$0xff]
        %v1460 = vld [vmem:[#allocation2 + $0x240] sm:$0xff]
        %v1461 = vld [vmem:[#allocation2 + $0x248] sm:$0xff]
        %v1462 = vld [vmem:[#allocation2 + $0x250] sm:$0xff]
        %v1463 = vld [vmem:[#allocation2 + $0x258] sm:$0xff]
        %v1464 = vld [vmem:[#allocation2 + $0x260] sm:$0xff]
        %v1465 = vld [vmem:[#allocation2 + $0x268] sm:$0xff]
        %v1466 = vld [vmem:[#allocation2 + $0x270] sm:$0xff]
        %v1467 = vld [vmem:[#allocation2 + $0x278] sm:$0xff]
        %v1468 = vld [vmem:[#allocation2 + $0x280] sm:$0xff]
        %v1469 = vld [vmem:[#allocation2 + $0x288] sm:$0xff]
        %v1470 = vld [vmem:[#allocation2 + $0x290] sm:$0xff]
        %v1471 = vld [vmem:[#allocation2 + $0x298] sm:$0xff]
        %v1472 = vld [vmem:[#allocation2 + $0x2a0] sm:$0xff]
        %v1473 = vld [vmem:[#allocation2 + $0x2a8] sm:$0xff]
        %v1474 = vld [vmem:[#allocation2 + $0x2b0] sm:$0xff]
        %v1475 = vld [vmem:[#allocation2 + $0x2b8] sm:$0xff]
        %v1476 = vld [vmem:[#allocation2 + $0x2c0] sm:$0xff]
        %v1477 = vld [vmem:[#allocation2 + $0x2c8] sm:$0xff]
        %v1478 = vld [vmem:[#allocation2 + $0x2d0] sm:$0xff]
        %v1479 = vld [vmem:[#allocation2 + $0x2d8] sm:$0xff]
        %v1480 = vld [vmem:[#allocation2 + $0x2e0] sm:$0xff]
        %v1481 = vld [vmem:[#allocation2 + $0x2e8] sm:$0xff]
        %v1482 = vld [vmem:[#allocation2 + $0x2f0] sm:$0xff]
        %v1483 = vld [vmem:[#allocation2 + $0x2f8] sm:$0xff]
        %v1484 = vld [vmem:[%s3] sm:$0xff]
        %v1485 = vld [vmem:[%s3 + $0x8] sm:$0xff]
        %v1486 = vld [vmem:[%s3 + $0x10] sm:$0xff]
        %v1487 = vld [vmem:[%s3 + $0x18] sm:$0xff]
        %v1488 = vld [vmem:[%s3 + $0x20] sm:$0xff]
        %v1489 = vld [vmem:[%s3 + $0x28] sm:$0xff]
        %v1490 = vld [vmem:[%s3 + $0x30] sm:$0xff]
        %v1491 = vld [vmem:[%s3 + $0x38] sm:$0xff]
        %v1492 = vld [vmem:[%s3 + $0x40] sm:$0xff]
        %v1493 = vld [vmem:[%s3 + $0x48] sm:$0xff]
        %v1494 = vld [vmem:[%s3 + $0x50] sm:$0xff]
        %v1495 = vld [vmem:[%s3 + $0x58] sm:$0xff]
        %v1496 = vld [vmem:[%s3 + $0x60] sm:$0xff]
        %v1497 = vld [vmem:[%s3 + $0x68] sm:$0xff]
        %v1498 = vld [vmem:[%s3 + $0x70] sm:$0xff]
        %v1499 = vld [vmem:[%s3 + $0x78] sm:$0xff]
        %v1500 = vld [vmem:[%s3 + $0x80] sm:$0xff]
        %v1501 = vld [vmem:[%s3 + $0x88] sm:$0xff]
        %v1502 = vld [vmem:[%s3 + $0x90] sm:$0xff]
        %v1503 = vld [vmem:[%s3 + $0x98] sm:$0xff]
        %v1504 = vld [vmem:[%s3 + $0xa0] sm:$0xff]
        %v1505 = vld [vmem:[%s3 + $0xa8] sm:$0xff]
        %v1506 = vld [vmem:[%s3 + $0xb0] sm:$0xff]
        %v1507 = vld [vmem:[%s3 + $0xb8] sm:$0xff]
        %v1508 = vld [vmem:[%s3 + $0xc0] sm:$0xff]
        %v1509 = vld [vmem:[%s3 + $0xc8] sm:$0xff]
        %v1510 = vld [vmem:[%s3 + $0xd0] sm:$0xff]
        %v1511 = vld [vmem:[%s3 + $0xd8] sm:$0xff]
        %v1512 = vld [vmem:[%s3 + $0xe0] sm:$0xff]
        %v1513 = vld [vmem:[%s3 + $0xe8] sm:$0xff]
        %v1514 = vld [vmem:[%s3 + $0xf0] sm:$0xff]
        %v1515 = vld [vmem:[%s3 + $0xf8] sm:$0xff]
        %v1516 = vld [vmem:[%s3 + $0x100] sm:$0xff]
        %v1517 = vld [vmem:[%s3 + $0x108] sm:$0xff]
        %v1518 = vld [vmem:[%s3 + $0x110] sm:$0xff]
        %v1519 = vld [vmem:[%s3 + $0x118] sm:$0xff]
        %v1520 = vld [vmem:[%s3 + $0x120] sm:$0xff]
        %v1521 = vld [vmem:[%s3 + $0x128] sm:$0xff]
        %v1522 = vld [vmem:[%s3 + $0x130] sm:$0xff]
        %v1523 = vld [vmem:[%s3 + $0x138] sm:$0xff]
        %v1524 = vld [vmem:[%s3 + $0x140] sm:$0xff]
        %v1525 = vld [vmem:[%s3 + $0x148] sm:$0xff]
        %v1526 = vld [vmem:[%s3 + $0x150] sm:$0xff]
        %v1527 = vld [vmem:[%s3 + $0x158] sm:$0xff]
        %v1528 = vld [vmem:[%s3 + $0x160] sm:$0xff]
        %v1529 = vld [vmem:[%s3 + $0x168] sm:$0xff]
        %v1530 = vld [vmem:[%s3 + $0x170] sm:$0xff]
        %v1531 = vld [vmem:[%s3 + $0x178] sm:$0xff]
        %v1532 = vld [vmem:[%s1291] sm:$0xff]
        %v1533 = vld [vmem:[%s1291 + $0x8] sm:$0xff]
        %v1534 = vld [vmem:[%s1291 + $0x10] sm:$0xff]
        %v1535 = vld [vmem:[%s1291 + $0x18] sm:$0xff]
        %v1536 = vld [vmem:[%s1291 + $0x20] sm:$0xff]
        %v1537 = vld [vmem:[%s1291 + $0x28] sm:$0xff]
        %v1538 = vld [vmem:[%s1291 + $0x30] sm:$0xff]
        %v1539 = vld [vmem:[%s1291 + $0x38] sm:$0xff]
        %v1540 = vld [vmem:[%s1291 + $0x40] sm:$0xff]
        %v1541 = vld [vmem:[%s1291 + $0x48] sm:$0xff]
        %v1542 = vld [vmem:[%s1291 + $0x50] sm:$0xff]
        %v1543 = vld [vmem:[%s1291 + $0x58] sm:$0xff]
        %v1544 = vld [vmem:[%s1291 + $0x60] sm:$0xff]
        %v1545 = vld [vmem:[%s1291 + $0x68] sm:$0xff]
        %v1546 = vld [vmem:[%s1291 + $0x70] sm:$0xff]
        %v1547 = vld [vmem:[%s1291 + $0x78] sm:$0xff]
        %v1548 = vld [vmem:[%s1291 + $0x80] sm:$0xff]
        %v1549 = vld [vmem:[%s1291 + $0x88] sm:$0xff]
        %v1550 = vld [vmem:[%s1291 + $0x90] sm:$0xff]
        %v1551 = vld [vmem:[%s1291 + $0x98] sm:$0xff]
        %v1552 = vld [vmem:[%s1291 + $0xa0] sm:$0xff]
        %v1553 = vld [vmem:[%s1291 + $0xa8] sm:$0xff]
        %v1554 = vld [vmem:[%s1291 + $0xb0] sm:$0xff]
        %v1555 = vld [vmem:[%s1291 + $0xb8] sm:$0xff]
        %v1556 = vld [vmem:[%s1291 + $0xc0] sm:$0xff]
        %v1557 = vld [vmem:[%s1291 + $0xc8] sm:$0xff]
        %v1558 = vld [vmem:[%s1291 + $0xd0] sm:$0xff]
        %v1559 = vld [vmem:[%s1291 + $0xd8] sm:$0xff]
        %v1560 = vld [vmem:[%s1291 + $0xe0] sm:$0xff]
        %v1561 = vld [vmem:[%s1291 + $0xe8] sm:$0xff]
        %v1562 = vld [vmem:[%s1291 + $0xf0] sm:$0xff]
        %v1563 = vld [vmem:[%s1291 + $0xf8] sm:$0xff]
        %v1564 = vld [vmem:[%s1291 + $0x100] sm:$0xff]
        %v1565 = vld [vmem:[%s1291 + $0x108] sm:$0xff]
        %v1566 = vld [vmem:[%s1291 + $0x110] sm:$0xff]
        %v1567 = vld [vmem:[%s1291 + $0x118] sm:$0xff]
        %v1568 = vld [vmem:[%s1291 + $0x120] sm:$0xff]
        %v1569 = vld [vmem:[%s1291 + $0x128] sm:$0xff]
        %v1570 = vld [vmem:[%s1291 + $0x130] sm:$0xff]
        %v1571 = vld [vmem:[%s1291 + $0x138] sm:$0xff]
        %v1572 = vld [vmem:[%s1291 + $0x140] sm:$0xff]
        %v1573 = vld [vmem:[%s1291 + $0x148] sm:$0xff]
        %v1574 = vld [vmem:[%s1291 + $0x150] sm:$0xff]
        %v1575 = vld [vmem:[%s1291 + $0x158] sm:$0xff]
        %v1576 = vld [vmem:[%s1291 + $0x160] sm:$0xff]
        %v1577 = vld [vmem:[%s1291 + $0x168] sm:$0xff]
        %v1578 = vld [vmem:[%s1291 + $0x170] sm:$0xff]
        %v1579 = vld [vmem:[%s1291 + $0x178] sm:$0xff]
        %v1580 = vld [vmem:[%s1291 + $0x180] sm:$0xff]
        %v1581 = vld [vmem:[%s1291 + $0x188] sm:$0xff]
        %v1582 = vld [vmem:[%s1291 + $0x190] sm:$0xff]
        %v1583 = vld [vmem:[%s1291 + $0x198] sm:$0xff]
        %v1584 = vld [vmem:[%s1291 + $0x1a0] sm:$0xff]
        %v1585 = vld [vmem:[%s1291 + $0x1a8] sm:$0xff]
        %v1586 = vld [vmem:[%s1291 + $0x1b0] sm:$0xff]
        %v1587 = vld [vmem:[%s1291 + $0x1b8] sm:$0xff]
        %v1588 = vld [vmem:[%s1291 + $0x1c0] sm:$0xff]
        %v1589 = vld [vmem:[%s1291 + $0x1c8] sm:$0xff]
        %v1590 = vld [vmem:[%s1291 + $0x1d0] sm:$0xff]
        %v1591 = vld [vmem:[%s1291 + $0x1d8] sm:$0xff]
        %v1592 = vld [vmem:[%s1291 + $0x1e0] sm:$0xff]
        %v1593 = vld [vmem:[%s1291 + $0x1e8] sm:$0xff]
        %v1594 = vld [vmem:[%s1291 + $0x1f0] sm:$0xff]
        %v1595 = vld [vmem:[%s1291 + $0x1f8] sm:$0xff]
        %v1596 = vld [vmem:[%s1291 + $0x200] sm:$0xff]
        %v1597 = vld [vmem:[%s1291 + $0x208] sm:$0xff]
        %v1598 = vld [vmem:[%s1291 + $0x210] sm:$0xff]
        %v1599 = vld [vmem:[%s1291 + $0x218] sm:$0xff]
        %v1600 = vld [vmem:[%s1291 + $0x220] sm:$0xff]
        %v1601 = vld [vmem:[%s1291 + $0x228] sm:$0xff]
        %v1602 = vld [vmem:[%s1291 + $0x230] sm:$0xff]
        %v1603 = vld [vmem:[%s1291 + $0x238] sm:$0xff]
        %v1604 = vld [vmem:[%s1291 + $0x240] sm:$0xff]
        %v1605 = vld [vmem:[%s1291 + $0x248] sm:$0xff]
        %v1606 = vld [vmem:[%s1291 + $0x250] sm:$0xff]
        %v1607 = vld [vmem:[%s1291 + $0x258] sm:$0xff]
        %v1608 = vld [vmem:[%s1291 + $0x260] sm:$0xff]
        %v1609 = vld [vmem:[%s1291 + $0x268] sm:$0xff]
        %v1610 = vld [vmem:[%s1291 + $0x270] sm:$0xff]
        %v1611 = vld [vmem:[%s1291 + $0x278] sm:$0xff]
        %v1612 = vld [vmem:[%s1291 + $0x280] sm:$0xff]
        %v1613 = vld [vmem:[%s1291 + $0x288] sm:$0xff]
        %v1614 = vld [vmem:[%s1291 + $0x290] sm:$0xff]
        %v1615 = vld [vmem:[%s1291 + $0x298] sm:$0xff]
        %v1616 = vld [vmem:[%s1291 + $0x2a0] sm:$0xff]
        %v1617 = vld [vmem:[%s1291 + $0x2a8] sm:$0xff]
        %v1618 = vld [vmem:[%s1291 + $0x2b0] sm:$0xff]
        %v1619 = vld [vmem:[%s1291 + $0x2b8] sm:$0xff]
        %v1620 = vld [vmem:[%s1291 + $0x2c0] sm:$0xff]
        %v1621 = vld [vmem:[%s1291 + $0x2c8] sm:$0xff]
        %v1622 = vld [vmem:[%s1291 + $0x2d0] sm:$0xff]
        %v1623 = vld [vmem:[%s1291 + $0x2d8] sm:$0xff]
        %v1624 = vld [vmem:[%s1291 + $0x2e0] sm:$0xff]
        %v1625 = vld [vmem:[%s1291 + $0x2e8] sm:$0xff]
        %v1626 = vld [vmem:[%s1291 + $0x2f0] sm:$0xff]
        %v1627 = vld [vmem:[%s1291 + $0x2f8] sm:$0xff]
        %s1628 = scalar_lea.vmem %s3, 384
        %v1629 = vld [vmem:[%s1628] sm:$0xff]
        %v1630 = vld [vmem:[%s1628 + $0x8] sm:$0xff]
        %v1631 = vld [vmem:[%s1628 + $0x10] sm:$0xff]
        %v1632 = vld [vmem:[%s1628 + $0x18] sm:$0xff]
        %v1633 = vld [vmem:[%s1628 + $0x20] sm:$0xff]
        %v1634 = vld [vmem:[%s1628 + $0x28] sm:$0xff]
        %v1635 = vld [vmem:[%s1628 + $0x30] sm:$0xff]
        %v1636 = vld [vmem:[%s1628 + $0x38] sm:$0xff]
        %v1637 = vld [vmem:[%s1628 + $0x40] sm:$0xff]
        %v1638 = vld [vmem:[%s1628 + $0x48] sm:$0xff]
        %v1639 = vld [vmem:[%s1628 + $0x50] sm:$0xff]
        %v1640 = vld [vmem:[%s1628 + $0x58] sm:$0xff]
        %v1641 = vld [vmem:[%s1628 + $0x60] sm:$0xff]
        %v1642 = vld [vmem:[%s1628 + $0x68] sm:$0xff]
        %v1643 = vld [vmem:[%s1628 + $0x70] sm:$0xff]
        %v1644 = vld [vmem:[%s1628 + $0x78] sm:$0xff]
        %v1645 = vld [vmem:[%s1628 + $0x80] sm:$0xff]
        %v1646 = vld [vmem:[%s1628 + $0x88] sm:$0xff]
        %v1647 = vld [vmem:[%s1628 + $0x90] sm:$0xff]
        %v1648 = vld [vmem:[%s1628 + $0x98] sm:$0xff]
        %v1649 = vld [vmem:[%s1628 + $0xa0] sm:$0xff]
        %v1650 = vld [vmem:[%s1628 + $0xa8] sm:$0xff]
        %v1651 = vld [vmem:[%s1628 + $0xb0] sm:$0xff]
        %v1652 = vld [vmem:[%s1628 + $0xb8] sm:$0xff]
        %v1653 = vld [vmem:[%s1628 + $0xc0] sm:$0xff]
        %v1654 = vld [vmem:[%s1628 + $0xc8] sm:$0xff]
        %v1655 = vld [vmem:[%s1628 + $0xd0] sm:$0xff]
        %v1656 = vld [vmem:[%s1628 + $0xd8] sm:$0xff]
        %v1657 = vld [vmem:[%s1628 + $0xe0] sm:$0xff]
        %v1658 = vld [vmem:[%s1628 + $0xe8] sm:$0xff]
        %v1659 = vld [vmem:[%s1628 + $0xf0] sm:$0xff]
        %v1660 = vld [vmem:[%s1628 + $0xf8] sm:$0xff]
        %v1661 = vld [vmem:[%s1628 + $0x100] sm:$0xff]
        %v1662 = vld [vmem:[%s1628 + $0x108] sm:$0xff]
        %v1663 = vld [vmem:[%s1628 + $0x110] sm:$0xff]
        %v1664 = vld [vmem:[%s1628 + $0x118] sm:$0xff]
        %v1665 = vld [vmem:[%s1628 + $0x120] sm:$0xff]
        %v1666 = vld [vmem:[%s1628 + $0x128] sm:$0xff]
        %v1667 = vld [vmem:[%s1628 + $0x130] sm:$0xff]
        %v1668 = vld [vmem:[%s1628 + $0x138] sm:$0xff]
        %v1669 = vld [vmem:[%s1628 + $0x140] sm:$0xff]
        %v1670 = vld [vmem:[%s1628 + $0x148] sm:$0xff]
        %v1671 = vld [vmem:[%s1628 + $0x150] sm:$0xff]
        %v1672 = vld [vmem:[%s1628 + $0x158] sm:$0xff]
        %v1673 = vld [vmem:[%s1628 + $0x160] sm:$0xff]
        %v1674 = vld [vmem:[%s1628 + $0x168] sm:$0xff]
        %v1675 = vld [vmem:[%s1628 + $0x170] sm:$0xff]
        %v1676 = vld [vmem:[%s1628 + $0x178] sm:$0xff]
        %1677 = vmatprep.subr.mxu0 0.0
        %1678 = vmatpush1.msra.mxu0 %v1644
        %1679 = vmatprep.subr.mxu0 0.0
        %1680 = vmatpush1.msra.mxu0 %v1643
        %1681 = vmatprep.subr.mxu0 0.0
        %1682 = vmatpush1.msra.mxu0 %v1642
        %1683 = vmatprep.subr.mxu0 0.0
        %1684 = vmatpush1.msra.mxu0 %v1641
        %1685 = vmatprep.subr.mxu0 0.0
        %1686 = vmatpush1.msra.mxu0 %v1640
        %1687 = vmatprep.subr.mxu0 0.0
        %1688 = vmatpush1.msra.mxu0 %v1639
        %1689 = vmatprep.subr.mxu0 0.0
        %1690 = vmatpush1.msra.mxu0 %v1638
        %1691 = vmatprep.subr.mxu0 0.0
        %1692 = vmatpush1.msra.mxu0 %v1637
        %1693 = vmatprep.subr.mxu0 0.0
        %1694 = vmatpush1.msra.mxu0 %v1636
        %1695 = vmatprep.subr.mxu0 0.0
        %1696 = vmatpush1.msra.mxu0 %v1635
        %1697 = vmatprep.subr.mxu0 0.0
        %1698 = vmatpush1.msra.mxu0 %v1634
        %1699 = vmatprep.subr.mxu0 0.0
        %1700 = vmatpush1.msra.mxu0 %v1633
        %1701 = vmatprep.subr.mxu0 0.0
        %1702 = vmatpush1.msra.mxu0 %v1632
        %1703 = vmatprep.subr.mxu0 0.0
        %1704 = vmatpush1.msra.mxu0 %v1631
        %1705 = vmatprep.subr.mxu0 0.0
        %1706 = vmatpush1.msra.mxu0 %v1630
        %1707 = vmatprep.subr.mxu0 0.0
        %1708 = vmatpush1.msra.mxu0 %v1629
        %1709 = vmatprep.subr.mxu0 0.0
        %1710 = vmatpush2.msra.mxu0 %v1660
        %1711 = vmatprep.subr.mxu0 0.0
        %1712 = vmatpush2.msra.mxu0 %v1659
        %1713 = vmatprep.subr.mxu0 0.0
        %1714 = vmatpush2.msra.mxu0 %v1658
        %1715 = vmatprep.subr.mxu0 0.0
        %1716 = vmatpush2.msra.mxu0 %v1657
        %1717 = vmatprep.subr.mxu0 0.0
        %1718 = vmatpush2.msra.mxu0 %v1656
        %1719 = vmatprep.subr.mxu0 0.0
        %1720 = vmatpush2.msra.mxu0 %v1655
        %1721 = vmatprep.subr.mxu0 0.0
        %1722 = vmatpush2.msra.mxu0 %v1654
        %1723 = vmatprep.subr.mxu0 0.0
        %1724 = vmatpush2.msra.mxu0 %v1653
        %1725 = vmatprep.subr.mxu0 0.0
        %1726 = vmatpush2.msra.mxu0 %v1652
        %1727 = vmatprep.subr.mxu0 0.0
        %1728 = vmatpush2.msra.mxu0 %v1651
        %1729 = vmatprep.subr.mxu0 0.0
        %1730 = vmatpush2.msra.mxu0 %v1650
        %1731 = vmatprep.subr.mxu0 0.0
        %1732 = vmatpush2.msra.mxu0 %v1649
        %1733 = vmatprep.subr.mxu0 0.0
        %1734 = vmatpush2.msra.mxu0 %v1648
        %1735 = vmatprep.subr.mxu0 0.0
        %1736 = vmatpush2.msra.mxu0 %v1647
        %1737 = vmatprep.subr.mxu0 0.0
        %1738 = vmatpush2.msra.mxu0 %v1646
        %1739 = vmatprep.subr.mxu0 0.0
        %1740 = vmatpush2.msra.mxu0 %v1645
        %1741 = vmatprep.mubr.f32.mxu0 %v1533
        %1742 = vmatmul.mubr.f32.gmra.mxu0 %v1532
        %v1743 = vpop.f32.mrf.mxu0
        %v1744 = vadd.f32 0.0, %v1743
        %v1745 = vpop.f32.mrf.mxu0
        %1746 = vmatprep.mubr.f32.mxu0 %v1536
        %1747 = vmatmul.mubr.f32.gmra.mxu0 %v1535
        %v1748 = vpop.f32.mrf.mxu0
        %v1749 = vadd.f32 0.0, %v1748
        %v1750 = vpop.f32.mrf.mxu0
        %1751 = vmatprep.mubr.f32.mxu0 %v1539
        %1752 = vmatmul.mubr.f32.gmra.mxu0 %v1538
        %v1753 = vpop.f32.mrf.mxu0
        %v1754 = vadd.f32 0.0, %v1753
        %v1755 = vpop.f32.mrf.mxu0
        %1756 = vmatprep.mubr.f32.mxu0 %v1542
        %1757 = vmatmul.mubr.f32.gmra.mxu0 %v1541
        %v1758 = vpop.f32.mrf.mxu0
        %v1759 = vadd.f32 0.0, %v1758
        %v1760 = vpop.f32.mrf.mxu0
        %1761 = vmatprep.mubr.f32.mxu0 %v1545
        %1762 = vmatmul.mubr.f32.gmra.mxu0 %v1544
        %v1763 = vpop.f32.mrf.mxu0
        %v1764 = vadd.f32 0.0, %v1763
        %v1765 = vpop.f32.mrf.mxu0
        %1766 = vmatprep.mubr.f32.mxu0 %v1548
        %1767 = vmatmul.mubr.f32.gmra.mxu0 %v1547
        %v1768 = vpop.f32.mrf.mxu0
        %v1769 = vadd.f32 0.0, %v1768
        %v1770 = vpop.f32.mrf.mxu0
        %1771 = vmatprep.mubr.f32.mxu0 %v1551
        %1772 = vmatmul.mubr.f32.gmra.mxu0 %v1550
        %v1773 = vpop.f32.mrf.mxu0
        %v1774 = vadd.f32 0.0, %v1773
        %v1775 = vpop.f32.mrf.mxu0
        %1776 = vmatprep.mubr.f32.mxu0 %v1554
        %1777 = vmatmul.mubr.f32.gmra.mxu0 %v1553
        %v1778 = vpop.f32.mrf.mxu0
        %v1779 = vadd.f32 0.0, %v1778
        %v1780 = vpop.f32.mrf.mxu0
        %1781 = vmatprep.mubr.f32.mxu0 %v1557
        %1782 = vmatmul.mubr.f32.gmra.mxu0 %v1556
        %v1783 = vpop.f32.mrf.mxu0
        %v1784 = vadd.f32 0.0, %v1783
        %v1785 = vpop.f32.mrf.mxu0
        %1786 = vmatprep.mubr.f32.mxu0 %v1560
        %1787 = vmatmul.mubr.f32.gmra.mxu0 %v1559
        %v1788 = vpop.f32.mrf.mxu0
        %v1789 = vadd.f32 0.0, %v1788
        %v1790 = vpop.f32.mrf.mxu0
        %1791 = vmatprep.mubr.f32.mxu0 %v1563
        %1792 = vmatmul.mubr.f32.gmra.mxu0 %v1562
        %v1793 = vpop.f32.mrf.mxu0
        %v1794 = vadd.f32 0.0, %v1793
        %v1795 = vpop.f32.mrf.mxu0
        %1796 = vmatprep.mubr.f32.mxu0 %v1566
        %1797 = vmatmul.mubr.f32.gmra.mxu0 %v1565
        %v1798 = vpop.f32.mrf.mxu0
        %v1799 = vadd.f32 0.0, %v1798
        %v1800 = vpop.f32.mrf.mxu0
        %1801 = vmatprep.mubr.f32.mxu0 %v1569
        %1802 = vmatmul.mubr.f32.gmra.mxu0 %v1568
        %v1803 = vpop.f32.mrf.mxu0
        %v1804 = vadd.f32 0.0, %v1803
        %v1805 = vpop.f32.mrf.mxu0
        %1806 = vmatprep.mubr.f32.mxu0 %v1572
        %1807 = vmatmul.mubr.f32.gmra.mxu0 %v1571
        %v1808 = vpop.f32.mrf.mxu0
        %v1809 = vadd.f32 0.0, %v1808
        %v1810 = vpop.f32.mrf.mxu0
        %1811 = vmatprep.mubr.f32.mxu0 %v1575
        %1812 = vmatmul.mubr.f32.gmra.mxu0 %v1574
        %v1813 = vpop.f32.mrf.mxu0
        %v1814 = vadd.f32 0.0, %v1813
        %v1815 = vpop.f32.mrf.mxu0
        %1816 = vmatprep.mubr.f32.mxu0 %v1578
        %1817 = vmatmul.mubr.f32.gmra.mxu0 %v1577
        %v1818 = vpop.f32.mrf.mxu0
        %v1819 = vadd.f32 0.0, %v1818
        %v1820 = vpop.f32.mrf.mxu0
        %1821 = vmatprep.mubr.f32.mxu0 %v1581
        %1822 = vmatmul.mubr.f32.gmra.mxu0 %v1580
        %v1823 = vpop.f32.mrf.mxu0
        %v1824 = vadd.f32 0.0, %v1823
        %v1825 = vpop.f32.mrf.mxu0
        %1826 = vmatprep.mubr.f32.mxu0 %v1584
        %1827 = vmatmul.mubr.f32.gmra.mxu0 %v1583
        %v1828 = vpop.f32.mrf.mxu0
        %v1829 = vadd.f32 0.0, %v1828
        %v1830 = vpop.f32.mrf.mxu0
        %1831 = vmatprep.mubr.f32.mxu0 %v1587
        %1832 = vmatmul.mubr.f32.gmra.mxu0 %v1586
        %v1833 = vpop.f32.mrf.mxu0
        %v1834 = vadd.f32 0.0, %v1833
        %v1835 = vpop.f32.mrf.mxu0
        %1836 = vmatprep.mubr.f32.mxu0 %v1590
        %1837 = vmatmul.mubr.f32.gmra.mxu0 %v1589
        %v1838 = vpop.f32.mrf.mxu0
        %v1839 = vadd.f32 0.0, %v1838
        %v1840 = vpop.f32.mrf.mxu0
        %1841 = vmatprep.mubr.f32.mxu0 %v1593
        %1842 = vmatmul.mubr.f32.gmra.mxu0 %v1592
        %v1843 = vpop.f32.mrf.mxu0
        %v1844 = vadd.f32 0.0, %v1843
        %v1845 = vpop.f32.mrf.mxu0
        %1846 = vmatprep.mubr.f32.mxu0 %v1596
        %1847 = vmatmul.mubr.f32.gmra.mxu0 %v1595
        %v1848 = vpop.f32.mrf.mxu0
        %v1849 = vadd.f32 0.0, %v1848
        %v1850 = vpop.f32.mrf.mxu0
        %1851 = vmatprep.mubr.f32.mxu0 %v1599
        %1852 = vmatmul.mubr.f32.gmra.mxu0 %v1598
        %v1853 = vpop.f32.mrf.mxu0
        %v1854 = vadd.f32 0.0, %v1853
        %v1855 = vpop.f32.mrf.mxu0
        %1856 = vmatprep.mubr.f32.mxu0 %v1602
        %1857 = vmatmul.mubr.f32.gmra.mxu0 %v1601
        %v1858 = vpop.f32.mrf.mxu0
        %v1859 = vadd.f32 0.0, %v1858
        %v1860 = vpop.f32.mrf.mxu0
        %1861 = vmatprep.mubr.f32.mxu0 %v1605
        %1862 = vmatmul.mubr.f32.gmra.mxu0 %v1604
        %v1863 = vpop.f32.mrf.mxu0
        %v1864 = vadd.f32 0.0, %v1863
        %v1865 = vpop.f32.mrf.mxu0
        %1866 = vmatprep.mubr.f32.mxu0 %v1608
        %1867 = vmatmul.mubr.f32.gmra.mxu0 %v1607
        %v1868 = vpop.f32.mrf.mxu0
        %v1869 = vadd.f32 0.0, %v1868
        %v1870 = vpop.f32.mrf.mxu0
        %1871 = vmatprep.mubr.f32.mxu0 %v1611
        %1872 = vmatmul.mubr.f32.gmra.mxu0 %v1610
        %v1873 = vpop.f32.mrf.mxu0
        %v1874 = vadd.f32 0.0, %v1873
        %v1875 = vpop.f32.mrf.mxu0
        %1876 = vmatprep.mubr.f32.mxu0 %v1614
        %1877 = vmatmul.mubr.f32.gmra.mxu0 %v1613
        %v1878 = vpop.f32.mrf.mxu0
        %v1879 = vadd.f32 0.0, %v1878
        %v1880 = vpop.f32.mrf.mxu0
        %1881 = vmatprep.mubr.f32.mxu0 %v1617
        %1882 = vmatmul.mubr.f32.gmra.mxu0 %v1616
        %v1883 = vpop.f32.mrf.mxu0
        %v1884 = vadd.f32 0.0, %v1883
        %v1885 = vpop.f32.mrf.mxu0
        %1886 = vmatprep.mubr.f32.mxu0 %v1620
        %1887 = vmatmul.mubr.f32.gmra.mxu0 %v1619
        %v1888 = vpop.f32.mrf.mxu0
        %v1889 = vadd.f32 0.0, %v1888
        %v1890 = vpop.f32.mrf.mxu0
        %1891 = vmatprep.mubr.f32.mxu0 %v1623
        %1892 = vmatmul.mubr.f32.gmra.mxu0 %v1622
        %v1893 = vpop.f32.mrf.mxu0
        %v1894 = vadd.f32 0.0, %v1893
        %v1895 = vpop.f32.mrf.mxu0
        %1896 = vmatprep.mubr.f32.mxu0 %v1626
        %1897 = vmatmul.mubr.f32.gmra.mxu0 %v1625
        %v1898 = vpop.f32.mrf.mxu0
        %v1899 = vadd.f32 0.0, %v1898
        %v1900 = vpop.f32.mrf.mxu0
        %1901 = vdwg.mxu0
        %1902 = vmatprep.subr.mxu0 0.0
        %1903 = vmatpush1.msra.mxu0 %v1676
        %1904 = vmatprep.subr.mxu0 0.0
        %1905 = vmatpush1.msra.mxu0 %v1675
        %1906 = vmatprep.subr.mxu0 0.0
        %1907 = vmatpush1.msra.mxu0 %v1674
        %1908 = vmatprep.subr.mxu0 0.0
        %1909 = vmatpush1.msra.mxu0 %v1673
        %1910 = vmatprep.subr.mxu0 0.0
        %1911 = vmatpush1.msra.mxu0 %v1672
        %1912 = vmatprep.subr.mxu0 0.0
        %1913 = vmatpush1.msra.mxu0 %v1671
        %1914 = vmatprep.subr.mxu0 0.0
        %1915 = vmatpush1.msra.mxu0 %v1670
        %1916 = vmatprep.subr.mxu0 0.0
        %1917 = vmatpush1.msra.mxu0 %v1669
        %1918 = vmatprep.subr.mxu0 0.0
        %1919 = vmatpush1.msra.mxu0 %v1668
        %1920 = vmatprep.subr.mxu0 0.0
        %1921 = vmatpush1.msra.mxu0 %v1667
        %1922 = vmatprep.subr.mxu0 0.0
        %1923 = vmatpush1.msra.mxu0 %v1666
        %1924 = vmatprep.subr.mxu0 0.0
        %1925 = vmatpush1.msra.mxu0 %v1665
        %1926 = vmatprep.subr.mxu0 0.0
        %1927 = vmatpush1.msra.mxu0 %v1664
        %1928 = vmatprep.subr.mxu0 0.0
        %1929 = vmatpush1.msra.mxu0 %v1663
        %1930 = vmatprep.subr.mxu0 0.0
        %1931 = vmatpush1.msra.mxu0 %v1662
        %1932 = vmatprep.subr.mxu0 0.0
        %1933 = vmatpush1.msra.mxu0 %v1661
        %1934 = vmatprep.subr.mxu0 0.0
        %1935 = vmatpush2.msra.mxu0 0.0
        %1936 = vmatprep.subr.mxu0 0.0
        %1937 = vmatpush2.msra.mxu0 0.0
        %1938 = vmatprep.subr.mxu0 0.0
        %1939 = vmatpush2.msra.mxu0 0.0
        %1940 = vmatprep.subr.mxu0 0.0
        %1941 = vmatpush2.msra.mxu0 0.0
        %1942 = vmatprep.subr.mxu0 0.0
        %1943 = vmatpush2.msra.mxu0 0.0
        %1944 = vmatprep.subr.mxu0 0.0
        %1945 = vmatpush2.msra.mxu0 0.0
        %1946 = vmatprep.subr.mxu0 0.0
        %1947 = vmatpush2.msra.mxu0 0.0
        %1948 = vmatprep.subr.mxu0 0.0
        %1949 = vmatpush2.msra.mxu0 0.0
        %1950 = vmatprep.subr.mxu0 0.0
        %1951 = vmatpush2.msra.mxu0 0.0
        %1952 = vmatprep.subr.mxu0 0.0
        %1953 = vmatpush2.msra.mxu0 0.0
        %1954 = vmatprep.subr.mxu0 0.0
        %1955 = vmatpush2.msra.mxu0 0.0
        %1956 = vmatprep.subr.mxu0 0.0
        %1957 = vmatpush2.msra.mxu0 0.0
        %1958 = vmatprep.subr.mxu0 0.0
        %1959 = vmatpush2.msra.mxu0 0.0
        %1960 = vmatprep.subr.mxu0 0.0
        %1961 = vmatpush2.msra.mxu0 0.0
        %1962 = vmatprep.subr.mxu0 0.0
        %1963 = vmatpush2.msra.mxu0 0.0
        %1964 = vmatprep.subr.mxu0 0.0
        %1965 = vmatpush2.msra.mxu0 0.0
        %1966 = vmatprep.mubr.f32.mxu0 0.0
        %1967 = vmatmul.mubr.f32.gmra.mxu0 %v1534
        %v1968 = vpop.f32.mrf.mxu0
        %v1969 = vadd.f32 %v1744, %v1968
        %v1970 = vpop.f32.mrf.mxu0
        %1971 = vmatprep.mubr.f32.mxu0 0.0
        %1972 = vmatmul.mubr.f32.gmra.mxu0 %v1537
        %v1973 = vpop.f32.mrf.mxu0
        %v1974 = vadd.f32 %v1749, %v1973
        %v1975 = vpop.f32.mrf.mxu0
        %1976 = vmatprep.mubr.f32.mxu0 0.0
        %1977 = vmatmul.mubr.f32.gmra.mxu0 %v1540
        %v1978 = vpop.f32.mrf.mxu0
        %v1979 = vadd.f32 %v1754, %v1978
        %v1980 = vpop.f32.mrf.mxu0
        %1981 = vmatprep.mubr.f32.mxu0 0.0
        %1982 = vmatmul.mubr.f32.gmra.mxu0 %v1543
        %v1983 = vpop.f32.mrf.mxu0
        %v1984 = vadd.f32 %v1759, %v1983
        %v1985 = vpop.f32.mrf.mxu0
        %1986 = vmatprep.mubr.f32.mxu0 0.0
        %1987 = vmatmul.mubr.f32.gmra.mxu0 %v1546
        %v1988 = vpop.f32.mrf.mxu0
        %v1989 = vadd.f32 %v1764, %v1988
        %v1990 = vpop.f32.mrf.mxu0
        %1991 = vmatprep.mubr.f32.mxu0 0.0
        %1992 = vmatmul.mubr.f32.gmra.mxu0 %v1549
        %v1993 = vpop.f32.mrf.mxu0
        %v1994 = vadd.f32 %v1769, %v1993
        %v1995 = vpop.f32.mrf.mxu0
        %1996 = vmatprep.mubr.f32.mxu0 0.0
        %1997 = vmatmul.mubr.f32.gmra.mxu0 %v1552
        %v1998 = vpop.f32.mrf.mxu0
        %v1999 = vadd.f32 %v1774, %v1998
        %v2000 = vpop.f32.mrf.mxu0
        %2001 = vmatprep.mubr.f32.mxu0 0.0
        %2002 = vmatmul.mubr.f32.gmra.mxu0 %v1555
        %v2003 = vpop.f32.mrf.mxu0
        %v2004 = vadd.f32 %v1779, %v2003
        %v2005 = vpop.f32.mrf.mxu0
        %2006 = vmatprep.mubr.f32.mxu0 0.0
        %2007 = vmatmul.mubr.f32.gmra.mxu0 %v1558
        %v2008 = vpop.f32.mrf.mxu0
        %v2009 = vadd.f32 %v1784, %v2008
        %v2010 = vpop.f32.mrf.mxu0
        %2011 = vmatprep.mubr.f32.mxu0 0.0
        %2012 = vmatmul.mubr.f32.gmra.mxu0 %v1561
        %v2013 = vpop.f32.mrf.mxu0
        %v2014 = vadd.f32 %v1789, %v2013
        %v2015 = vpop.f32.mrf.mxu0
        %2016 = vmatprep.mubr.f32.mxu0 0.0
        %2017 = vmatmul.mubr.f32.gmra.mxu0 %v1564
        %v2018 = vpop.f32.mrf.mxu0
        %v2019 = vadd.f32 %v1794, %v2018
        %v2020 = vpop.f32.mrf.mxu0
        %2021 = vmatprep.mubr.f32.mxu0 0.0
        %2022 = vmatmul.mubr.f32.gmra.mxu0 %v1567
        %v2023 = vpop.f32.mrf.mxu0
        %v2024 = vadd.f32 %v1799, %v2023
        %v2025 = vpop.f32.mrf.mxu0
        %2026 = vmatprep.mubr.f32.mxu0 0.0
        %2027 = vmatmul.mubr.f32.gmra.mxu0 %v1570
        %v2028 = vpop.f32.mrf.mxu0
        %v2029 = vadd.f32 %v1804, %v2028
        %v2030 = vpop.f32.mrf.mxu0
        %2031 = vmatprep.mubr.f32.mxu0 0.0
        %2032 = vmatmul.mubr.f32.gmra.mxu0 %v1573
        %v2033 = vpop.f32.mrf.mxu0
        %v2034 = vadd.f32 %v1809, %v2033
        %v2035 = vpop.f32.mrf.mxu0
        %2036 = vmatprep.mubr.f32.mxu0 0.0
        %2037 = vmatmul.mubr.f32.gmra.mxu0 %v1576
        %v2038 = vpop.f32.mrf.mxu0
        %v2039 = vadd.f32 %v1814, %v2038
        %v2040 = vpop.f32.mrf.mxu0
        %2041 = vmatprep.mubr.f32.mxu0 0.0
        %2042 = vmatmul.mubr.f32.gmra.mxu0 %v1579
        %v2043 = vpop.f32.mrf.mxu0
        %v2044 = vadd.f32 %v1819, %v2043
        %v2045 = vpop.f32.mrf.mxu0
        %2046 = vmatprep.mubr.f32.mxu0 0.0
        %2047 = vmatmul.mubr.f32.gmra.mxu0 %v1582
        %v2048 = vpop.f32.mrf.mxu0
        %v2049 = vadd.f32 %v1824, %v2048
        %v2050 = vpop.f32.mrf.mxu0
        %2051 = vmatprep.mubr.f32.mxu0 0.0
        %2052 = vmatmul.mubr.f32.gmra.mxu0 %v1585
        %v2053 = vpop.f32.mrf.mxu0
        %v2054 = vadd.f32 %v1829, %v2053
        %v2055 = vpop.f32.mrf.mxu0
        %2056 = vmatprep.mubr.f32.mxu0 0.0
        %2057 = vmatmul.mubr.f32.gmra.mxu0 %v1588
        %v2058 = vpop.f32.mrf.mxu0
        %v2059 = vadd.f32 %v1834, %v2058
        %v2060 = vpop.f32.mrf.mxu0
        %2061 = vmatprep.mubr.f32.mxu0 0.0
        %2062 = vmatmul.mubr.f32.gmra.mxu0 %v1591
        %v2063 = vpop.f32.mrf.mxu0
        %v2064 = vadd.f32 %v1839, %v2063
        %v2065 = vpop.f32.mrf.mxu0
        %2066 = vmatprep.mubr.f32.mxu0 0.0
        %2067 = vmatmul.mubr.f32.gmra.mxu0 %v1594
        %v2068 = vpop.f32.mrf.mxu0
        %v2069 = vadd.f32 %v1844, %v2068
        %v2070 = vpop.f32.mrf.mxu0
        %2071 = vmatprep.mubr.f32.mxu0 0.0
        %2072 = vmatmul.mubr.f32.gmra.mxu0 %v1597
        %v2073 = vpop.f32.mrf.mxu0
        %v2074 = vadd.f32 %v1849, %v2073
        %v2075 = vpop.f32.mrf.mxu0
        %2076 = vmatprep.mubr.f32.mxu0 0.0
        %2077 = vmatmul.mubr.f32.gmra.mxu0 %v1600
        %v2078 = vpop.f32.mrf.mxu0
        %v2079 = vadd.f32 %v1854, %v2078
        %v2080 = vpop.f32.mrf.mxu0
        %2081 = vmatprep.mubr.f32.mxu0 0.0
        %2082 = vmatmul.mubr.f32.gmra.mxu0 %v1603
        %v2083 = vpop.f32.mrf.mxu0
        %v2084 = vadd.f32 %v1859, %v2083
        %v2085 = vpop.f32.mrf.mxu0
        %2086 = vmatprep.mubr.f32.mxu0 0.0
        %2087 = vmatmul.mubr.f32.gmra.mxu0 %v1606
        %v2088 = vpop.f32.mrf.mxu0
        %v2089 = vadd.f32 %v1864, %v2088
        %v2090 = vpop.f32.mrf.mxu0
        %2091 = vmatprep.mubr.f32.mxu0 0.0
        %2092 = vmatmul.mubr.f32.gmra.mxu0 %v1609
        %v2093 = vpop.f32.mrf.mxu0
        %v2094 = vadd.f32 %v1869, %v2093
        %v2095 = vpop.f32.mrf.mxu0
        %2096 = vmatprep.mubr.f32.mxu0 0.0
        %2097 = vmatmul.mubr.f32.gmra.mxu0 %v1612
        %v2098 = vpop.f32.mrf.mxu0
        %v2099 = vadd.f32 %v1874, %v2098
        %v2100 = vpop.f32.mrf.mxu0
        %2101 = vmatprep.mubr.f32.mxu0 0.0
        %2102 = vmatmul.mubr.f32.gmra.mxu0 %v1615
        %v2103 = vpop.f32.mrf.mxu0
        %v2104 = vadd.f32 %v1879, %v2103
        %v2105 = vpop.f32.mrf.mxu0
        %2106 = vmatprep.mubr.f32.mxu0 0.0
        %2107 = vmatmul.mubr.f32.gmra.mxu0 %v1618
        %v2108 = vpop.f32.mrf.mxu0
        %v2109 = vadd.f32 %v1884, %v2108
        %v2110 = vpop.f32.mrf.mxu0
        %2111 = vmatprep.mubr.f32.mxu0 0.0
        %2112 = vmatmul.mubr.f32.gmra.mxu0 %v1621
        %v2113 = vpop.f32.mrf.mxu0
        %v2114 = vadd.f32 %v1889, %v2113
        %v2115 = vpop.f32.mrf.mxu0
        %2116 = vmatprep.mubr.f32.mxu0 0.0
        %2117 = vmatmul.mubr.f32.gmra.mxu0 %v1624
        %v2118 = vpop.f32.mrf.mxu0
        %v2119 = vadd.f32 %v1894, %v2118
        %v2120 = vpop.f32.mrf.mxu0
        %2121 = vmatprep.mubr.f32.mxu0 0.0
        %2122 = vmatmul.mubr.f32.gmra.mxu0 %v1627
        %v2123 = vpop.f32.mrf.mxu0
        %v2124 = vadd.f32 %v1899, %v2123
        %v2125 = vpop.f32.mrf.mxu0
        %2126 = vdwg.mxu0
        %2127 = vmatprep.subr.mxu0 0.0
        %2128 = vmatpush1.msra.mxu0 %v1499
        %2129 = vmatprep.subr.mxu0 0.0
        %2130 = vmatpush1.msra.mxu0 %v1498
        %2131 = vmatprep.subr.mxu0 0.0
        %2132 = vmatpush1.msra.mxu0 %v1497
        %2133 = vmatprep.subr.mxu0 0.0
        %2134 = vmatpush1.msra.mxu0 %v1496
        %2135 = vmatprep.subr.mxu0 0.0
        %2136 = vmatpush1.msra.mxu0 %v1495
        %2137 = vmatprep.subr.mxu0 0.0
        %2138 = vmatpush1.msra.mxu0 %v1494
        %2139 = vmatprep.subr.mxu0 0.0
        %2140 = vmatpush1.msra.mxu0 %v1493
        %2141 = vmatprep.subr.mxu0 0.0
        %2142 = vmatpush1.msra.mxu0 %v1492
        %2143 = vmatprep.subr.mxu0 0.0
        %2144 = vmatpush1.msra.mxu0 %v1491
        %2145 = vmatprep.subr.mxu0 0.0
        %2146 = vmatpush1.msra.mxu0 %v1490
        %2147 = vmatprep.subr.mxu0 0.0
        %2148 = vmatpush1.msra.mxu0 %v1489
        %2149 = vmatprep.subr.mxu0 0.0
        %2150 = vmatpush1.msra.mxu0 %v1488
        %2151 = vmatprep.subr.mxu0 0.0
        %2152 = vmatpush1.msra.mxu0 %v1487
        %2153 = vmatprep.subr.mxu0 0.0
        %2154 = vmatpush1.msra.mxu0 %v1486
        %2155 = vmatprep.subr.mxu0 0.0
        %2156 = vmatpush1.msra.mxu0 %v1485
        %2157 = vmatprep.subr.mxu0 0.0
        %2158 = vmatpush1.msra.mxu0 %v1484
        %2159 = vmatprep.subr.mxu0 0.0
        %2160 = vmatpush2.msra.mxu0 %v1515
        %2161 = vmatprep.subr.mxu0 0.0
        %2162 = vmatpush2.msra.mxu0 %v1514
        %2163 = vmatprep.subr.mxu0 0.0
        %2164 = vmatpush2.msra.mxu0 %v1513
        %2165 = vmatprep.subr.mxu0 0.0
        %2166 = vmatpush2.msra.mxu0 %v1512
        %2167 = vmatprep.subr.mxu0 0.0
        %2168 = vmatpush2.msra.mxu0 %v1511
        %2169 = vmatprep.subr.mxu0 0.0
        %2170 = vmatpush2.msra.mxu0 %v1510
        %2171 = vmatprep.subr.mxu0 0.0
        %2172 = vmatpush2.msra.mxu0 %v1509
        %2173 = vmatprep.subr.mxu0 0.0
        %2174 = vmatpush2.msra.mxu0 %v1508
        %2175 = vmatprep.subr.mxu0 0.0
        %2176 = vmatpush2.msra.mxu0 %v1507
        %2177 = vmatprep.subr.mxu0 0.0
        %2178 = vmatpush2.msra.mxu0 %v1506
        %2179 = vmatprep.subr.mxu0 0.0
        %2180 = vmatpush2.msra.mxu0 %v1505
        %2181 = vmatprep.subr.mxu0 0.0
        %2182 = vmatpush2.msra.mxu0 %v1504
        %2183 = vmatprep.subr.mxu0 0.0
        %2184 = vmatpush2.msra.mxu0 %v1503
        %2185 = vmatprep.subr.mxu0 0.0
        %2186 = vmatpush2.msra.mxu0 %v1502
        %2187 = vmatprep.subr.mxu0 0.0
        %2188 = vmatpush2.msra.mxu0 %v1501
        %2189 = vmatprep.subr.mxu0 0.0
        %2190 = vmatpush2.msra.mxu0 %v1500
        %2191 = vmatprep.mubr.f32.mxu0 %v1389
        %2192 = vmatmul.mubr.f32.gmra.mxu0 %v1388
        %v2193 = vpop.f32.mrf.mxu0
        %v2194 = vadd.f32 %v1969, %v2193
        %v2195 = vpop.f32.mrf.mxu0
        %2196 = vmatprep.mubr.f32.mxu0 %v1392
        %2197 = vmatmul.mubr.f32.gmra.mxu0 %v1391
        %v2198 = vpop.f32.mrf.mxu0
        %v2199 = vadd.f32 %v1974, %v2198
        %v2200 = vpop.f32.mrf.mxu0
        %2201 = vmatprep.mubr.f32.mxu0 %v1395
        %2202 = vmatmul.mubr.f32.gmra.mxu0 %v1394
        %v2203 = vpop.f32.mrf.mxu0
        %v2204 = vadd.f32 %v1979, %v2203
        %v2205 = vpop.f32.mrf.mxu0
        %2206 = vmatprep.mubr.f32.mxu0 %v1398
        %2207 = vmatmul.mubr.f32.gmra.mxu0 %v1397
        %v2208 = vpop.f32.mrf.mxu0
        %v2209 = vadd.f32 %v1984, %v2208
        %v2210 = vpop.f32.mrf.mxu0
        %2211 = vmatprep.mubr.f32.mxu0 %v1401
        %2212 = vmatmul.mubr.f32.gmra.mxu0 %v1400
        %v2213 = vpop.f32.mrf.mxu0
        %v2214 = vadd.f32 %v1989, %v2213
        %v2215 = vpop.f32.mrf.mxu0
        %2216 = vmatprep.mubr.f32.mxu0 %v1404
        %2217 = vmatmul.mubr.f32.gmra.mxu0 %v1403
        %v2218 = vpop.f32.mrf.mxu0
        %v2219 = vadd.f32 %v1994, %v2218
        %v2220 = vpop.f32.mrf.mxu0
        %2221 = vmatprep.mubr.f32.mxu0 %v1407
        %2222 = vmatmul.mubr.f32.gmra.mxu0 %v1406
        %v2223 = vpop.f32.mrf.mxu0
        %v2224 = vadd.f32 %v1999, %v2223
        %v2225 = vpop.f32.mrf.mxu0
        %2226 = vmatprep.mubr.f32.mxu0 %v1410
        %2227 = vmatmul.mubr.f32.gmra.mxu0 %v1409
        %v2228 = vpop.f32.mrf.mxu0
        %v2229 = vadd.f32 %v2004, %v2228
        %v2230 = vpop.f32.mrf.mxu0
        %2231 = vmatprep.mubr.f32.mxu0 %v1413
        %2232 = vmatmul.mubr.f32.gmra.mxu0 %v1412
        %v2233 = vpop.f32.mrf.mxu0
        %v2234 = vadd.f32 %v2009, %v2233
        %v2235 = vpop.f32.mrf.mxu0
        %2236 = vmatprep.mubr.f32.mxu0 %v1416
        %2237 = vmatmul.mubr.f32.gmra.mxu0 %v1415
        %v2238 = vpop.f32.mrf.mxu0
        %v2239 = vadd.f32 %v2014, %v2238
        %v2240 = vpop.f32.mrf.mxu0
        %2241 = vmatprep.mubr.f32.mxu0 %v1419
        %2242 = vmatmul.mubr.f32.gmra.mxu0 %v1418
        %v2243 = vpop.f32.mrf.mxu0
        %v2244 = vadd.f32 %v2019, %v2243
        %v2245 = vpop.f32.mrf.mxu0
        %2246 = vmatprep.mubr.f32.mxu0 %v1422
        %2247 = vmatmul.mubr.f32.gmra.mxu0 %v1421
        %v2248 = vpop.f32.mrf.mxu0
        %v2249 = vadd.f32 %v2024, %v2248
        %v2250 = vpop.f32.mrf.mxu0
        %2251 = vmatprep.mubr.f32.mxu0 %v1425
        %2252 = vmatmul.mubr.f32.gmra.mxu0 %v1424
        %v2253 = vpop.f32.mrf.mxu0
        %v2254 = vadd.f32 %v2029, %v2253
        %v2255 = vpop.f32.mrf.mxu0
        %2256 = vmatprep.mubr.f32.mxu0 %v1428
        %2257 = vmatmul.mubr.f32.gmra.mxu0 %v1427
        %v2258 = vpop.f32.mrf.mxu0
        %v2259 = vadd.f32 %v2034, %v2258
        %v2260 = vpop.f32.mrf.mxu0
        %2261 = vmatprep.mubr.f32.mxu0 %v1431
        %2262 = vmatmul.mubr.f32.gmra.mxu0 %v1430
        %v2263 = vpop.f32.mrf.mxu0
        %v2264 = vadd.f32 %v2039, %v2263
        %v2265 = vpop.f32.mrf.mxu0
        %2266 = vmatprep.mubr.f32.mxu0 %v1434
        %2267 = vmatmul.mubr.f32.gmra.mxu0 %v1433
        %v2268 = vpop.f32.mrf.mxu0
        %v2269 = vadd.f32 %v2044, %v2268
        %v2270 = vpop.f32.mrf.mxu0
        %2271 = vmatprep.mubr.f32.mxu0 %v1437
        %2272 = vmatmul.mubr.f32.gmra.mxu0 %v1436
        %v2273 = vpop.f32.mrf.mxu0
        %v2274 = vadd.f32 %v2049, %v2273
        %v2275 = vpop.f32.mrf.mxu0
        %2276 = vmatprep.mubr.f32.mxu0 %v1440
        %2277 = vmatmul.mubr.f32.gmra.mxu0 %v1439
        %v2278 = vpop.f32.mrf.mxu0
        %v2279 = vadd.f32 %v2054, %v2278
        %v2280 = vpop.f32.mrf.mxu0
        %2281 = vmatprep.mubr.f32.mxu0 %v1443
        %2282 = vmatmul.mubr.f32.gmra.mxu0 %v1442
        %v2283 = vpop.f32.mrf.mxu0
        %v2284 = vadd.f32 %v2059, %v2283
        %v2285 = vpop.f32.mrf.mxu0
        %2286 = vmatprep.mubr.f32.mxu0 %v1446
        %2287 = vmatmul.mubr.f32.gmra.mxu0 %v1445
        %v2288 = vpop.f32.mrf.mxu0
        %v2289 = vadd.f32 %v2064, %v2288
        %v2290 = vpop.f32.mrf.mxu0
        %2291 = vmatprep.mubr.f32.mxu0 %v1449
        %2292 = vmatmul.mubr.f32.gmra.mxu0 %v1448
        %v2293 = vpop.f32.mrf.mxu0
        %v2294 = vadd.f32 %v2069, %v2293
        %v2295 = vpop.f32.mrf.mxu0
        %2296 = vmatprep.mubr.f32.mxu0 %v1452
        %2297 = vmatmul.mubr.f32.gmra.mxu0 %v1451
        %v2298 = vpop.f32.mrf.mxu0
        %v2299 = vadd.f32 %v2074, %v2298
        %v2300 = vpop.f32.mrf.mxu0
        %2301 = vmatprep.mubr.f32.mxu0 %v1455
        %2302 = vmatmul.mubr.f32.gmra.mxu0 %v1454
        %v2303 = vpop.f32.mrf.mxu0
        %v2304 = vadd.f32 %v2079, %v2303
        %v2305 = vpop.f32.mrf.mxu0
        %2306 = vmatprep.mubr.f32.mxu0 %v1458
        %2307 = vmatmul.mubr.f32.gmra.mxu0 %v1457
        %v2308 = vpop.f32.mrf.mxu0
        %v2309 = vadd.f32 %v2084, %v2308
        %v2310 = vpop.f32.mrf.mxu0
        %2311 = vmatprep.mubr.f32.mxu0 %v1461
        %2312 = vmatmul.mubr.f32.gmra.mxu0 %v1460
        %v2313 = vpop.f32.mrf.mxu0
        %v2314 = vadd.f32 %v2089, %v2313
        %v2315 = vpop.f32.mrf.mxu0
        %2316 = vmatprep.mubr.f32.mxu0 %v1464
        %2317 = vmatmul.mubr.f32.gmra.mxu0 %v1463
        %v2318 = vpop.f32.mrf.mxu0
        %v2319 = vadd.f32 %v2094, %v2318
        %v2320 = vpop.f32.mrf.mxu0
        %2321 = vmatprep.mubr.f32.mxu0 %v1467
        %2322 = vmatmul.mubr.f32.gmra.mxu0 %v1466
        %v2323 = vpop.f32.mrf.mxu0
        %v2324 = vadd.f32 %v2099, %v2323
        %v2325 = vpop.f32.mrf.mxu0
        %2326 = vmatprep.mubr.f32.mxu0 %v1470
        %2327 = vmatmul.mubr.f32.gmra.mxu0 %v1469
        %v2328 = vpop.f32.mrf.mxu0
        %v2329 = vadd.f32 %v2104, %v2328
        %v2330 = vpop.f32.mrf.mxu0
        %2331 = vmatprep.mubr.f32.mxu0 %v1473
        %2332 = vmatmul.mubr.f32.gmra.mxu0 %v1472
        %v2333 = vpop.f32.mrf.mxu0
        %v2334 = vadd.f32 %v2109, %v2333
        %v2335 = vpop.f32.mrf.mxu0
        %2336 = vmatprep.mubr.f32.mxu0 %v1476
        %2337 = vmatmul.mubr.f32.gmra.mxu0 %v1475
        %v2338 = vpop.f32.mrf.mxu0
        %v2339 = vadd.f32 %v2114, %v2338
        %v2340 = vpop.f32.mrf.mxu0
        %2341 = vmatprep.mubr.f32.mxu0 %v1479
        %2342 = vmatmul.mubr.f32.gmra.mxu0 %v1478
        %v2343 = vpop.f32.mrf.mxu0
        %v2344 = vadd.f32 %v2119, %v2343
        %v2345 = vpop.f32.mrf.mxu0
        %2346 = vmatprep.mubr.f32.mxu0 %v1482
        %2347 = vmatmul.mubr.f32.gmra.mxu0 %v1481
        %v2348 = vpop.f32.mrf.mxu0
        %v2349 = vadd.f32 %v2124, %v2348
        %v2350 = vpop.f32.mrf.mxu0
        %2351 = vdwg.mxu0
        %2352 = vmatprep.subr.mxu0 0.0
        %2353 = vmatpush1.msra.mxu0 %v1531
        %2354 = vmatprep.subr.mxu0 0.0
        %2355 = vmatpush1.msra.mxu0 %v1530
        %2356 = vmatprep.subr.mxu0 0.0
        %2357 = vmatpush1.msra.mxu0 %v1529
        %2358 = vmatprep.subr.mxu0 0.0
        %2359 = vmatpush1.msra.mxu0 %v1528
        %2360 = vmatprep.subr.mxu0 0.0
        %2361 = vmatpush1.msra.mxu0 %v1527
        %2362 = vmatprep.subr.mxu0 0.0
        %2363 = vmatpush1.msra.mxu0 %v1526
        %2364 = vmatprep.subr.mxu0 0.0
        %2365 = vmatpush1.msra.mxu0 %v1525
        %2366 = vmatprep.subr.mxu0 0.0
        %2367 = vmatpush1.msra.mxu0 %v1524
        %2368 = vmatprep.subr.mxu0 0.0
        %2369 = vmatpush1.msra.mxu0 %v1523
        %2370 = vmatprep.subr.mxu0 0.0
        %2371 = vmatpush1.msra.mxu0 %v1522
        %2372 = vmatprep.subr.mxu0 0.0
        %2373 = vmatpush1.msra.mxu0 %v1521
        %2374 = vmatprep.subr.mxu0 0.0
        %2375 = vmatpush1.msra.mxu0 %v1520
        %2376 = vmatprep.subr.mxu0 0.0
        %2377 = vmatpush1.msra.mxu0 %v1519
        %2378 = vmatprep.subr.mxu0 0.0
        %2379 = vmatpush1.msra.mxu0 %v1518
        %2380 = vmatprep.subr.mxu0 0.0
        %2381 = vmatpush1.msra.mxu0 %v1517
        %2382 = vmatprep.subr.mxu0 0.0
        %2383 = vmatpush1.msra.mxu0 %v1516
        %2384 = vmatprep.subr.mxu0 0.0
        %2385 = vmatpush2.msra.mxu0 0.0
        %2386 = vmatprep.subr.mxu0 0.0
        %2387 = vmatpush2.msra.mxu0 0.0
        %2388 = vmatprep.subr.mxu0 0.0
        %2389 = vmatpush2.msra.mxu0 0.0
        %2390 = vmatprep.subr.mxu0 0.0
        %2391 = vmatpush2.msra.mxu0 0.0
        %2392 = vmatprep.subr.mxu0 0.0
        %2393 = vmatpush2.msra.mxu0 0.0
        %2394 = vmatprep.subr.mxu0 0.0
        %2395 = vmatpush2.msra.mxu0 0.0
        %2396 = vmatprep.subr.mxu0 0.0
        %2397 = vmatpush2.msra.mxu0 0.0
        %2398 = vmatprep.subr.mxu0 0.0
        %2399 = vmatpush2.msra.mxu0 0.0
        %2400 = vmatprep.subr.mxu0 0.0
        %2401 = vmatpush2.msra.mxu0 0.0
        %2402 = vmatprep.subr.mxu0 0.0
        %2403 = vmatpush2.msra.mxu0 0.0
        %2404 = vmatprep.subr.mxu0 0.0
        %2405 = vmatpush2.msra.mxu0 0.0
        %2406 = vmatprep.subr.mxu0 0.0
        %2407 = vmatpush2.msra.mxu0 0.0
        %2408 = vmatprep.subr.mxu0 0.0
        %2409 = vmatpush2.msra.mxu0 0.0
        %2410 = vmatprep.subr.mxu0 0.0
        %2411 = vmatpush2.msra.mxu0 0.0
        %2412 = vmatprep.subr.mxu0 0.0
        %2413 = vmatpush2.msra.mxu0 0.0
        %2414 = vmatprep.subr.mxu0 0.0
        %2415 = vmatpush2.msra.mxu0 0.0
        %2416 = vmatprep.mubr.f32.mxu0 0.0
        %2417 = vmatmul.mubr.f32.gmra.mxu0 %v1390
        %v2418 = vpop.f32.mrf.mxu0
        %v2419 = vadd.f32 %v2194, %v2418
        %v2420 = vpop.f32.mrf.mxu0
        %2421 = vmatprep.mubr.f32.mxu0 0.0
        %2422 = vmatmul.mubr.f32.gmra.mxu0 %v1393
        %v2423 = vpop.f32.mrf.mxu0
        %v2424 = vadd.f32 %v2199, %v2423
        %v2425 = vpop.f32.mrf.mxu0
        %2426 = vmatprep.mubr.f32.mxu0 0.0
        %2427 = vmatmul.mubr.f32.gmra.mxu0 %v1396
        %v2428 = vpop.f32.mrf.mxu0
        %v2429 = vadd.f32 %v2204, %v2428
        %v2430 = vpop.f32.mrf.mxu0
        %2431 = vmatprep.mubr.f32.mxu0 0.0
        %2432 = vmatmul.mubr.f32.gmra.mxu0 %v1399
        %v2433 = vpop.f32.mrf.mxu0
        %v2434 = vadd.f32 %v2209, %v2433
        %v2435 = vpop.f32.mrf.mxu0
        %2436 = vmatprep.mubr.f32.mxu0 0.0
        %2437 = vmatmul.mubr.f32.gmra.mxu0 %v1402
        %v2438 = vpop.f32.mrf.mxu0
        %v2439 = vadd.f32 %v2214, %v2438
        %v2440 = vpop.f32.mrf.mxu0
        %2441 = vmatprep.mubr.f32.mxu0 0.0
        %2442 = vmatmul.mubr.f32.gmra.mxu0 %v1405
        %v2443 = vpop.f32.mrf.mxu0
        %v2444 = vadd.f32 %v2219, %v2443
        %v2445 = vpop.f32.mrf.mxu0
        %2446 = vmatprep.mubr.f32.mxu0 0.0
        %2447 = vmatmul.mubr.f32.gmra.mxu0 %v1408
        %v2448 = vpop.f32.mrf.mxu0
        %v2449 = vadd.f32 %v2224, %v2448
        %v2450 = vpop.f32.mrf.mxu0
        %2451 = vmatprep.mubr.f32.mxu0 0.0
        %2452 = vmatmul.mubr.f32.gmra.mxu0 %v1411
        %v2453 = vpop.f32.mrf.mxu0
        %v2454 = vadd.f32 %v2229, %v2453
        %v2455 = vpop.f32.mrf.mxu0
        %2456 = vmatprep.mubr.f32.mxu0 0.0
        %2457 = vmatmul.mubr.f32.gmra.mxu0 %v1414
        %v2458 = vpop.f32.mrf.mxu0
        %v2459 = vadd.f32 %v2234, %v2458
        %v2460 = vpop.f32.mrf.mxu0
        %2461 = vmatprep.mubr.f32.mxu0 0.0
        %2462 = vmatmul.mubr.f32.gmra.mxu0 %v1417
        %v2463 = vpop.f32.mrf.mxu0
        %v2464 = vadd.f32 %v2239, %v2463
        %v2465 = vpop.f32.mrf.mxu0
        %2466 = vmatprep.mubr.f32.mxu0 0.0
        %2467 = vmatmul.mubr.f32.gmra.mxu0 %v1420
        %v2468 = vpop.f32.mrf.mxu0
        %v2469 = vadd.f32 %v2244, %v2468
        %v2470 = vpop.f32.mrf.mxu0
        %2471 = vmatprep.mubr.f32.mxu0 0.0
        %2472 = vmatmul.mubr.f32.gmra.mxu0 %v1423
        %v2473 = vpop.f32.mrf.mxu0
        %v2474 = vadd.f32 %v2249, %v2473
        %v2475 = vpop.f32.mrf.mxu0
        %2476 = vmatprep.mubr.f32.mxu0 0.0
        %2477 = vmatmul.mubr.f32.gmra.mxu0 %v1426
        %v2478 = vpop.f32.mrf.mxu0
        %v2479 = vadd.f32 %v2254, %v2478
        %v2480 = vpop.f32.mrf.mxu0
        %2481 = vmatprep.mubr.f32.mxu0 0.0
        %2482 = vmatmul.mubr.f32.gmra.mxu0 %v1429
        %v2483 = vpop.f32.mrf.mxu0
        %v2484 = vadd.f32 %v2259, %v2483
        %v2485 = vpop.f32.mrf.mxu0
        %2486 = vmatprep.mubr.f32.mxu0 0.0
        %2487 = vmatmul.mubr.f32.gmra.mxu0 %v1432
        %v2488 = vpop.f32.mrf.mxu0
        %v2489 = vadd.f32 %v2264, %v2488
        %v2490 = vpop.f32.mrf.mxu0
        %2491 = vmatprep.mubr.f32.mxu0 0.0
        %2492 = vmatmul.mubr.f32.gmra.mxu0 %v1435
        %v2493 = vpop.f32.mrf.mxu0
        %v2494 = vadd.f32 %v2269, %v2493
        %v2495 = vpop.f32.mrf.mxu0
        %2496 = vmatprep.mubr.f32.mxu0 0.0
        %2497 = vmatmul.mubr.f32.gmra.mxu0 %v1438
        %v2498 = vpop.f32.mrf.mxu0
        %v2499 = vadd.f32 %v2274, %v2498
        %v2500 = vpop.f32.mrf.mxu0
        %2501 = vmatprep.mubr.f32.mxu0 0.0
        %2502 = vmatmul.mubr.f32.gmra.mxu0 %v1441
        %v2503 = vpop.f32.mrf.mxu0
        %v2504 = vadd.f32 %v2279, %v2503
        %v2505 = vpop.f32.mrf.mxu0
        %2506 = vmatprep.mubr.f32.mxu0 0.0
        %2507 = vmatmul.mubr.f32.gmra.mxu0 %v1444
        %v2508 = vpop.f32.mrf.mxu0
        %v2509 = vadd.f32 %v2284, %v2508
        %v2510 = vpop.f32.mrf.mxu0
        %2511 = vmatprep.mubr.f32.mxu0 0.0
        %2512 = vmatmul.mubr.f32.gmra.mxu0 %v1447
        %v2513 = vpop.f32.mrf.mxu0
        %v2514 = vadd.f32 %v2289, %v2513
        %v2515 = vpop.f32.mrf.mxu0
        %2516 = vmatprep.mubr.f32.mxu0 0.0
        %2517 = vmatmul.mubr.f32.gmra.mxu0 %v1450
        %v2518 = vpop.f32.mrf.mxu0
        %v2519 = vadd.f32 %v2294, %v2518
        %v2520 = vpop.f32.mrf.mxu0
        %2521 = vmatprep.mubr.f32.mxu0 0.0
        %2522 = vmatmul.mubr.f32.gmra.mxu0 %v1453
        %v2523 = vpop.f32.mrf.mxu0
        %v2524 = vadd.f32 %v2299, %v2523
        %v2525 = vpop.f32.mrf.mxu0
        %2526 = vmatprep.mubr.f32.mxu0 0.0
        %2527 = vmatmul.mubr.f32.gmra.mxu0 %v1456
        %v2528 = vpop.f32.mrf.mxu0
        %v2529 = vadd.f32 %v2304, %v2528
        %v2530 = vpop.f32.mrf.mxu0
        %2531 = vmatprep.mubr.f32.mxu0 0.0
        %2532 = vmatmul.mubr.f32.gmra.mxu0 %v1459
        %v2533 = vpop.f32.mrf.mxu0
        %v2534 = vadd.f32 %v2309, %v2533
        %v2535 = vpop.f32.mrf.mxu0
        %2536 = vmatprep.mubr.f32.mxu0 0.0
        %2537 = vmatmul.mubr.f32.gmra.mxu0 %v1462
        %v2538 = vpop.f32.mrf.mxu0
        %v2539 = vadd.f32 %v2314, %v2538
        %v2540 = vpop.f32.mrf.mxu0
        %2541 = vmatprep.mubr.f32.mxu0 0.0
        %2542 = vmatmul.mubr.f32.gmra.mxu0 %v1465
        %v2543 = vpop.f32.mrf.mxu0
        %v2544 = vadd.f32 %v2319, %v2543
        %v2545 = vpop.f32.mrf.mxu0
        %2546 = vmatprep.mubr.f32.mxu0 0.0
        %2547 = vmatmul.mubr.f32.gmra.mxu0 %v1468
        %v2548 = vpop.f32.mrf.mxu0
        %v2549 = vadd.f32 %v2324, %v2548
        %v2550 = vpop.f32.mrf.mxu0
        %2551 = vmatprep.mubr.f32.mxu0 0.0
        %2552 = vmatmul.mubr.f32.gmra.mxu0 %v1471
        %v2553 = vpop.f32.mrf.mxu0
        %v2554 = vadd.f32 %v2329, %v2553
        %v2555 = vpop.f32.mrf.mxu0
        %2556 = vmatprep.mubr.f32.mxu0 0.0
        %2557 = vmatmul.mubr.f32.gmra.mxu0 %v1474
        %v2558 = vpop.f32.mrf.mxu0
        %v2559 = vadd.f32 %v2334, %v2558
        %v2560 = vpop.f32.mrf.mxu0
        %2561 = vmatprep.mubr.f32.mxu0 0.0
        %2562 = vmatmul.mubr.f32.gmra.mxu0 %v1477
        %v2563 = vpop.f32.mrf.mxu0
        %v2564 = vadd.f32 %v2339, %v2563
        %v2565 = vpop.f32.mrf.mxu0
        %2566 = vmatprep.mubr.f32.mxu0 0.0
        %2567 = vmatmul.mubr.f32.gmra.mxu0 %v1480
        %v2568 = vpop.f32.mrf.mxu0
        %v2569 = vadd.f32 %v2344, %v2568
        %v2570 = vpop.f32.mrf.mxu0
        %2571 = vmatprep.mubr.f32.mxu0 0.0
        %2572 = vmatmul.mubr.f32.gmra.mxu0 %v1483
        %v2573 = vpop.f32.mrf.mxu0
        %v2574 = vadd.f32 %v2349, %v2573
        %v2575 = vpop.f32.mrf.mxu0
        %2576 = vdwg.mxu0
        %s2577 = scalar_lea.vmem [#allocation2], 96
        %v2578 = vld [vmem:[%s2577] sm:$0xff]
        %v2579 = vld [vmem:[%s2577 + $0x8] sm:$0xff]
        %v2580 = vld [vmem:[%s2577 + $0x10] sm:$0xff]
        %v2581 = vld [vmem:[%s2577 + $0x18] sm:$0xff]
        %v2582 = vld [vmem:[%s2577 + $0x20] sm:$0xff]
        %v2583 = vld [vmem:[%s2577 + $0x28] sm:$0xff]
        %v2584 = vld [vmem:[%s2577 + $0x30] sm:$0xff]
        %v2585 = vld [vmem:[%s2577 + $0x38] sm:$0xff]
        %v2586 = vld [vmem:[%s2577 + $0x40] sm:$0xff]
        %v2587 = vld [vmem:[%s2577 + $0x48] sm:$0xff]
        %v2588 = vld [vmem:[%s2577 + $0x50] sm:$0xff]
        %v2589 = vld [vmem:[%s2577 + $0x58] sm:$0xff]
        %v2590 = vld [vmem:[%s2577 + $0x60] sm:$0xff]
        %v2591 = vld [vmem:[%s2577 + $0x68] sm:$0xff]
        %v2592 = vld [vmem:[%s2577 + $0x70] sm:$0xff]
        %v2593 = vld [vmem:[%s2577 + $0x78] sm:$0xff]
        %v2594 = vld [vmem:[%s2577 + $0x80] sm:$0xff]
        %v2595 = vld [vmem:[%s2577 + $0x88] sm:$0xff]
        %v2596 = vld [vmem:[%s2577 + $0x90] sm:$0xff]
        %v2597 = vld [vmem:[%s2577 + $0x98] sm:$0xff]
        %v2598 = vld [vmem:[%s2577 + $0xa0] sm:$0xff]
        %v2599 = vld [vmem:[%s2577 + $0xa8] sm:$0xff]
        %v2600 = vld [vmem:[%s2577 + $0xb0] sm:$0xff]
        %v2601 = vld [vmem:[%s2577 + $0xb8] sm:$0xff]
        %v2602 = vld [vmem:[%s2577 + $0xc0] sm:$0xff]
        %v2603 = vld [vmem:[%s2577 + $0xc8] sm:$0xff]
        %v2604 = vld [vmem:[%s2577 + $0xd0] sm:$0xff]
        %v2605 = vld [vmem:[%s2577 + $0xd8] sm:$0xff]
        %v2606 = vld [vmem:[%s2577 + $0xe0] sm:$0xff]
        %v2607 = vld [vmem:[%s2577 + $0xe8] sm:$0xff]
        %v2608 = vld [vmem:[%s2577 + $0xf0] sm:$0xff]
        %v2609 = vld [vmem:[%s2577 + $0xf8] sm:$0xff]
        %v2610 = vld [vmem:[%s2577 + $0x100] sm:$0xff]
        %v2611 = vld [vmem:[%s2577 + $0x108] sm:$0xff]
        %v2612 = vld [vmem:[%s2577 + $0x110] sm:$0xff]
        %v2613 = vld [vmem:[%s2577 + $0x118] sm:$0xff]
        %v2614 = vld [vmem:[%s2577 + $0x120] sm:$0xff]
        %v2615 = vld [vmem:[%s2577 + $0x128] sm:$0xff]
        %v2616 = vld [vmem:[%s2577 + $0x130] sm:$0xff]
        %v2617 = vld [vmem:[%s2577 + $0x138] sm:$0xff]
        %v2618 = vld [vmem:[%s2577 + $0x140] sm:$0xff]
        %v2619 = vld [vmem:[%s2577 + $0x148] sm:$0xff]
        %v2620 = vld [vmem:[%s2577 + $0x150] sm:$0xff]
        %v2621 = vld [vmem:[%s2577 + $0x158] sm:$0xff]
        %v2622 = vld [vmem:[%s2577 + $0x160] sm:$0xff]
        %v2623 = vld [vmem:[%s2577 + $0x168] sm:$0xff]
        %v2624 = vld [vmem:[%s2577 + $0x170] sm:$0xff]
        %v2625 = vld [vmem:[%s2577 + $0x178] sm:$0xff]
        %v2626 = vld [vmem:[%s2577 + $0x180] sm:$0xff]
        %v2627 = vld [vmem:[%s2577 + $0x188] sm:$0xff]
        %v2628 = vld [vmem:[%s2577 + $0x190] sm:$0xff]
        %v2629 = vld [vmem:[%s2577 + $0x198] sm:$0xff]
        %v2630 = vld [vmem:[%s2577 + $0x1a0] sm:$0xff]
        %v2631 = vld [vmem:[%s2577 + $0x1a8] sm:$0xff]
        %v2632 = vld [vmem:[%s2577 + $0x1b0] sm:$0xff]
        %v2633 = vld [vmem:[%s2577 + $0x1b8] sm:$0xff]
        %v2634 = vld [vmem:[%s2577 + $0x1c0] sm:$0xff]
        %v2635 = vld [vmem:[%s2577 + $0x1c8] sm:$0xff]
        %v2636 = vld [vmem:[%s2577 + $0x1d0] sm:$0xff]
        %v2637 = vld [vmem:[%s2577 + $0x1d8] sm:$0xff]
        %v2638 = vld [vmem:[%s2577 + $0x1e0] sm:$0xff]
        %v2639 = vld [vmem:[%s2577 + $0x1e8] sm:$0xff]
        %v2640 = vld [vmem:[%s2577 + $0x1f0] sm:$0xff]
        %v2641 = vld [vmem:[%s2577 + $0x1f8] sm:$0xff]
        %v2642 = vld [vmem:[%s2577 + $0x200] sm:$0xff]
        %v2643 = vld [vmem:[%s2577 + $0x208] sm:$0xff]
        %v2644 = vld [vmem:[%s2577 + $0x210] sm:$0xff]
        %v2645 = vld [vmem:[%s2577 + $0x218] sm:$0xff]
        %v2646 = vld [vmem:[%s2577 + $0x220] sm:$0xff]
        %v2647 = vld [vmem:[%s2577 + $0x228] sm:$0xff]
        %v2648 = vld [vmem:[%s2577 + $0x230] sm:$0xff]
        %v2649 = vld [vmem:[%s2577 + $0x238] sm:$0xff]
        %v2650 = vld [vmem:[%s2577 + $0x240] sm:$0xff]
        %v2651 = vld [vmem:[%s2577 + $0x248] sm:$0xff]
        %v2652 = vld [vmem:[%s2577 + $0x250] sm:$0xff]
        %v2653 = vld [vmem:[%s2577 + $0x258] sm:$0xff]
        %v2654 = vld [vmem:[%s2577 + $0x260] sm:$0xff]
        %v2655 = vld [vmem:[%s2577 + $0x268] sm:$0xff]
        %v2656 = vld [vmem:[%s2577 + $0x270] sm:$0xff]
        %v2657 = vld [vmem:[%s2577 + $0x278] sm:$0xff]
        %v2658 = vld [vmem:[%s2577 + $0x280] sm:$0xff]
        %v2659 = vld [vmem:[%s2577 + $0x288] sm:$0xff]
        %v2660 = vld [vmem:[%s2577 + $0x290] sm:$0xff]
        %v2661 = vld [vmem:[%s2577 + $0x298] sm:$0xff]
        %v2662 = vld [vmem:[%s2577 + $0x2a0] sm:$0xff]
        %v2663 = vld [vmem:[%s2577 + $0x2a8] sm:$0xff]
        %v2664 = vld [vmem:[%s2577 + $0x2b0] sm:$0xff]
        %v2665 = vld [vmem:[%s2577 + $0x2b8] sm:$0xff]
        %v2666 = vld [vmem:[%s2577 + $0x2c0] sm:$0xff]
        %v2667 = vld [vmem:[%s2577 + $0x2c8] sm:$0xff]
        %v2668 = vld [vmem:[%s2577 + $0x2d0] sm:$0xff]
        %v2669 = vld [vmem:[%s2577 + $0x2d8] sm:$0xff]
        %v2670 = vld [vmem:[%s2577 + $0x2e0] sm:$0xff]
        %v2671 = vld [vmem:[%s2577 + $0x2e8] sm:$0xff]
        %v2672 = vld [vmem:[%s2577 + $0x2f0] sm:$0xff]
        %v2673 = vld [vmem:[%s2577 + $0x2f8] sm:$0xff]
        %s2674 = scalar_lea.vmem %s3, 768
        %v2675 = vld [vmem:[%s2674] sm:$0xff]
        %v2676 = vld [vmem:[%s2674 + $0x8] sm:$0xff]
        %v2677 = vld [vmem:[%s2674 + $0x10] sm:$0xff]
        %v2678 = vld [vmem:[%s2674 + $0x18] sm:$0xff]
        %v2679 = vld [vmem:[%s2674 + $0x20] sm:$0xff]
        %v2680 = vld [vmem:[%s2674 + $0x28] sm:$0xff]
        %v2681 = vld [vmem:[%s2674 + $0x30] sm:$0xff]
        %v2682 = vld [vmem:[%s2674 + $0x38] sm:$0xff]
        %v2683 = vld [vmem:[%s2674 + $0x40] sm:$0xff]
        %v2684 = vld [vmem:[%s2674 + $0x48] sm:$0xff]
        %v2685 = vld [vmem:[%s2674 + $0x50] sm:$0xff]
        %v2686 = vld [vmem:[%s2674 + $0x58] sm:$0xff]
        %v2687 = vld [vmem:[%s2674 + $0x60] sm:$0xff]
        %v2688 = vld [vmem:[%s2674 + $0x68] sm:$0xff]
        %v2689 = vld [vmem:[%s2674 + $0x70] sm:$0xff]
        %v2690 = vld [vmem:[%s2674 + $0x78] sm:$0xff]
        %v2691 = vld [vmem:[%s2674 + $0x80] sm:$0xff]
        %v2692 = vld [vmem:[%s2674 + $0x88] sm:$0xff]
        %v2693 = vld [vmem:[%s2674 + $0x90] sm:$0xff]
        %v2694 = vld [vmem:[%s2674 + $0x98] sm:$0xff]
        %v2695 = vld [vmem:[%s2674 + $0xa0] sm:$0xff]
        %v2696 = vld [vmem:[%s2674 + $0xa8] sm:$0xff]
        %v2697 = vld [vmem:[%s2674 + $0xb0] sm:$0xff]
        %v2698 = vld [vmem:[%s2674 + $0xb8] sm:$0xff]
        %v2699 = vld [vmem:[%s2674 + $0xc0] sm:$0xff]
        %v2700 = vld [vmem:[%s2674 + $0xc8] sm:$0xff]
        %v2701 = vld [vmem:[%s2674 + $0xd0] sm:$0xff]
        %v2702 = vld [vmem:[%s2674 + $0xd8] sm:$0xff]
        %v2703 = vld [vmem:[%s2674 + $0xe0] sm:$0xff]
        %v2704 = vld [vmem:[%s2674 + $0xe8] sm:$0xff]
        %v2705 = vld [vmem:[%s2674 + $0xf0] sm:$0xff]
        %v2706 = vld [vmem:[%s2674 + $0xf8] sm:$0xff]
        %v2707 = vld [vmem:[%s2674 + $0x100] sm:$0xff]
        %v2708 = vld [vmem:[%s2674 + $0x108] sm:$0xff]
        %v2709 = vld [vmem:[%s2674 + $0x110] sm:$0xff]
        %v2710 = vld [vmem:[%s2674 + $0x118] sm:$0xff]
        %v2711 = vld [vmem:[%s2674 + $0x120] sm:$0xff]
        %v2712 = vld [vmem:[%s2674 + $0x128] sm:$0xff]
        %v2713 = vld [vmem:[%s2674 + $0x130] sm:$0xff]
        %v2714 = vld [vmem:[%s2674 + $0x138] sm:$0xff]
        %v2715 = vld [vmem:[%s2674 + $0x140] sm:$0xff]
        %v2716 = vld [vmem:[%s2674 + $0x148] sm:$0xff]
        %v2717 = vld [vmem:[%s2674 + $0x150] sm:$0xff]
        %v2718 = vld [vmem:[%s2674 + $0x158] sm:$0xff]
        %v2719 = vld [vmem:[%s2674 + $0x160] sm:$0xff]
        %v2720 = vld [vmem:[%s2674 + $0x168] sm:$0xff]
        %v2721 = vld [vmem:[%s2674 + $0x170] sm:$0xff]
        %v2722 = vld [vmem:[%s2674 + $0x178] sm:$0xff]
        %2723 = vmatprep.subr.mxu0 0.0
        %2724 = vmatpush1.msra.mxu0 %v2690
        %2725 = vmatprep.subr.mxu0 0.0
        %2726 = vmatpush1.msra.mxu0 %v2689
        %2727 = vmatprep.subr.mxu0 0.0
        %2728 = vmatpush1.msra.mxu0 %v2688
        %2729 = vmatprep.subr.mxu0 0.0
        %2730 = vmatpush1.msra.mxu0 %v2687
        %2731 = vmatprep.subr.mxu0 0.0
        %2732 = vmatpush1.msra.mxu0 %v2686
        %2733 = vmatprep.subr.mxu0 0.0
        %2734 = vmatpush1.msra.mxu0 %v2685
        %2735 = vmatprep.subr.mxu0 0.0
        %2736 = vmatpush1.msra.mxu0 %v2684
        %2737 = vmatprep.subr.mxu0 0.0
        %2738 = vmatpush1.msra.mxu0 %v2683
        %2739 = vmatprep.subr.mxu0 0.0
        %2740 = vmatpush1.msra.mxu0 %v2682
        %2741 = vmatprep.subr.mxu0 0.0
        %2742 = vmatpush1.msra.mxu0 %v2681
        %2743 = vmatprep.subr.mxu0 0.0
        %2744 = vmatpush1.msra.mxu0 %v2680
        %2745 = vmatprep.subr.mxu0 0.0
        %2746 = vmatpush1.msra.mxu0 %v2679
        %2747 = vmatprep.subr.mxu0 0.0
        %2748 = vmatpush1.msra.mxu0 %v2678
        %2749 = vmatprep.subr.mxu0 0.0
        %2750 = vmatpush1.msra.mxu0 %v2677
        %2751 = vmatprep.subr.mxu0 0.0
        %2752 = vmatpush1.msra.mxu0 %v2676
        %2753 = vmatprep.subr.mxu0 0.0
        %2754 = vmatpush1.msra.mxu0 %v2675
        %2755 = vmatprep.subr.mxu0 0.0
        %2756 = vmatpush2.msra.mxu0 %v2706
        %2757 = vmatprep.subr.mxu0 0.0
        %2758 = vmatpush2.msra.mxu0 %v2705
        %2759 = vmatprep.subr.mxu0 0.0
        %2760 = vmatpush2.msra.mxu0 %v2704
        %2761 = vmatprep.subr.mxu0 0.0
        %2762 = vmatpush2.msra.mxu0 %v2703
        %2763 = vmatprep.subr.mxu0 0.0
        %2764 = vmatpush2.msra.mxu0 %v2702
        %2765 = vmatprep.subr.mxu0 0.0
        %2766 = vmatpush2.msra.mxu0 %v2701
        %2767 = vmatprep.subr.mxu0 0.0
        %2768 = vmatpush2.msra.mxu0 %v2700
        %2769 = vmatprep.subr.mxu0 0.0
        %2770 = vmatpush2.msra.mxu0 %v2699
        %2771 = vmatprep.subr.mxu0 0.0
        %2772 = vmatpush2.msra.mxu0 %v2698
        %2773 = vmatprep.subr.mxu0 0.0
        %2774 = vmatpush2.msra.mxu0 %v2697
        %2775 = vmatprep.subr.mxu0 0.0
        %2776 = vmatpush2.msra.mxu0 %v2696
        %2777 = vmatprep.subr.mxu0 0.0
        %2778 = vmatpush2.msra.mxu0 %v2695
        %2779 = vmatprep.subr.mxu0 0.0
        %2780 = vmatpush2.msra.mxu0 %v2694
        %2781 = vmatprep.subr.mxu0 0.0
        %2782 = vmatpush2.msra.mxu0 %v2693
        %2783 = vmatprep.subr.mxu0 0.0
        %2784 = vmatpush2.msra.mxu0 %v2692
        %2785 = vmatprep.subr.mxu0 0.0
        %2786 = vmatpush2.msra.mxu0 %v2691
        %2787 = vmatprep.mubr.f32.mxu0 %v2579
        %2788 = vmatmul.mubr.f32.gmra.mxu0 %v2578
        %v2789 = vpop.f32.mrf.mxu0
        %v2790 = vadd.f32 0.0, %v2789
        %v2791 = vpop.f32.mrf.mxu0
        %2792 = vmatprep.mubr.f32.mxu0 %v2582
        %2793 = vmatmul.mubr.f32.gmra.mxu0 %v2581
        %v2794 = vpop.f32.mrf.mxu0
        %v2795 = vadd.f32 0.0, %v2794
        %v2796 = vpop.f32.mrf.mxu0
        %2797 = vmatprep.mubr.f32.mxu0 %v2585
        %2798 = vmatmul.mubr.f32.gmra.mxu0 %v2584
        %v2799 = vpop.f32.mrf.mxu0
        %v2800 = vadd.f32 0.0, %v2799
        %v2801 = vpop.f32.mrf.mxu0
        %2802 = vmatprep.mubr.f32.mxu0 %v2588
        %2803 = vmatmul.mubr.f32.gmra.mxu0 %v2587
        %v2804 = vpop.f32.mrf.mxu0
        %v2805 = vadd.f32 0.0, %v2804
        %v2806 = vpop.f32.mrf.mxu0
        %2807 = vmatprep.mubr.f32.mxu0 %v2591
        %2808 = vmatmul.mubr.f32.gmra.mxu0 %v2590
        %v2809 = vpop.f32.mrf.mxu0
        %v2810 = vadd.f32 0.0, %v2809
        %v2811 = vpop.f32.mrf.mxu0
        %2812 = vmatprep.mubr.f32.mxu0 %v2594
        %2813 = vmatmul.mubr.f32.gmra.mxu0 %v2593
        %v2814 = vpop.f32.mrf.mxu0
        %v2815 = vadd.f32 0.0, %v2814
        %v2816 = vpop.f32.mrf.mxu0
        %2817 = vmatprep.mubr.f32.mxu0 %v2597
        %2818 = vmatmul.mubr.f32.gmra.mxu0 %v2596
        %v2819 = vpop.f32.mrf.mxu0
        %v2820 = vadd.f32 0.0, %v2819
        %v2821 = vpop.f32.mrf.mxu0
        %2822 = vmatprep.mubr.f32.mxu0 %v2600
        %2823 = vmatmul.mubr.f32.gmra.mxu0 %v2599
        %v2824 = vpop.f32.mrf.mxu0
        %v2825 = vadd.f32 0.0, %v2824
        %v2826 = vpop.f32.mrf.mxu0
        %2827 = vmatprep.mubr.f32.mxu0 %v2603
        %2828 = vmatmul.mubr.f32.gmra.mxu0 %v2602
        %v2829 = vpop.f32.mrf.mxu0
        %v2830 = vadd.f32 0.0, %v2829
        %v2831 = vpop.f32.mrf.mxu0
        %2832 = vmatprep.mubr.f32.mxu0 %v2606
        %2833 = vmatmul.mubr.f32.gmra.mxu0 %v2605
        %v2834 = vpop.f32.mrf.mxu0
        %v2835 = vadd.f32 0.0, %v2834
        %v2836 = vpop.f32.mrf.mxu0
        %2837 = vmatprep.mubr.f32.mxu0 %v2609
        %2838 = vmatmul.mubr.f32.gmra.mxu0 %v2608
        %v2839 = vpop.f32.mrf.mxu0
        %v2840 = vadd.f32 0.0, %v2839
        %v2841 = vpop.f32.mrf.mxu0
        %2842 = vmatprep.mubr.f32.mxu0 %v2612
        %2843 = vmatmul.mubr.f32.gmra.mxu0 %v2611
        %v2844 = vpop.f32.mrf.mxu0
        %v2845 = vadd.f32 0.0, %v2844
        %v2846 = vpop.f32.mrf.mxu0
        %2847 = vmatprep.mubr.f32.mxu0 %v2615
        %2848 = vmatmul.mubr.f32.gmra.mxu0 %v2614
        %v2849 = vpop.f32.mrf.mxu0
        %v2850 = vadd.f32 0.0, %v2849
        %v2851 = vpop.f32.mrf.mxu0
        %2852 = vmatprep.mubr.f32.mxu0 %v2618
        %2853 = vmatmul.mubr.f32.gmra.mxu0 %v2617
        %v2854 = vpop.f32.mrf.mxu0
        %v2855 = vadd.f32 0.0, %v2854
        %v2856 = vpop.f32.mrf.mxu0
        %2857 = vmatprep.mubr.f32.mxu0 %v2621
        %2858 = vmatmul.mubr.f32.gmra.mxu0 %v2620
        %v2859 = vpop.f32.mrf.mxu0
        %v2860 = vadd.f32 0.0, %v2859
        %v2861 = vpop.f32.mrf.mxu0
        %2862 = vmatprep.mubr.f32.mxu0 %v2624
        %2863 = vmatmul.mubr.f32.gmra.mxu0 %v2623
        %v2864 = vpop.f32.mrf.mxu0
        %v2865 = vadd.f32 0.0, %v2864
        %v2866 = vpop.f32.mrf.mxu0
        %2867 = vmatprep.mubr.f32.mxu0 %v2627
        %2868 = vmatmul.mubr.f32.gmra.mxu0 %v2626
        %v2869 = vpop.f32.mrf.mxu0
        %v2870 = vadd.f32 0.0, %v2869
        %v2871 = vpop.f32.mrf.mxu0
        %2872 = vmatprep.mubr.f32.mxu0 %v2630
        %2873 = vmatmul.mubr.f32.gmra.mxu0 %v2629
        %v2874 = vpop.f32.mrf.mxu0
        %v2875 = vadd.f32 0.0, %v2874
        %v2876 = vpop.f32.mrf.mxu0
        %2877 = vmatprep.mubr.f32.mxu0 %v2633
        %2878 = vmatmul.mubr.f32.gmra.mxu0 %v2632
        %v2879 = vpop.f32.mrf.mxu0
        %v2880 = vadd.f32 0.0, %v2879
        %v2881 = vpop.f32.mrf.mxu0
        %2882 = vmatprep.mubr.f32.mxu0 %v2636
        %2883 = vmatmul.mubr.f32.gmra.mxu0 %v2635
        %v2884 = vpop.f32.mrf.mxu0
        %v2885 = vadd.f32 0.0, %v2884
        %v2886 = vpop.f32.mrf.mxu0
        %2887 = vmatprep.mubr.f32.mxu0 %v2639
        %2888 = vmatmul.mubr.f32.gmra.mxu0 %v2638
        %v2889 = vpop.f32.mrf.mxu0
        %v2890 = vadd.f32 0.0, %v2889
        %v2891 = vpop.f32.mrf.mxu0
        %2892 = vmatprep.mubr.f32.mxu0 %v2642
        %2893 = vmatmul.mubr.f32.gmra.mxu0 %v2641
        %v2894 = vpop.f32.mrf.mxu0
        %v2895 = vadd.f32 0.0, %v2894
        %v2896 = vpop.f32.mrf.mxu0
        %2897 = vmatprep.mubr.f32.mxu0 %v2645
        %2898 = vmatmul.mubr.f32.gmra.mxu0 %v2644
        %v2899 = vpop.f32.mrf.mxu0
        %v2900 = vadd.f32 0.0, %v2899
        %v2901 = vpop.f32.mrf.mxu0
        %2902 = vmatprep.mubr.f32.mxu0 %v2648
        %2903 = vmatmul.mubr.f32.gmra.mxu0 %v2647
        %v2904 = vpop.f32.mrf.mxu0
        %v2905 = vadd.f32 0.0, %v2904
        %v2906 = vpop.f32.mrf.mxu0
        %2907 = vmatprep.mubr.f32.mxu0 %v2651
        %2908 = vmatmul.mubr.f32.gmra.mxu0 %v2650
        %v2909 = vpop.f32.mrf.mxu0
        %v2910 = vadd.f32 0.0, %v2909
        %v2911 = vpop.f32.mrf.mxu0
        %2912 = vmatprep.mubr.f32.mxu0 %v2654
        %2913 = vmatmul.mubr.f32.gmra.mxu0 %v2653
        %v2914 = vpop.f32.mrf.mxu0
        %v2915 = vadd.f32 0.0, %v2914
        %v2916 = vpop.f32.mrf.mxu0
        %2917 = vmatprep.mubr.f32.mxu0 %v2657
        %2918 = vmatmul.mubr.f32.gmra.mxu0 %v2656
        %v2919 = vpop.f32.mrf.mxu0
        %v2920 = vadd.f32 0.0, %v2919
        %v2921 = vpop.f32.mrf.mxu0
        %2922 = vmatprep.mubr.f32.mxu0 %v2660
        %2923 = vmatmul.mubr.f32.gmra.mxu0 %v2659
        %v2924 = vpop.f32.mrf.mxu0
        %v2925 = vadd.f32 0.0, %v2924
        %v2926 = vpop.f32.mrf.mxu0
        %2927 = vmatprep.mubr.f32.mxu0 %v2663
        %2928 = vmatmul.mubr.f32.gmra.mxu0 %v2662
        %v2929 = vpop.f32.mrf.mxu0
        %v2930 = vadd.f32 0.0, %v2929
        %v2931 = vpop.f32.mrf.mxu0
        %2932 = vmatprep.mubr.f32.mxu0 %v2666
        %2933 = vmatmul.mubr.f32.gmra.mxu0 %v2665
        %v2934 = vpop.f32.mrf.mxu0
        %v2935 = vadd.f32 0.0, %v2934
        %v2936 = vpop.f32.mrf.mxu0
        %2937 = vmatprep.mubr.f32.mxu0 %v2669
        %2938 = vmatmul.mubr.f32.gmra.mxu0 %v2668
        %v2939 = vpop.f32.mrf.mxu0
        %v2940 = vadd.f32 0.0, %v2939
        %v2941 = vpop.f32.mrf.mxu0
        %2942 = vmatprep.mubr.f32.mxu0 %v2672
        %2943 = vmatmul.mubr.f32.gmra.mxu0 %v2671
        %v2944 = vpop.f32.mrf.mxu0
        %v2945 = vadd.f32 0.0, %v2944
        %v2946 = vpop.f32.mrf.mxu0
        %2947 = vdwg.mxu0
        %2948 = vmatprep.subr.mxu0 0.0
        %2949 = vmatpush1.msra.mxu0 %v2722
        %2950 = vmatprep.subr.mxu0 0.0
        %2951 = vmatpush1.msra.mxu0 %v2721
        %2952 = vmatprep.subr.mxu0 0.0
        %2953 = vmatpush1.msra.mxu0 %v2720
        %2954 = vmatprep.subr.mxu0 0.0
        %2955 = vmatpush1.msra.mxu0 %v2719
        %2956 = vmatprep.subr.mxu0 0.0
        %2957 = vmatpush1.msra.mxu0 %v2718
        %2958 = vmatprep.subr.mxu0 0.0
        %2959 = vmatpush1.msra.mxu0 %v2717
        %2960 = vmatprep.subr.mxu0 0.0
        %2961 = vmatpush1.msra.mxu0 %v2716
        %2962 = vmatprep.subr.mxu0 0.0
        %2963 = vmatpush1.msra.mxu0 %v2715
        %2964 = vmatprep.subr.mxu0 0.0
        %2965 = vmatpush1.msra.mxu0 %v2714
        %2966 = vmatprep.subr.mxu0 0.0
        %2967 = vmatpush1.msra.mxu0 %v2713
        %2968 = vmatprep.subr.mxu0 0.0
        %2969 = vmatpush1.msra.mxu0 %v2712
        %2970 = vmatprep.subr.mxu0 0.0
        %2971 = vmatpush1.msra.mxu0 %v2711
        %2972 = vmatprep.subr.mxu0 0.0
        %2973 = vmatpush1.msra.mxu0 %v2710
        %2974 = vmatprep.subr.mxu0 0.0
        %2975 = vmatpush1.msra.mxu0 %v2709
        %2976 = vmatprep.subr.mxu0 0.0
        %2977 = vmatpush1.msra.mxu0 %v2708
        %2978 = vmatprep.subr.mxu0 0.0
        %2979 = vmatpush1.msra.mxu0 %v2707
        %2980 = vmatprep.subr.mxu0 0.0
        %2981 = vmatpush2.msra.mxu0 0.0
        %2982 = vmatprep.subr.mxu0 0.0
        %2983 = vmatpush2.msra.mxu0 0.0
        %2984 = vmatprep.subr.mxu0 0.0
        %2985 = vmatpush2.msra.mxu0 0.0
        %2986 = vmatprep.subr.mxu0 0.0
        %2987 = vmatpush2.msra.mxu0 0.0
        %2988 = vmatprep.subr.mxu0 0.0
        %2989 = vmatpush2.msra.mxu0 0.0
        %2990 = vmatprep.subr.mxu0 0.0
        %2991 = vmatpush2.msra.mxu0 0.0
        %2992 = vmatprep.subr.mxu0 0.0
        %2993 = vmatpush2.msra.mxu0 0.0
        %2994 = vmatprep.subr.mxu0 0.0
        %2995 = vmatpush2.msra.mxu0 0.0
        %2996 = vmatprep.subr.mxu0 0.0
        %2997 = vmatpush2.msra.mxu0 0.0
        %2998 = vmatprep.subr.mxu0 0.0
        %2999 = vmatpush2.msra.mxu0 0.0
        %3000 = vmatprep.subr.mxu0 0.0
        %3001 = vmatpush2.msra.mxu0 0.0
        %3002 = vmatprep.subr.mxu0 0.0
        %3003 = vmatpush2.msra.mxu0 0.0
        %3004 = vmatprep.subr.mxu0 0.0
        %3005 = vmatpush2.msra.mxu0 0.0
        %3006 = vmatprep.subr.mxu0 0.0
        %3007 = vmatpush2.msra.mxu0 0.0
        %3008 = vmatprep.subr.mxu0 0.0
        %3009 = vmatpush2.msra.mxu0 0.0
        %3010 = vmatprep.subr.mxu0 0.0
        %3011 = vmatpush2.msra.mxu0 0.0
        %3012 = vmatprep.mubr.f32.mxu0 0.0
        %3013 = vmatmul.mubr.f32.gmra.mxu0 %v2580
        %v3014 = vpop.f32.mrf.mxu0
        %v3015 = vadd.f32 %v2790, %v3014
        %v3016 = vpop.f32.mrf.mxu0
        %3017 = vmatprep.mubr.f32.mxu0 0.0
        %3018 = vmatmul.mubr.f32.gmra.mxu0 %v2583
        %v3019 = vpop.f32.mrf.mxu0
        %v3020 = vadd.f32 %v2795, %v3019
        %v3021 = vpop.f32.mrf.mxu0
        %3022 = vmatprep.mubr.f32.mxu0 0.0
        %3023 = vmatmul.mubr.f32.gmra.mxu0 %v2586
        %v3024 = vpop.f32.mrf.mxu0
        %v3025 = vadd.f32 %v2800, %v3024
        %v3026 = vpop.f32.mrf.mxu0
        %3027 = vmatprep.mubr.f32.mxu0 0.0
        %3028 = vmatmul.mubr.f32.gmra.mxu0 %v2589
        %v3029 = vpop.f32.mrf.mxu0
        %v3030 = vadd.f32 %v2805, %v3029
        %v3031 = vpop.f32.mrf.mxu0
        %3032 = vmatprep.mubr.f32.mxu0 0.0
        %3033 = vmatmul.mubr.f32.gmra.mxu0 %v2592
        %v3034 = vpop.f32.mrf.mxu0
        %v3035 = vadd.f32 %v2810, %v3034
        %v3036 = vpop.f32.mrf.mxu0
        %3037 = vmatprep.mubr.f32.mxu0 0.0
        %3038 = vmatmul.mubr.f32.gmra.mxu0 %v2595
        %v3039 = vpop.f32.mrf.mxu0
        %v3040 = vadd.f32 %v2815, %v3039
        %v3041 = vpop.f32.mrf.mxu0
        %3042 = vmatprep.mubr.f32.mxu0 0.0
        %3043 = vmatmul.mubr.f32.gmra.mxu0 %v2598
        %v3044 = vpop.f32.mrf.mxu0
        %v3045 = vadd.f32 %v2820, %v3044
        %v3046 = vpop.f32.mrf.mxu0
        %3047 = vmatprep.mubr.f32.mxu0 0.0
        %3048 = vmatmul.mubr.f32.gmra.mxu0 %v2601
        %v3049 = vpop.f32.mrf.mxu0
        %v3050 = vadd.f32 %v2825, %v3049
        %v3051 = vpop.f32.mrf.mxu0
        %3052 = vmatprep.mubr.f32.mxu0 0.0
        %3053 = vmatmul.mubr.f32.gmra.mxu0 %v2604
        %v3054 = vpop.f32.mrf.mxu0
        %v3055 = vadd.f32 %v2830, %v3054
        %v3056 = vpop.f32.mrf.mxu0
        %3057 = vmatprep.mubr.f32.mxu0 0.0
        %3058 = vmatmul.mubr.f32.gmra.mxu0 %v2607
        %v3059 = vpop.f32.mrf.mxu0
        %v3060 = vadd.f32 %v2835, %v3059
        %v3061 = vpop.f32.mrf.mxu0
        %3062 = vmatprep.mubr.f32.mxu0 0.0
        %3063 = vmatmul.mubr.f32.gmra.mxu0 %v2610
        %v3064 = vpop.f32.mrf.mxu0
        %v3065 = vadd.f32 %v2840, %v3064
        %v3066 = vpop.f32.mrf.mxu0
        %3067 = vmatprep.mubr.f32.mxu0 0.0
        %3068 = vmatmul.mubr.f32.gmra.mxu0 %v2613
        %v3069 = vpop.f32.mrf.mxu0
        %v3070 = vadd.f32 %v2845, %v3069
        %v3071 = vpop.f32.mrf.mxu0
        %3072 = vmatprep.mubr.f32.mxu0 0.0
        %3073 = vmatmul.mubr.f32.gmra.mxu0 %v2616
        %v3074 = vpop.f32.mrf.mxu0
        %v3075 = vadd.f32 %v2850, %v3074
        %v3076 = vpop.f32.mrf.mxu0
        %3077 = vmatprep.mubr.f32.mxu0 0.0
        %3078 = vmatmul.mubr.f32.gmra.mxu0 %v2619
        %v3079 = vpop.f32.mrf.mxu0
        %v3080 = vadd.f32 %v2855, %v3079
        %v3081 = vpop.f32.mrf.mxu0
        %3082 = vmatprep.mubr.f32.mxu0 0.0
        %3083 = vmatmul.mubr.f32.gmra.mxu0 %v2622
        %v3084 = vpop.f32.mrf.mxu0
        %v3085 = vadd.f32 %v2860, %v3084
        %v3086 = vpop.f32.mrf.mxu0
        %3087 = vmatprep.mubr.f32.mxu0 0.0
        %3088 = vmatmul.mubr.f32.gmra.mxu0 %v2625
        %v3089 = vpop.f32.mrf.mxu0
        %v3090 = vadd.f32 %v2865, %v3089
        %v3091 = vpop.f32.mrf.mxu0
        %3092 = vmatprep.mubr.f32.mxu0 0.0
        %3093 = vmatmul.mubr.f32.gmra.mxu0 %v2628
        %v3094 = vpop.f32.mrf.mxu0
        %v3095 = vadd.f32 %v2870, %v3094
        %v3096 = vpop.f32.mrf.mxu0
        %3097 = vmatprep.mubr.f32.mxu0 0.0
        %3098 = vmatmul.mubr.f32.gmra.mxu0 %v2631
        %v3099 = vpop.f32.mrf.mxu0
        %v3100 = vadd.f32 %v2875, %v3099
        %v3101 = vpop.f32.mrf.mxu0
        %3102 = vmatprep.mubr.f32.mxu0 0.0
        %3103 = vmatmul.mubr.f32.gmra.mxu0 %v2634
        %v3104 = vpop.f32.mrf.mxu0
        %v3105 = vadd.f32 %v2880, %v3104
        %v3106 = vpop.f32.mrf.mxu0
        %3107 = vmatprep.mubr.f32.mxu0 0.0
        %3108 = vmatmul.mubr.f32.gmra.mxu0 %v2637
        %v3109 = vpop.f32.mrf.mxu0
        %v3110 = vadd.f32 %v2885, %v3109
        %v3111 = vpop.f32.mrf.mxu0
        %3112 = vmatprep.mubr.f32.mxu0 0.0
        %3113 = vmatmul.mubr.f32.gmra.mxu0 %v2640
        %v3114 = vpop.f32.mrf.mxu0
        %v3115 = vadd.f32 %v2890, %v3114
        %v3116 = vpop.f32.mrf.mxu0
        %3117 = vmatprep.mubr.f32.mxu0 0.0
        %3118 = vmatmul.mubr.f32.gmra.mxu0 %v2643
        %v3119 = vpop.f32.mrf.mxu0
        %v3120 = vadd.f32 %v2895, %v3119
        %v3121 = vpop.f32.mrf.mxu0
        %3122 = vmatprep.mubr.f32.mxu0 0.0
        %3123 = vmatmul.mubr.f32.gmra.mxu0 %v2646
        %v3124 = vpop.f32.mrf.mxu0
        %v3125 = vadd.f32 %v2900, %v3124
        %v3126 = vpop.f32.mrf.mxu0
        %3127 = vmatprep.mubr.f32.mxu0 0.0
        %3128 = vmatmul.mubr.f32.gmra.mxu0 %v2649
        %v3129 = vpop.f32.mrf.mxu0
        %v3130 = vadd.f32 %v2905, %v3129
        %v3131 = vpop.f32.mrf.mxu0
        %3132 = vmatprep.mubr.f32.mxu0 0.0
        %3133 = vmatmul.mubr.f32.gmra.mxu0 %v2652
        %v3134 = vpop.f32.mrf.mxu0
        %v3135 = vadd.f32 %v2910, %v3134
        %v3136 = vpop.f32.mrf.mxu0
        %3137 = vmatprep.mubr.f32.mxu0 0.0
        %3138 = vmatmul.mubr.f32.gmra.mxu0 %v2655
        %v3139 = vpop.f32.mrf.mxu0
        %v3140 = vadd.f32 %v2915, %v3139
        %v3141 = vpop.f32.mrf.mxu0
        %3142 = vmatprep.mubr.f32.mxu0 0.0
        %3143 = vmatmul.mubr.f32.gmra.mxu0 %v2658
        %v3144 = vpop.f32.mrf.mxu0
        %v3145 = vadd.f32 %v2920, %v3144
        %v3146 = vpop.f32.mrf.mxu0
        %3147 = vmatprep.mubr.f32.mxu0 0.0
        %3148 = vmatmul.mubr.f32.gmra.mxu0 %v2661
        %v3149 = vpop.f32.mrf.mxu0
        %v3150 = vadd.f32 %v2925, %v3149
        %v3151 = vpop.f32.mrf.mxu0
        %3152 = vmatprep.mubr.f32.mxu0 0.0
        %3153 = vmatmul.mubr.f32.gmra.mxu0 %v2664
        %v3154 = vpop.f32.mrf.mxu0
        %v3155 = vadd.f32 %v2930, %v3154
        %v3156 = vpop.f32.mrf.mxu0
        %3157 = vmatprep.mubr.f32.mxu0 0.0
        %3158 = vmatmul.mubr.f32.gmra.mxu0 %v2667
        %v3159 = vpop.f32.mrf.mxu0
        %v3160 = vadd.f32 %v2935, %v3159
        %v3161 = vpop.f32.mrf.mxu0
        %3162 = vmatprep.mubr.f32.mxu0 0.0
        %3163 = vmatmul.mubr.f32.gmra.mxu0 %v2670
        %v3164 = vpop.f32.mrf.mxu0
        %v3165 = vadd.f32 %v2940, %v3164
        %v3166 = vpop.f32.mrf.mxu0
        %3167 = vmatprep.mubr.f32.mxu0 0.0
        %3168 = vmatmul.mubr.f32.gmra.mxu0 %v2673
        %v3169 = vpop.f32.mrf.mxu0
        %v3170 = vadd.f32 %v2945, %v3169
        %v3171 = vpop.f32.mrf.mxu0
        %3172 = vdwg.mxu0
        %v3173 = vadd.f32 %v2419, %v3015
        %v3174 = vadd.f32 %v2424, %v3020
        %v3175 = vadd.f32 %v2429, %v3025
        %v3176 = vadd.f32 %v2434, %v3030
        %v3177 = vadd.f32 %v2439, %v3035
        %v3178 = vadd.f32 %v2444, %v3040
        %v3179 = vadd.f32 %v2449, %v3045
        %v3180 = vadd.f32 %v2454, %v3050
        %v3181 = vadd.f32 %v2459, %v3055
        %v3182 = vadd.f32 %v2464, %v3060
        %v3183 = vadd.f32 %v2469, %v3065
        %v3184 = vadd.f32 %v2474, %v3070
        %v3185 = vadd.f32 %v2479, %v3075
        %v3186 = vadd.f32 %v2484, %v3080
        %v3187 = vadd.f32 %v2489, %v3085
        %v3188 = vadd.f32 %v2494, %v3090
        %v3189 = vadd.f32 %v2499, %v3095
        %v3190 = vadd.f32 %v2504, %v3100
        %v3191 = vadd.f32 %v2509, %v3105
        %v3192 = vadd.f32 %v2514, %v3110
        %v3193 = vadd.f32 %v2519, %v3115
        %v3194 = vadd.f32 %v2524, %v3120
        %v3195 = vadd.f32 %v2529, %v3125
        %v3196 = vadd.f32 %v2534, %v3130
        %v3197 = vadd.f32 %v2539, %v3135
        %v3198 = vadd.f32 %v2544, %v3140
        %v3199 = vadd.f32 %v2549, %v3145
        %v3200 = vadd.f32 %v2554, %v3150
        %v3201 = vadd.f32 %v2559, %v3155
        %v3202 = vadd.f32 %v2564, %v3160
        %v3203 = vadd.f32 %v2569, %v3165
        %v3204 = vadd.f32 %v2574, %v3170
        %v3205 = vld [vmem:[%s4] sm:$0x1]
        %v3207 = vlaneseq
        %v3208 = vshrl.u32 %v3207, 7
        %v3209 = vsub.s32 0, %v3208
        %v3210 = vrot.slane %v3205, %v3209
        %v3212 = vadd.f32 %v3173, %v3210
        %v3213 = vadd.f32 %v3174, %v3210
        %v3214 = vadd.f32 %v3175, %v3210
        %v3215 = vadd.f32 %v3176, %v3210
        %v3216 = vadd.f32 %v3177, %v3210
        %v3217 = vadd.f32 %v3178, %v3210
        %v3218 = vadd.f32 %v3179, %v3210
        %v3219 = vadd.f32 %v3180, %v3210
        %v3220 = vadd.f32 %v3181, %v3210
        %v3221 = vadd.f32 %v3182, %v3210
        %v3222 = vadd.f32 %v3183, %v3210
        %v3223 = vadd.f32 %v3184, %v3210
        %v3224 = vadd.f32 %v3185, %v3210
        %v3225 = vadd.f32 %v3186, %v3210
        %v3226 = vadd.f32 %v3187, %v3210
        %v3227 = vadd.f32 %v3188, %v3210
        %v3228 = vadd.f32 %v3189, %v3210
        %v3229 = vadd.f32 %v3190, %v3210
        %v3230 = vadd.f32 %v3191, %v3210
        %v3231 = vadd.f32 %v3192, %v3210
        %v3232 = vadd.f32 %v3193, %v3210
        %v3233 = vadd.f32 %v3194, %v3210
        %v3234 = vadd.f32 %v3195, %v3210
        %v3235 = vadd.f32 %v3196, %v3210
        %v3236 = vadd.f32 %v3197, %v3210
        %v3237 = vadd.f32 %v3198, %v3210
        %v3238 = vadd.f32 %v3199, %v3210
        %v3239 = vadd.f32 %v3200, %v3210
        %v3240 = vadd.f32 %v3201, %v3210
        %v3241 = vadd.f32 %v3202, %v3210
        %v3242 = vadd.f32 %v3203, %v3210
        %v3243 = vadd.f32 %v3204, %v3210
        %v3244 = vmax.f32 %v3212, 0.0
        %v3245 = vmax.f32 %v3213, 0.0
        %v3246 = vmax.f32 %v3214, 0.0
        %v3247 = vmax.f32 %v3215, 0.0
        %v3248 = vmax.f32 %v3216, 0.0
        %v3249 = vmax.f32 %v3217, 0.0
        %v3250 = vmax.f32 %v3218, 0.0
        %v3251 = vmax.f32 %v3219, 0.0
        %v3252 = vmax.f32 %v3220, 0.0
        %v3253 = vmax.f32 %v3221, 0.0
        %v3254 = vmax.f32 %v3222, 0.0
        %v3255 = vmax.f32 %v3223, 0.0
        %v3256 = vmax.f32 %v3224, 0.0
        %v3257 = vmax.f32 %v3225, 0.0
        %v3258 = vmax.f32 %v3226, 0.0
        %v3259 = vmax.f32 %v3227, 0.0
        %v3260 = vmax.f32 %v3228, 0.0
        %v3261 = vmax.f32 %v3229, 0.0
        %v3262 = vmax.f32 %v3230, 0.0
        %v3263 = vmax.f32 %v3231, 0.0
        %v3264 = vmax.f32 %v3232, 0.0
        %v3265 = vmax.f32 %v3233, 0.0
        %v3266 = vmax.f32 %v3234, 0.0
        %v3267 = vmax.f32 %v3235, 0.0
        %v3268 = vmax.f32 %v3236, 0.0
        %v3269 = vmax.f32 %v3237, 0.0
        %v3270 = vmax.f32 %v3238, 0.0
        %v3271 = vmax.f32 %v3239, 0.0
        %v3272 = vmax.f32 %v3240, 0.0
        %v3273 = vmax.f32 %v3241, 0.0
        %v3274 = vmax.f32 %v3242, 0.0
        %v3275 = vmax.f32 %v3243, 0.0
        %v3276 = vld [vmem:[%s5] sm:$0xff]
        %v3277 = vld [vmem:[%s5 + $0x8] sm:$0xff]
        %v3278 = vld [vmem:[%s5 + $0x10] sm:$0xff]
        %v3279 = vld [vmem:[%s5 + $0x18] sm:$0xff]
        %v3280 = vld [vmem:[%s5 + $0x20] sm:$0xff]
        %v3281 = vld [vmem:[%s5 + $0x28] sm:$0xff]
        %v3282 = vld [vmem:[%s5 + $0x30] sm:$0xff]
        %v3283 = vld [vmem:[%s5 + $0x38] sm:$0xff]
        %v3284 = vld [vmem:[%s5 + $0x40] sm:$0xff]
        %v3285 = vld [vmem:[%s5 + $0x48] sm:$0xff]
        %v3286 = vld [vmem:[%s5 + $0x50] sm:$0xff]
        %v3287 = vld [vmem:[%s5 + $0x58] sm:$0xff]
        %v3288 = vld [vmem:[%s5 + $0x60] sm:$0xff]
        %v3289 = vld [vmem:[%s5 + $0x68] sm:$0xff]
        %v3290 = vld [vmem:[%s5 + $0x70] sm:$0xff]
        %v3291 = vld [vmem:[%s5 + $0x78] sm:$0xff]
        %v3292 = vld [vmem:[%s5 + $0x80] sm:$0xff]
        %v3293 = vld [vmem:[%s5 + $0x88] sm:$0xff]
        %v3294 = vld [vmem:[%s5 + $0x90] sm:$0xff]
        %v3295 = vld [vmem:[%s5 + $0x98] sm:$0xff]
        %v3296 = vld [vmem:[%s5 + $0xa0] sm:$0xff]
        %v3297 = vld [vmem:[%s5 + $0xa8] sm:$0xff]
        %v3298 = vld [vmem:[%s5 + $0xb0] sm:$0xff]
        %v3299 = vld [vmem:[%s5 + $0xb8] sm:$0xff]
        %v3300 = vld [vmem:[%s5 + $0xc0] sm:$0xff]
        %v3301 = vld [vmem:[%s5 + $0xc8] sm:$0xff]
        %v3302 = vld [vmem:[%s5 + $0xd0] sm:$0xff]
        %v3303 = vld [vmem:[%s5 + $0xd8] sm:$0xff]
        %v3304 = vld [vmem:[%s5 + $0xe0] sm:$0xff]
        %v3305 = vld [vmem:[%s5 + $0xe8] sm:$0xff]
        %v3306 = vld [vmem:[%s5 + $0xf0] sm:$0xff]
        %v3307 = vld [vmem:[%s5 + $0xf8] sm:$0xff]
        %v3308 = vld [vmem:[%s6] sm:$0x3]
        %v3310 = vlaneseq
        %v3311 = vshrl.u32 %v3310, 7
        %v3312 = vsub.s32 0, %v3311
        %v3313 = vrot.slane %v3308, %v3312
        %v3314 = vlaneseq
        %v3315 = vshrl.u32 %v3314, 7
        %v3316 = vsub.s32 1, %v3315
        %v3317 = vrot.slane %v3308, %v3316
        %3320 = vmatprep.subr.mxu0 %v3307
        %3321 = vmatpush1.msra.mxu0 %v3306
        %3322 = vmatprep.subr.mxu0 %v3305
        %3323 = vmatpush1.msra.mxu0 %v3304
        %3324 = vmatprep.subr.mxu0 %v3303
        %3325 = vmatpush1.msra.mxu0 %v3302
        %3326 = vmatprep.subr.mxu0 %v3301
        %3327 = vmatpush1.msra.mxu0 %v3300
        %3328 = vmatprep.subr.mxu0 %v3299
        %3329 = vmatpush1.msra.mxu0 %v3298
        %3330 = vmatprep.subr.mxu0 %v3297
        %3331 = vmatpush1.msra.mxu0 %v3296
        %3332 = vmatprep.subr.mxu0 %v3295
        %3333 = vmatpush1.msra.mxu0 %v3294
        %3334 = vmatprep.subr.mxu0 %v3293
        %3335 = vmatpush1.msra.mxu0 %v3292
        %3336 = vmatprep.subr.mxu0 %v3291
        %3337 = vmatpush1.msra.mxu0 %v3290
        %3338 = vmatprep.subr.mxu0 %v3289
        %3339 = vmatpush1.msra.mxu0 %v3288
        %3340 = vmatprep.subr.mxu0 %v3287
        %3341 = vmatpush1.msra.mxu0 %v3286
        %3342 = vmatprep.subr.mxu0 %v3285
        %3343 = vmatpush1.msra.mxu0 %v3284
        %3344 = vmatprep.subr.mxu0 %v3283
        %3345 = vmatpush1.msra.mxu0 %v3282
        %3346 = vmatprep.subr.mxu0 %v3281
        %3347 = vmatpush1.msra.mxu0 %v3280
        %3348 = vmatprep.subr.mxu0 %v3279
        %3349 = vmatpush1.msra.mxu0 %v3278
        %3350 = vmatprep.subr.mxu0 %v3277
        %3351 = vmatpush1.msra.mxu0 %v3276
        %3352 = vmatprep.subr.mxu0 0.0
        %3353 = vmatpush2.msra.mxu0 0.0
        %3354 = vmatprep.subr.mxu0 0.0
        %3355 = vmatpush2.msra.mxu0 0.0
        %3356 = vmatprep.subr.mxu0 0.0
        %3357 = vmatpush2.msra.mxu0 0.0
        %3358 = vmatprep.subr.mxu0 0.0
        %3359 = vmatpush2.msra.mxu0 0.0
        %3360 = vmatprep.subr.mxu0 0.0
        %3361 = vmatpush2.msra.mxu0 0.0
        %3362 = vmatprep.subr.mxu0 0.0
        %3363 = vmatpush2.msra.mxu0 0.0
        %3364 = vmatprep.subr.mxu0 0.0
        %3365 = vmatpush2.msra.mxu0 0.0
        %3366 = vmatprep.subr.mxu0 0.0
        %3367 = vmatpush2.msra.mxu0 0.0
        %3368 = vmatprep.subr.mxu0 0.0
        %3369 = vmatpush2.msra.mxu0 0.0
        %3370 = vmatprep.subr.mxu0 0.0
        %3371 = vmatpush2.msra.mxu0 0.0
        %3372 = vmatprep.subr.mxu0 0.0
        %3373 = vmatpush2.msra.mxu0 0.0
        %3374 = vmatprep.subr.mxu0 0.0
        %3375 = vmatpush2.msra.mxu0 0.0
        %3376 = vmatprep.subr.mxu0 0.0
        %3377 = vmatpush2.msra.mxu0 0.0
        %3378 = vmatprep.subr.mxu0 0.0
        %3379 = vmatpush2.msra.mxu0 0.0
        %3380 = vmatprep.subr.mxu0 0.0
        %3381 = vmatpush2.msra.mxu0 0.0
        %3382 = vmatprep.subr.mxu0 0.0
        %3383 = vmatpush2.msra.mxu0 0.0
        %3384 = vmatprep.mubr.f32.mxu0 0.0
        %3385 = vmatmul.mubr.f32.gmra.mxu0 %v3244
        %v3386 = vpop.f32.mrf.mxu0
        %v3387 = vadd.f32 %v3313, %v3386
        %v3388 = vpop.f32.mrf.mxu0
        %v3389 = vadd.f32 %v3317, %v3388
        %3390 = vmatprep.mubr.f32.mxu0 0.0
        %3391 = vmatmul.mubr.f32.gmra.mxu0 %v3245
        %v3392 = vpop.f32.mrf.mxu0
        %v3393 = vadd.f32 %v3313, %v3392
        %v3394 = vpop.f32.mrf.mxu0
        %v3395 = vadd.f32 %v3317, %v3394
        %3396 = vmatprep.mubr.f32.mxu0 0.0
        %3397 = vmatmul.mubr.f32.gmra.mxu0 %v3246
        %v3398 = vpop.f32.mrf.mxu0
        %v3399 = vadd.f32 %v3313, %v3398
        %v3400 = vpop.f32.mrf.mxu0
        %v3401 = vadd.f32 %v3317, %v3400
        %3402 = vmatprep.mubr.f32.mxu0 0.0
        %3403 = vmatmul.mubr.f32.gmra.mxu0 %v3247
        %v3404 = vpop.f32.mrf.mxu0
        %v3405 = vadd.f32 %v3313, %v3404
        %v3406 = vpop.f32.mrf.mxu0
        %v3407 = vadd.f32 %v3317, %v3406
        %3408 = vmatprep.mubr.f32.mxu0 0.0
        %3409 = vmatmul.mubr.f32.gmra.mxu0 %v3248
        %v3410 = vpop.f32.mrf.mxu0
        %v3411 = vadd.f32 %v3313, %v3410
        %v3412 = vpop.f32.mrf.mxu0
        %v3413 = vadd.f32 %v3317, %v3412
        %3414 = vmatprep.mubr.f32.mxu0 0.0
        %3415 = vmatmul.mubr.f32.gmra.mxu0 %v3249
        %v3416 = vpop.f32.mrf.mxu0
        %v3417 = vadd.f32 %v3313, %v3416
        %v3418 = vpop.f32.mrf.mxu0
        %v3419 = vadd.f32 %v3317, %v3418
        %3420 = vmatprep.mubr.f32.mxu0 0.0
        %3421 = vmatmul.mubr.f32.gmra.mxu0 %v3250
        %v3422 = vpop.f32.mrf.mxu0
        %v3423 = vadd.f32 %v3313, %v3422
        %v3424 = vpop.f32.mrf.mxu0
        %v3425 = vadd.f32 %v3317, %v3424
        %3426 = vmatprep.mubr.f32.mxu0 0.0
        %3427 = vmatmul.mubr.f32.gmra.mxu0 %v3251
        %v3428 = vpop.f32.mrf.mxu0
        %v3429 = vadd.f32 %v3313, %v3428
        %v3430 = vpop.f32.mrf.mxu0
        %v3431 = vadd.f32 %v3317, %v3430
        %3432 = vmatprep.mubr.f32.mxu0 0.0
        %3433 = vmatmul.mubr.f32.gmra.mxu0 %v3252
        %v3434 = vpop.f32.mrf.mxu0
        %v3435 = vadd.f32 %v3313, %v3434
        %v3436 = vpop.f32.mrf.mxu0
        %v3437 = vadd.f32 %v3317, %v3436
        %3438 = vmatprep.mubr.f32.mxu0 0.0
        %3439 = vmatmul.mubr.f32.gmra.mxu0 %v3253
        %v3440 = vpop.f32.mrf.mxu0
        %v3441 = vadd.f32 %v3313, %v3440
        %v3442 = vpop.f32.mrf.mxu0
        %v3443 = vadd.f32 %v3317, %v3442
        %3444 = vmatprep.mubr.f32.mxu0 0.0
        %3445 = vmatmul.mubr.f32.gmra.mxu0 %v3254
        %v3446 = vpop.f32.mrf.mxu0
        %v3447 = vadd.f32 %v3313, %v3446
        %v3448 = vpop.f32.mrf.mxu0
        %v3449 = vadd.f32 %v3317, %v3448
        %3450 = vmatprep.mubr.f32.mxu0 0.0
        %3451 = vmatmul.mubr.f32.gmra.mxu0 %v3255
        %v3452 = vpop.f32.mrf.mxu0
        %v3453 = vadd.f32 %v3313, %v3452
        %v3454 = vpop.f32.mrf.mxu0
        %v3455 = vadd.f32 %v3317, %v3454
        %3456 = vmatprep.mubr.f32.mxu0 0.0
        %3457 = vmatmul.mubr.f32.gmra.mxu0 %v3256
        %v3458 = vpop.f32.mrf.mxu0
        %v3459 = vadd.f32 %v3313, %v3458
        %v3460 = vpop.f32.mrf.mxu0
        %v3461 = vadd.f32 %v3317, %v3460
        %3462 = vmatprep.mubr.f32.mxu0 0.0
        %3463 = vmatmul.mubr.f32.gmra.mxu0 %v3257
        %v3464 = vpop.f32.mrf.mxu0
        %v3465 = vadd.f32 %v3313, %v3464
        %v3466 = vpop.f32.mrf.mxu0
        %v3467 = vadd.f32 %v3317, %v3466
        %3468 = vmatprep.mubr.f32.mxu0 0.0
        %3469 = vmatmul.mubr.f32.gmra.mxu0 %v3258
        %v3470 = vpop.f32.mrf.mxu0
        %v3471 = vadd.f32 %v3313, %v3470
        %v3472 = vpop.f32.mrf.mxu0
        %v3473 = vadd.f32 %v3317, %v3472
        %3474 = vmatprep.mubr.f32.mxu0 0.0
        %3475 = vmatmul.mubr.f32.gmra.mxu0 %v3259
        %v3476 = vpop.f32.mrf.mxu0
        %v3477 = vadd.f32 %v3313, %v3476
        %v3478 = vpop.f32.mrf.mxu0
        %v3479 = vadd.f32 %v3317, %v3478
        %3480 = vmatprep.mubr.f32.mxu0 0.0
        %3481 = vmatmul.mubr.f32.gmra.mxu0 %v3260
        %v3482 = vpop.f32.mrf.mxu0
        %v3483 = vadd.f32 %v3313, %v3482
        %v3484 = vpop.f32.mrf.mxu0
        %v3485 = vadd.f32 %v3317, %v3484
        %3486 = vmatprep.mubr.f32.mxu0 0.0
        %3487 = vmatmul.mubr.f32.gmra.mxu0 %v3261
        %v3488 = vpop.f32.mrf.mxu0
        %v3489 = vadd.f32 %v3313, %v3488
        %v3490 = vpop.f32.mrf.mxu0
        %v3491 = vadd.f32 %v3317, %v3490
        %3492 = vmatprep.mubr.f32.mxu0 0.0
        %3493 = vmatmul.mubr.f32.gmra.mxu0 %v3262
        %v3494 = vpop.f32.mrf.mxu0
        %v3495 = vadd.f32 %v3313, %v3494
        %v3496 = vpop.f32.mrf.mxu0
        %v3497 = vadd.f32 %v3317, %v3496
        %3498 = vmatprep.mubr.f32.mxu0 0.0
        %3499 = vmatmul.mubr.f32.gmra.mxu0 %v3263
        %v3500 = vpop.f32.mrf.mxu0
        %v3501 = vadd.f32 %v3313, %v3500
        %v3502 = vpop.f32.mrf.mxu0
        %v3503 = vadd.f32 %v3317, %v3502
        %3504 = vmatprep.mubr.f32.mxu0 0.0
        %3505 = vmatmul.mubr.f32.gmra.mxu0 %v3264
        %v3506 = vpop.f32.mrf.mxu0
        %v3507 = vadd.f32 %v3313, %v3506
        %v3508 = vpop.f32.mrf.mxu0
        %v3509 = vadd.f32 %v3317, %v3508
        %3510 = vmatprep.mubr.f32.mxu0 0.0
        %3511 = vmatmul.mubr.f32.gmra.mxu0 %v3265
        %v3512 = vpop.f32.mrf.mxu0
        %v3513 = vadd.f32 %v3313, %v3512
        %v3514 = vpop.f32.mrf.mxu0
        %v3515 = vadd.f32 %v3317, %v3514
        %3516 = vmatprep.mubr.f32.mxu0 0.0
        %3517 = vmatmul.mubr.f32.gmra.mxu0 %v3266
        %v3518 = vpop.f32.mrf.mxu0
        %v3519 = vadd.f32 %v3313, %v3518
        %v3520 = vpop.f32.mrf.mxu0
        %v3521 = vadd.f32 %v3317, %v3520
        %3522 = vmatprep.mubr.f32.mxu0 0.0
        %3523 = vmatmul.mubr.f32.gmra.mxu0 %v3267
        %v3524 = vpop.f32.mrf.mxu0
        %v3525 = vadd.f32 %v3313, %v3524
        %v3526 = vpop.f32.mrf.mxu0
        %v3527 = vadd.f32 %v3317, %v3526
        %3528 = vmatprep.mubr.f32.mxu0 0.0
        %3529 = vmatmul.mubr.f32.gmra.mxu0 %v3268
        %v3530 = vpop.f32.mrf.mxu0
        %v3531 = vadd.f32 %v3313, %v3530
        %v3532 = vpop.f32.mrf.mxu0
        %v3533 = vadd.f32 %v3317, %v3532
        %3534 = vmatprep.mubr.f32.mxu0 0.0
        %3535 = vmatmul.mubr.f32.gmra.mxu0 %v3269
        %v3536 = vpop.f32.mrf.mxu0
        %v3537 = vadd.f32 %v3313, %v3536
        %v3538 = vpop.f32.mrf.mxu0
        %v3539 = vadd.f32 %v3317, %v3538
        %3540 = vmatprep.mubr.f32.mxu0 0.0
        %3541 = vmatmul.mubr.f32.gmra.mxu0 %v3270
        %v3542 = vpop.f32.mrf.mxu0
        %v3543 = vadd.f32 %v3313, %v3542
        %v3544 = vpop.f32.mrf.mxu0
        %v3545 = vadd.f32 %v3317, %v3544
        %3546 = vmatprep.mubr.f32.mxu0 0.0
        %3547 = vmatmul.mubr.f32.gmra.mxu0 %v3271
        %v3548 = vpop.f32.mrf.mxu0
        %v3549 = vadd.f32 %v3313, %v3548
        %v3550 = vpop.f32.mrf.mxu0
        %v3551 = vadd.f32 %v3317, %v3550
        %3552 = vmatprep.mubr.f32.mxu0 0.0
        %3553 = vmatmul.mubr.f32.gmra.mxu0 %v3272
        %v3554 = vpop.f32.mrf.mxu0
        %v3555 = vadd.f32 %v3313, %v3554
        %v3556 = vpop.f32.mrf.mxu0
        %v3557 = vadd.f32 %v3317, %v3556
        %3558 = vmatprep.mubr.f32.mxu0 0.0
        %3559 = vmatmul.mubr.f32.gmra.mxu0 %v3273
        %v3560 = vpop.f32.mrf.mxu0
        %v3561 = vadd.f32 %v3313, %v3560
        %v3562 = vpop.f32.mrf.mxu0
        %v3563 = vadd.f32 %v3317, %v3562
        %3564 = vmatprep.mubr.f32.mxu0 0.0
        %3565 = vmatmul.mubr.f32.gmra.mxu0 %v3274
        %v3566 = vpop.f32.mrf.mxu0
        %v3567 = vadd.f32 %v3313, %v3566
        %v3568 = vpop.f32.mrf.mxu0
        %v3569 = vadd.f32 %v3317, %v3568
        %3570 = vmatprep.mubr.f32.mxu0 0.0
        %3571 = vmatmul.mubr.f32.gmra.mxu0 %v3275
        %v3572 = vpop.f32.mrf.mxu0
        %v3573 = vadd.f32 %v3313, %v3572
        %v3574 = vpop.f32.mrf.mxu0
        %v3575 = vadd.f32 %v3317, %v3574
        %3576 = vdwg.mxu0
        %v3577 = vmax.f32 %v3387, 0.0
        %v3578 = vmax.f32 %v3389, 0.0
        %v3579 = vmax.f32 %v3393, 0.0
        %v3580 = vmax.f32 %v3395, 0.0
        %v3581 = vmax.f32 %v3399, 0.0
        %v3582 = vmax.f32 %v3401, 0.0
        %v3583 = vmax.f32 %v3405, 0.0
        %v3584 = vmax.f32 %v3407, 0.0
        %v3585 = vmax.f32 %v3411, 0.0
        %v3586 = vmax.f32 %v3413, 0.0
        %v3587 = vmax.f32 %v3417, 0.0
        %v3588 = vmax.f32 %v3419, 0.0
        %v3589 = vmax.f32 %v3423, 0.0
        %v3590 = vmax.f32 %v3425, 0.0
        %v3591 = vmax.f32 %v3429, 0.0
        %v3592 = vmax.f32 %v3431, 0.0
        %v3593 = vmax.f32 %v3435, 0.0
        %v3594 = vmax.f32 %v3437, 0.0
        %v3595 = vmax.f32 %v3441, 0.0
        %v3596 = vmax.f32 %v3443, 0.0
        %v3597 = vmax.f32 %v3447, 0.0
        %v3598 = vmax.f32 %v3449, 0.0
        %v3599 = vmax.f32 %v3453, 0.0
        %v3600 = vmax.f32 %v3455, 0.0
        %v3601 = vmax.f32 %v3459, 0.0
        %v3602 = vmax.f32 %v3461, 0.0
        %v3603 = vmax.f32 %v3465, 0.0
        %v3604 = vmax.f32 %v3467, 0.0
        %v3605 = vmax.f32 %v3471, 0.0
        %v3606 = vmax.f32 %v3473, 0.0
        %v3607 = vmax.f32 %v3477, 0.0
        %v3608 = vmax.f32 %v3479, 0.0
        %v3609 = vmax.f32 %v3483, 0.0
        %v3610 = vmax.f32 %v3485, 0.0
        %v3611 = vmax.f32 %v3489, 0.0
        %v3612 = vmax.f32 %v3491, 0.0
        %v3613 = vmax.f32 %v3495, 0.0
        %v3614 = vmax.f32 %v3497, 0.0
        %v3615 = vmax.f32 %v3501, 0.0
        %v3616 = vmax.f32 %v3503, 0.0
        %v3617 = vmax.f32 %v3507, 0.0
        %v3618 = vmax.f32 %v3509, 0.0
        %v3619 = vmax.f32 %v3513, 0.0
        %v3620 = vmax.f32 %v3515, 0.0
        %v3621 = vmax.f32 %v3519, 0.0
        %v3622 = vmax.f32 %v3521, 0.0
        %v3623 = vmax.f32 %v3525, 0.0
        %v3624 = vmax.f32 %v3527, 0.0
        %v3625 = vmax.f32 %v3531, 0.0
        %v3626 = vmax.f32 %v3533, 0.0
        %v3627 = vmax.f32 %v3537, 0.0
        %v3628 = vmax.f32 %v3539, 0.0
        %v3629 = vmax.f32 %v3543, 0.0
        %v3630 = vmax.f32 %v3545, 0.0
        %v3631 = vmax.f32 %v3549, 0.0
        %v3632 = vmax.f32 %v3551, 0.0
        %v3633 = vmax.f32 %v3555, 0.0
        %v3634 = vmax.f32 %v3557, 0.0
        %v3635 = vmax.f32 %v3561, 0.0
        %v3636 = vmax.f32 %v3563, 0.0
        %v3637 = vmax.f32 %v3567, 0.0
        %v3638 = vmax.f32 %v3569, 0.0
        %v3639 = vmax.f32 %v3573, 0.0
        %v3640 = vmax.f32 %v3575, 0.0
        %v3641 = vld [vmem:[%s271] sm:$0xff]
        %v3642 = vld [vmem:[%s271 + $0x8] sm:$0xff]
        %v3643 = vld [vmem:[%s271 + $0x10] sm:$0xff]
        %v3644 = vld [vmem:[%s271 + $0x18] sm:$0xff]
        %v3645 = vld [vmem:[%s271 + $0x20] sm:$0xff]
        %v3646 = vld [vmem:[%s271 + $0x28] sm:$0xff]
        %v3647 = vld [vmem:[%s271 + $0x30] sm:$0xff]
        %v3648 = vld [vmem:[%s271 + $0x38] sm:$0xff]
        %v3649 = vld [vmem:[%s271 + $0x40] sm:$0xff]
        %v3650 = vld [vmem:[%s271 + $0x48] sm:$0xff]
        %v3651 = vld [vmem:[%s271 + $0x50] sm:$0xff]
        %v3652 = vld [vmem:[%s271 + $0x58] sm:$0xff]
        %v3653 = vld [vmem:[%s271 + $0x60] sm:$0xff]
        %v3654 = vld [vmem:[%s271 + $0x68] sm:$0xff]
        %v3655 = vld [vmem:[%s271 + $0x70] sm:$0xff]
        %v3656 = vld [vmem:[%s271 + $0x78] sm:$0xff]
        %v3657 = vld [vmem:[%s271 + $0x80] sm:$0xff]
        %v3658 = vld [vmem:[%s271 + $0x88] sm:$0xff]
        %v3659 = vld [vmem:[%s271 + $0x90] sm:$0xff]
        %v3660 = vld [vmem:[%s271 + $0x98] sm:$0xff]
        %v3661 = vld [vmem:[%s271 + $0xa0] sm:$0xff]
        %v3662 = vld [vmem:[%s271 + $0xa8] sm:$0xff]
        %v3663 = vld [vmem:[%s271 + $0xb0] sm:$0xff]
        %v3664 = vld [vmem:[%s271 + $0xb8] sm:$0xff]
        %v3665 = vld [vmem:[%s271 + $0xc0] sm:$0xff]
        %v3666 = vld [vmem:[%s271 + $0xc8] sm:$0xff]
        %v3667 = vld [vmem:[%s271 + $0xd0] sm:$0xff]
        %v3668 = vld [vmem:[%s271 + $0xd8] sm:$0xff]
        %v3669 = vld [vmem:[%s271 + $0xe0] sm:$0xff]
        %v3670 = vld [vmem:[%s271 + $0xe8] sm:$0xff]
        %v3671 = vld [vmem:[%s271 + $0xf0] sm:$0xff]
        %v3672 = vld [vmem:[%s271 + $0xf8] sm:$0xff]
        %v3673 = vld [vmem:[%s271 + $0x100] sm:$0xff]
        %v3674 = vld [vmem:[%s271 + $0x108] sm:$0xff]
        %v3675 = vld [vmem:[%s271 + $0x110] sm:$0xff]
        %v3676 = vld [vmem:[%s271 + $0x118] sm:$0xff]
        %v3677 = vld [vmem:[%s271 + $0x120] sm:$0xff]
        %v3678 = vld [vmem:[%s271 + $0x128] sm:$0xff]
        %v3679 = vld [vmem:[%s271 + $0x130] sm:$0xff]
        %v3680 = vld [vmem:[%s271 + $0x138] sm:$0xff]
        %v3681 = vld [vmem:[%s271 + $0x140] sm:$0xff]
        %v3682 = vld [vmem:[%s271 + $0x148] sm:$0xff]
        %v3683 = vld [vmem:[%s271 + $0x150] sm:$0xff]
        %v3684 = vld [vmem:[%s271 + $0x158] sm:$0xff]
        %v3685 = vld [vmem:[%s271 + $0x160] sm:$0xff]
        %v3686 = vld [vmem:[%s271 + $0x168] sm:$0xff]
        %v3687 = vld [vmem:[%s271 + $0x170] sm:$0xff]
        %v3688 = vld [vmem:[%s271 + $0x178] sm:$0xff]
        %v3689 = vld [vmem:[%s271 + $0x180] sm:$0xff]
        %v3690 = vld [vmem:[%s271 + $0x188] sm:$0xff]
        %v3691 = vld [vmem:[%s271 + $0x190] sm:$0xff]
        %v3692 = vld [vmem:[%s271 + $0x198] sm:$0xff]
        %v3693 = vld [vmem:[%s271 + $0x1a0] sm:$0xff]
        %v3694 = vld [vmem:[%s271 + $0x1a8] sm:$0xff]
        %v3695 = vld [vmem:[%s271 + $0x1b0] sm:$0xff]
        %v3696 = vld [vmem:[%s271 + $0x1b8] sm:$0xff]
        %v3697 = vld [vmem:[%s271 + $0x1c0] sm:$0xff]
        %v3698 = vld [vmem:[%s271 + $0x1c8] sm:$0xff]
        %v3699 = vld [vmem:[%s271 + $0x1d0] sm:$0xff]
        %v3700 = vld [vmem:[%s271 + $0x1d8] sm:$0xff]
        %v3701 = vld [vmem:[%s271 + $0x1e0] sm:$0xff]
        %v3702 = vld [vmem:[%s271 + $0x1e8] sm:$0xff]
        %v3703 = vld [vmem:[%s271 + $0x1f0] sm:$0xff]
        %v3704 = vld [vmem:[%s271 + $0x1f8] sm:$0xff]
        %v3705 = vadd.f32 %v3641, %v3577
        %v3706 = vadd.f32 %v3642, %v3578
        %v3707 = vadd.f32 %v3643, %v3579
        %v3708 = vadd.f32 %v3644, %v3580
        %v3709 = vadd.f32 %v3645, %v3581
        %v3710 = vadd.f32 %v3646, %v3582
        %v3711 = vadd.f32 %v3647, %v3583
        %v3712 = vadd.f32 %v3648, %v3584
        %v3713 = vadd.f32 %v3649, %v3585
        %v3714 = vadd.f32 %v3650, %v3586
        %v3715 = vadd.f32 %v3651, %v3587
        %v3716 = vadd.f32 %v3652, %v3588
        %v3717 = vadd.f32 %v3653, %v3589
        %v3718 = vadd.f32 %v3654, %v3590
        %v3719 = vadd.f32 %v3655, %v3591
        %v3720 = vadd.f32 %v3656, %v3592
        %v3721 = vadd.f32 %v3657, %v3593
        %v3722 = vadd.f32 %v3658, %v3594
        %v3723 = vadd.f32 %v3659, %v3595
        %v3724 = vadd.f32 %v3660, %v3596
        %v3725 = vadd.f32 %v3661, %v3597
        %v3726 = vadd.f32 %v3662, %v3598
        %v3727 = vadd.f32 %v3663, %v3599
        %v3728 = vadd.f32 %v3664, %v3600
        %v3729 = vadd.f32 %v3665, %v3601
        %v3730 = vadd.f32 %v3666, %v3602
        %v3731 = vadd.f32 %v3667, %v3603
        %v3732 = vadd.f32 %v3668, %v3604
        %v3733 = vadd.f32 %v3669, %v3605
        %v3734 = vadd.f32 %v3670, %v3606
        %v3735 = vadd.f32 %v3671, %v3607
        %v3736 = vadd.f32 %v3672, %v3608
        %v3737 = vadd.f32 %v3673, %v3609
        %v3738 = vadd.f32 %v3674, %v3610
        %v3739 = vadd.f32 %v3675, %v3611
        %v3740 = vadd.f32 %v3676, %v3612
        %v3741 = vadd.f32 %v3677, %v3613
        %v3742 = vadd.f32 %v3678, %v3614
        %v3743 = vadd.f32 %v3679, %v3615
        %v3744 = vadd.f32 %v3680, %v3616
        %v3745 = vadd.f32 %v3681, %v3617
        %v3746 = vadd.f32 %v3682, %v3618
        %v3747 = vadd.f32 %v3683, %v3619
        %v3748 = vadd.f32 %v3684, %v3620
        %v3749 = vadd.f32 %v3685, %v3621
        %v3750 = vadd.f32 %v3686, %v3622
        %v3751 = vadd.f32 %v3687, %v3623
        %v3752 = vadd.f32 %v3688, %v3624
        %v3753 = vadd.f32 %v3689, %v3625
        %v3754 = vadd.f32 %v3690, %v3626
        %v3755 = vadd.f32 %v3691, %v3627
        %v3756 = vadd.f32 %v3692, %v3628
        %v3757 = vadd.f32 %v3693, %v3629
        %v3758 = vadd.f32 %v3694, %v3630
        %v3759 = vadd.f32 %v3695, %v3631
        %v3760 = vadd.f32 %v3696, %v3632
        %v3761 = vadd.f32 %v3697, %v3633
        %v3762 = vadd.f32 %v3698, %v3634
        %v3763 = vadd.f32 %v3699, %v3635
        %v3764 = vadd.f32 %v3700, %v3636
        %v3765 = vadd.f32 %v3701, %v3637
        %v3766 = vadd.f32 %v3702, %v3638
        %v3767 = vadd.f32 %v3703, %v3639
        %v3768 = vadd.f32 %v3704, %v3640
        %3769 = vst [vmem:[%s271] sm:$0xff] %v3705
        %3770 = vst [vmem:[%s271 + $0x8] sm:$0xff] %v3706
        %3771 = vst [vmem:[%s271 + $0x10] sm:$0xff] %v3707
        %3772 = vst [vmem:[%s271 + $0x18] sm:$0xff] %v3708
        %3773 = vst [vmem:[%s271 + $0x20] sm:$0xff] %v3709
        %3774 = vst [vmem:[%s271 + $0x28] sm:$0xff] %v3710
        %3775 = vst [vmem:[%s271 + $0x30] sm:$0xff] %v3711
        %3776 = vst [vmem:[%s271 + $0x38] sm:$0xff] %v3712
        %3777 = vst [vmem:[%s271 + $0x40] sm:$0xff] %v3713
        %3778 = vst [vmem:[%s271 + $0x48] sm:$0xff] %v3714
        %3779 = vst [vmem:[%s271 + $0x50] sm:$0xff] %v3715
        %3780 = vst [vmem:[%s271 + $0x58] sm:$0xff] %v3716
        %3781 = vst [vmem:[%s271 + $0x60] sm:$0xff] %v3717
        %3782 = vst [vmem:[%s271 + $0x68] sm:$0xff] %v3718
        %3783 = vst [vmem:[%s271 + $0x70] sm:$0xff] %v3719
        %3784 = vst [vmem:[%s271 + $0x78] sm:$0xff] %v3720
        %3785 = vst [vmem:[%s271 + $0x80] sm:$0xff] %v3721
        %3786 = vst [vmem:[%s271 + $0x88] sm:$0xff] %v3722
        %3787 = vst [vmem:[%s271 + $0x90] sm:$0xff] %v3723
        %3788 = vst [vmem:[%s271 + $0x98] sm:$0xff] %v3724
        %3789 = vst [vmem:[%s271 + $0xa0] sm:$0xff] %v3725
        %3790 = vst [vmem:[%s271 + $0xa8] sm:$0xff] %v3726
        %3791 = vst [vmem:[%s271 + $0xb0] sm:$0xff] %v3727
        %3792 = vst [vmem:[%s271 + $0xb8] sm:$0xff] %v3728
        %3793 = vst [vmem:[%s271 + $0xc0] sm:$0xff] %v3729
        %3794 = vst [vmem:[%s271 + $0xc8] sm:$0xff] %v3730
        %3795 = vst [vmem:[%s271 + $0xd0] sm:$0xff] %v3731
        %3796 = vst [vmem:[%s271 + $0xd8] sm:$0xff] %v3732
        %3797 = vst [vmem:[%s271 + $0xe0] sm:$0xff] %v3733
        %3798 = vst [vmem:[%s271 + $0xe8] sm:$0xff] %v3734
        %3799 = vst [vmem:[%s271 + $0xf0] sm:$0xff] %v3735
        %3800 = vst [vmem:[%s271 + $0xf8] sm:$0xff] %v3736
        %3801 = vst [vmem:[%s271 + $0x100] sm:$0xff] %v3737
        %3802 = vst [vmem:[%s271 + $0x108] sm:$0xff] %v3738
        %3803 = vst [vmem:[%s271 + $0x110] sm:$0xff] %v3739
        %3804 = vst [vmem:[%s271 + $0x118] sm:$0xff] %v3740
        %3805 = vst [vmem:[%s271 + $0x120] sm:$0xff] %v3741
        %3806 = vst [vmem:[%s271 + $0x128] sm:$0xff] %v3742
        %3807 = vst [vmem:[%s271 + $0x130] sm:$0xff] %v3743
        %3808 = vst [vmem:[%s271 + $0x138] sm:$0xff] %v3744
        %3809 = vst [vmem:[%s271 + $0x140] sm:$0xff] %v3745
        %3810 = vst [vmem:[%s271 + $0x148] sm:$0xff] %v3746
        %3811 = vst [vmem:[%s271 + $0x150] sm:$0xff] %v3747
        %3812 = vst [vmem:[%s271 + $0x158] sm:$0xff] %v3748
        %3813 = vst [vmem:[%s271 + $0x160] sm:$0xff] %v3749
        %3814 = vst [vmem:[%s271 + $0x168] sm:$0xff] %v3750
        %3815 = vst [vmem:[%s271 + $0x170] sm:$0xff] %v3751
        %3816 = vst [vmem:[%s271 + $0x178] sm:$0xff] %v3752
        %3817 = vst [vmem:[%s271 + $0x180] sm:$0xff] %v3753
        %3818 = vst [vmem:[%s271 + $0x188] sm:$0xff] %v3754
        %3819 = vst [vmem:[%s271 + $0x190] sm:$0xff] %v3755
        %3820 = vst [vmem:[%s271 + $0x198] sm:$0xff] %v3756
        %3821 = vst [vmem:[%s271 + $0x1a0] sm:$0xff] %v3757
        %3822 = vst [vmem:[%s271 + $0x1a8] sm:$0xff] %v3758
        %3823 = vst [vmem:[%s271 + $0x1b0] sm:$0xff] %v3759
        %3824 = vst [vmem:[%s271 + $0x1b8] sm:$0xff] %v3760
        %3825 = vst [vmem:[%s271 + $0x1c0] sm:$0xff] %v3761
        %3826 = vst [vmem:[%s271 + $0x1c8] sm:$0xff] %v3762
        %3827 = vst [vmem:[%s271 + $0x1d0] sm:$0xff] %v3763
        %3828 = vst [vmem:[%s271 + $0x1d8] sm:$0xff] %v3764
        %3829 = vst [vmem:[%s271 + $0x1e0] sm:$0xff] %v3765
        %3830 = vst [vmem:[%s271 + $0x1e8] sm:$0xff] %v3766
        %3831 = vst [vmem:[%s271 + $0x1f0] sm:$0xff] %v3767
        %3832 = vst [vmem:[%s271 + $0x1f8] sm:$0xff] %v3768
        %s3833 = sand.u32 %s181, 1
        %s3834 = scalar_lea.sflag [#allocation4], %s3833
        %s3835 = sand.u32 %s181, 1
        %s3836 = smul.addr %s3835, 512
        %s3837 = scalar_lea.vmem [#allocation3], %s3836
        // Predicated region
        $region49: #{resblock_forward.1} parent=47 // pred_check
          %p3838 = pneg %p191
        $region50: #{resblock_forward.1} parent=47 // pred_check_branch
          %3840 = sbr.rel (%p3838) target = $region52
        $region51: #{resblock_forward.1} parent=47 // pred_region
          %s3842 = ssub.s32 8192, 8192
          %3843 = vsyncadd %s3834, %s3842
          %s3844 = smul.addr %s21, 64
          %s3845 = smul.addr %s3844, 128
          %s3846 = scalar_lea.hbm %s7, %s3845
          %s3847 = sshll.u32 %s3837, 4
          %s3848 = int_to_ptr.vmem [resolvable:$true] %s3847
          %3853 = dma.vmem_to_hbm [thread:$0]  %s3848, 8192, %s3846, %s3834, 256, 256, 16
        $region52: #{resblock_forward.1} parent=47 // pred_fallthru
          _
      $region48: #{resblock_forward.1} parent=5 // pred_fallthru
        _
      %p3854 = scmp.le.s32.totalorder 2, %s16
      // Predicated region
      $region53: #{resblock_forward.1} parent=5 // pred_check
        %p3855 = pneg %p3854
      $region54: #{resblock_forward.1} parent=5 // pred_check_branch
        %3857 = sbr.rel (%p3855) target = $region56
      $region55: #{resblock_forward.1} parent=5 // pred_region
        %s3858 = ssub.s32 %s16, 2
        // Predicated region
        $region57: #{resblock_forward.1} parent=55 // pred_check
          %p3859 = pneg %p197
        $region58: #{resblock_forward.1} parent=55 // pred_check_branch
          %3861 = sbr.rel (%p3859) target = $region60
        $region59: #{resblock_forward.1} parent=55 // pred_region
          %s3862 = sand.u32 %s182, 1
          %s3863 = scalar_lea.sflag [#allocation4], %s3862
          %s3864 = sand.u32 %s182, 1
          %s3865 = smul.addr %s3864, 512
          %s3866 = scalar_lea.vmem [#allocation3], %s3865
          %3867 = dma.done %s3863, 8192
        $region60: #{resblock_forward.1} parent=55 // pred_fallthru
          _
      $region56: #{resblock_forward.1} parent=5 // pred_fallthru
        _
    $region6: #{resblock_forward.1} parent=1 // loop_footer
      %s20 = sadd.s32 1, %s16
    $region7: #{resblock_forward.1} parent=1 // loop_footer_branch
      %15 = sbr.rel target = $region3
    $region8: #{resblock_forward.1} parent=1 // loop_exit
      _
    %3868 = vsyncpa [#allocation4], 1
    %s3869 = scalar_lea.sflag [#allocation4], 1
    %3870 = vsyncpa %s3869, 1

</llo_original>
